<compile_context>
chip_gen: v6e
topology: v6e:2x2x1
jax: 0.10.0
libtpu: 0.0.40
codegen_flags: <defaults>
</compile_context>

<pallas_src>
import jax
import jax.numpy as jnp
import numpy as np
from jax import lax
from jax.experimental import pallas as pl
from jax.experimental.pallas import tpu as pltpu

HIDDEN = 128
D_FEAT = 6
L1_OUT = 256
ACTION_DIM = 1
MAX_TILE_B = 128                      # <=128 so B<=256 still yields >=2 programs (v7x: 2 TCs)
GI0_BLOCK_BYTES = 6 * 1024 * 1024     # budget for the (T, tile_b, 3H) f32 input block


def critic_kernel(gi0_ref, xt_ref, act_ref,
                  whh0_ref, bhh0n_ref,
                  w1cat_ref, b1rz_ref, bih1n_ref, bhh1n_ref,
                  w1h_ref, w1x_ref, w1a_ref, b1_ref, w3_ref, b3_ref,
                  out_ref, cat_ref):
    # gi0_ref: (T, B, 3H) f32 = feature @ Wih0 with r/z/n biases pre-added (wrapper).
    T = gi0_ref.shape[0]
    B = gi0_ref.shape[1]
    H = HIDDEN

    whh0 = whh0_ref[...]          # (H, 3H)  bf16
    w1cat = w1cat_ref[...]        # (2H, 4H) bf16  = [rz | gi1_n | gh1_n]

    # ---- Bias broadcasts hoisted out of the recurrence (done once per tile).
    bhh0n = jnp.broadcast_to(bhh0n_ref[...], (B, H))
    b1r = jnp.broadcast_to(b1rz_ref[:, 0:H], (B, H))
    b1z = jnp.broadcast_to(b1rz_ref[:, H:2 * H], (B, H))
    bih1n = jnp.broadcast_to(bih1n_ref[...], (B, H))
    bhh1n = jnp.broadcast_to(bhh1n_ref[...], (B, H))

    # ---- Persistent bf16 MXU staging buffer holding [h0 | h1]; written in place each
    # step (replaces the per-step concatenate + cast round-trip).
    cat_ref[...] = jnp.zeros((B, 2 * H), jnp.bfloat16)

    def step(t, carry):
        h0, h1 = carry
        # ---- GRU layer 0: single K=H matmul on the recurrence chain.
        gi0 = gi0_ref[t]                                              # (B, 3H) f32
        gh0 = jnp.dot(cat_ref[:, 0:H], whh0,
                      preferred_element_type=jnp.float32)             # (B, 3H)
        r0 = jax.nn.sigmoid(gi0[:, 0:H] + gh0[:, 0:H])
        z0 = jax.nn.sigmoid(gi0[:, H:2 * H] + gh0[:, H:2 * H])
        n0 = jnp.tanh(gi0[:, 2 * H:] + r0 * (gh0[:, 2 * H:] + bhh0n))
        h0 = (1.0 - z0) * n0 + z0 * h0
        cat_ref[:, 0:H] = h0.astype(jnp.bfloat16)

        # ---- GRU layer 1: ONE fused K=2H, N=4H matmul over [h0 | h1].
        #      cols [0:2H] = gi1_rz + gh1_rz, [2H:3H] = gi1_n, [3H:4H] = gh1_n.
        g1 = jnp.dot(cat_ref[...], w1cat,
                     preferred_element_type=jnp.float32)              # (B, 4H)
        r1 = jax.nn.sigmoid(g1[:, 0:H] + b1r)
        z1 = jax.nn.sigmoid(g1[:, H:2 * H] + b1z)
        n1 = jnp.tanh(g1[:, 2 * H:3 * H] + bih1n + r1 * (g1[:, 3 * H:] + bhh1n))
        h1 = (1.0 - z1) * n1 + z1 * h1
        cat_ref[:, H:2 * H] = h1.astype(jnp.bfloat16)
        return (h0, h1)

    init = (jnp.zeros((B, H), jnp.float32), jnp.zeros((B, H), jnp.float32))
    lax.fori_loop(0, T, step, init, unroll=max(1, min(T, 8)))

    # ---- Head: l1 over implicit concat [h1 | xt | action], relu, then l3 as a
    # lane reduction (avoids an N=1 MXU pass on the tail). h1 (bf16) read from cat_ref.
    pre = (jnp.dot(cat_ref[:, H:2 * H], w1h_ref[...],
                   preferred_element_type=jnp.float32)
           + xt_ref[...] * w1x_ref[...]
           + act_ref[...] * w1a_ref[...]
           + b1_ref[...])
    q = jnp.maximum(pre, 0.0)
    out_ref[...] = jnp.sum(q * w3_ref[...], axis=-1, keepdims=True) + b3_ref[...]


def init_params(key, state_dim, action_dim=ACTION_DIM):
    """Deterministic params, PyTorch-like uniform(-1/sqrt(fan), 1/sqrt(fan))."""
    H, D = HIDDEN, D_FEAT
    ks = jax.random.split(key, 16)
    u = lambda k, shape, bound: jax.random.uniform(
        k, shape, jnp.float32, minval=-bound, maxval=bound)

    bg = 1.0 / np.sqrt(H)
    params = {
        # GRU layer 0 (pre-transposed: (in, 3H); gate order r, z, n)
        "wih0": u(ks[0], (D, 3 * H), bg),
        "whh0": u(ks[1], (H, 3 * H), bg),
        "bih0": u(ks[2], (1, 3 * H), bg),
        "bhh0": u(ks[3], (1, 3 * H), bg),
        # GRU layer 1
        "wih1": u(ks[4], (H, 3 * H), bg),
        "whh1": u(ks[5], (H, 3 * H), bg),
        "bih1": u(ks[6], (1, 3 * H), bg),
        "bhh1": u(ks[7], (1, 3 * H), bg),
    }
    # l1: Linear(H + 1 + action_dim, 256) ; columns split (hidden | xt | action)
    b1l = 1.0 / np.sqrt(H + 1 + action_dim)
    params["w1h"] = u(ks[8], (H, L1_OUT), b1l)
    params["w1x"] = u(ks[9], (1, L1_OUT), b1l)
    params["w1a"] = u(ks[10], (1, L1_OUT), b1l)
    params["b1"] = u(ks[11], (1, L1_OUT), b1l)
    # l3: Linear(256, action_dim)
    b3l = 1.0 / np.sqrt(L1_OUT)
    params["w3"] = u(ks[12], (L1_OUT, action_dim), b3l)
    params["b3"] = u(ks[13], (1, action_dim), b3l)
    return params


def _pick_tile(B, T):
    """Batch tile: multiple of 8, >=2 programs when B>8 (v7x dual-TC), VMEM-bounded."""
    vmem_cap = max(8, (GI0_BLOCK_BYTES // (max(T, 1) * 3 * HIDDEN * 4)) // 8 * 8)
    if B <= 8:
        tile = 8
    else:
        n = max(2, -(-B // MAX_TILE_B))
        tile = ((-(-B // n) + 7) // 8) * 8
        tile = max(8, min(tile, MAX_TILE_B, vmem_cap))
    n_tiles = -(-B // tile)
    return tile, n_tiles


def critic_forward(state, action, params):
    B, state_dim = state.shape
    T = (state_dim - 1) // D_FEAT
    H = HIDDEN
    bf16 = jnp.bfloat16

    # Same reshape/permute as the PyTorch GRUModel, then time-major.
    feature = state[:, :-1].reshape(B, D_FEAT, T)         # (B, d_feat, T)
    feature = jnp.transpose(feature, (2, 0, 1))           # (T, B, d_feat)
    xt = state[:, -1:]                                    # (B, 1)

    # ---- Layer-0 input projection hoisted to XLA: one (T*B,6)x(6,3H) contraction with
    # r/z biases pre-summed.  Removes the T degenerate K=6 MXU passes and the (...,6)
    # feature block (6 -> 128 lane pad) from the kernel entirely.
    gbias0 = jnp.concatenate(
        [params["bih0"][:, :2 * H] + params["bhh0"][:, :2 * H],
         params["bih0"][:, 2 * H:]], axis=1)              # (1, 3H)
    gi0 = jnp.einsum("tbd,dh->tbh", feature, params["wih0"]) + gbias0  # (T, B, 3H) f32

    # ---- batch tiling: >=2 "parallel" programs when B > 8 (both v7x TensorCores busy),
    # tile adapted to B (minimal pad) and to the VMEM budget of the gi0 block.
    tile_b, n_tiles = _pick_tile(B, T)
    Bp = tile_b * n_tiles
    if Bp != B:
        pad = Bp - B
        gi0 = jnp.pad(gi0, ((0, 0), (0, pad), (0, 0)))
        xt = jnp.pad(xt, ((0, pad), (0, 0)))
        action = jnp.pad(action, ((0, pad), (0, 0)))

    # ---- kernel-layout weights: MXU operands in bf16, biases / VPU weights in f32.
    whh0 = params["whh0"].astype(bf16)                                 # (H, 3H)
    bhh0n = params["bhh0"][:, 2 * H:]                                  # (1, H)

    wih1, whh1 = params["wih1"], params["whh1"]
    zero_hh = jnp.zeros((H, H), jnp.float32)
    # Single fused layer-1 weight (2H, 4H): cols = [rz sums | gi1_n | gh1_n].
    w1cat = jnp.concatenate(
        [jnp.concatenate([wih1[:, :2 * H], wih1[:, 2 * H:], zero_hh], axis=1),
         jnp.concatenate([whh1[:, :2 * H], zero_hh, whh1[:, 2 * H:]], axis=1)],
        axis=0).astype(bf16)                                           # (2H, 4H)
    b1rz = params["bih1"][:, :2 * H] + params["bhh1"][:, :2 * H]       # (1, 2H)
    bih1n = params["bih1"][:, 2 * H:]                                  # (1, H)
    bhh1n = params["bhh1"][:, 2 * H:]                                  # (1, H)

    w1h = params["w1h"].astype(bf16)                                   # (H, 256)
    w3row = params["w3"].T                                             # (1, 256), ACTION_DIM=1

    weight_args = (whh0, bhh0n, w1cat, b1rz, bih1n, bhh1n,
                   w1h, params["w1x"], params["w1a"], params["b1"],
                   w3row, params["b3"])
    args = (gi0, xt, action) + weight_args

    cost = pl.CostEstimate(
        flops=int(Bp * (T * (2 * H * 3 * H + 2 * (2 * H) * (4 * H))
                        + 2 * H * L1_OUT + 2 * L1_OUT)),
        transcendentals=int(Bp * T * 6 * H),
        bytes_accessed=int(sum(int(np.prod(a.shape)) * a.dtype.itemsize for a in args)
                           + Bp * ACTION_DIM * 4),
    )

    grid_spec = pltpu.PrefetchScalarGridSpec(
        num_scalar_prefetch=0,
        grid=(n_tiles,),
        in_specs=[
            pl.BlockSpec((T, tile_b, 3 * H), lambda i: (0, i, 0)),
            pl.BlockSpec((tile_b, 1), lambda i: (i, 0)),
            pl.BlockSpec((tile_b, ACTION_DIM), lambda i: (i, 0)),
        ] + [pl.BlockSpec(w.shape, lambda i: (0, 0)) for w in weight_args],
        out_specs=pl.BlockSpec((tile_b, ACTION_DIM), lambda i: (i, 0)),
        scratch_shapes=[pltpu.VMEM((tile_b, 2 * H), jnp.bfloat16)],
    )

    out = pl.pallas_call(
        critic_kernel,
        out_shape=jax.ShapeDtypeStruct((Bp, ACTION_DIM), jnp.float32),
        grid_spec=grid_spec,
        compiler_params=pltpu.CompilerParams(dimension_semantics=("parallel",)),
        cost_estimate=cost,
    )(*args)
    return out[:B]


# ---------------- pure-JAX f32 reference (mirrors torch semantics) ----------------
def _gru_cell(x, h, wih, whh, bih, bhh):
    H = HIDDEN
    gi = jnp.dot(x, wih) + bih
    gh = jnp.dot(h, whh) + bhh
    r = jax.nn.sigmoid(gi[:, 0:H] + gh[:, 0:H])
    z = jax.nn.sigmoid(gi[:, H:2 * H] + gh[:, H:2 * H])
    n = jnp.tanh(gi[:, 2 * H:3 * H] + r * gh[:, 2 * H:3 * H])
    return (1.0 - z) * n + z * h


def critic_reference(state, action, params):
    B, state_dim = state.shape
    T = (state_dim - 1) // D_FEAT
    feature = state[:, :-1].reshape(B, D_FEAT, T).transpose(0, 2, 1)  # (B, T, d_feat)
    xt = state[:, -1:]

    h0 = jnp.zeros((B, HIDDEN), jnp.float32)
    h1 = jnp.zeros((B, HIDDEN), jnp.float32)
    for t in range(T):
        x_t = feature[:, t, :]
        h0 = _gru_cell(x_t, h0, params["wih0"], params["whh0"],
                       params["bih0"], params["bhh0"])
        h1 = _gru_cell(h0, h1, params["wih1"], params["whh1"],
                       params["bih1"], params["bhh1"])
    pre = (h1 @ params["w1h"] + xt * params["w1x"] + action * params["w1a"]
           + params["b1"])
    q = jnp.maximum(pre, 0.0)
    return q @ params["w3"] + params["b3"]


if __name__ == "__main__":
    B = 4
    T = 8
    state_dim = D_FEAT * T + 1     # 49

    key = jax.random.PRNGKey(0)
    k_state, k_action, k_params = jax.random.split(key, 3)
    state = jax.random.normal(k_state, (B, state_dim), dtype=jnp.float32)
    action = jax.random.normal(k_action, (B, ACTION_DIM), dtype=jnp.float32)
    params = init_params(k_params, state_dim)

    out = critic_forward(state, action, params)
    out = jax.block_until_ready(out)

    ref = critic_reference(state, action, params)
    # bf16 MXU operands (f32 accumulation / f32 gate math) -> relaxed tolerance.
    np.testing.assert_allclose(np.asarray(out), np.asarray(ref),
                               rtol=2e-2, atol=2e-2)
    assert out.shape == (B, ACTION_DIM)
    print("KERNEL_OK")
</pallas_src>

<mosaic_0001>
module attributes {stable_mosaic.version = 11 : i64} {
  func.func @critic_kernel(%arg0: i32, %arg1: memref<8x8x384xf32, #tpu.memory_space<vmem>>, %arg2: memref<8x1xf32, #tpu.memory_space<vmem>>, %arg3: memref<8x1xf32, #tpu.memory_space<vmem>>, %arg4: memref<128x384xbf16, #tpu.memory_space<vmem>>, %arg5: memref<1x128xf32, #tpu.memory_space<vmem>>, %arg6: memref<256x512xbf16, #tpu.memory_space<vmem>>, %arg7: memref<1x256xf32, #tpu.memory_space<vmem>>, %arg8: memref<1x128xf32, #tpu.memory_space<vmem>>, %arg9: memref<1x128xf32, #tpu.memory_space<vmem>>, %arg10: memref<128x256xbf16, #tpu.memory_space<vmem>>, %arg11: memref<1x256xf32, #tpu.memory_space<vmem>>, %arg12: memref<1x256xf32, #tpu.memory_space<vmem>>, %arg13: memref<1x256xf32, #tpu.memory_space<vmem>>, %arg14: memref<1x256xf32, #tpu.memory_space<vmem>>, %arg15: memref<1x1xf32, #tpu.memory_space<vmem>>, %arg16: memref<8x1xf32, #tpu.memory_space<vmem>>, %arg17: memref<8x256xbf16, #tpu.memory_space<vmem>>) attributes {dimension_semantics = [#tpu.dimension_semantics<parallel>], iteration_bounds = array<i64: 1>, scalar_prefetch = 0 : i64, scratch_operands = 1 : i64, tpu.core_type = #tpu.core_type<tc>, window_params = [{transform_indices = @transform_0, window_bounds = array<i64: 8, 8, 384>}, {transform_indices = @transform_1, window_bounds = array<i64: 8, 1>}, {transform_indices = @transform_2, window_bounds = array<i64: 8, 1>}, {pipeline_mode = #tpu.pipeline_mode<synchronous>, transform_indices = @transform_3, window_bounds = array<i64: 128, 384>}, {pipeline_mode = #tpu.pipeline_mode<synchronous>, transform_indices = @transform_4, window_bounds = array<i64: 1, 128>}, {pipeline_mode = #tpu.pipeline_mode<synchronous>, transform_indices = @transform_5, window_bounds = array<i64: 256, 512>}, {pipeline_mode = #tpu.pipeline_mode<synchronous>, transform_indices = @transform_6, window_bounds = array<i64: 1, 256>}, {pipeline_mode = #tpu.pipeline_mode<synchronous>, transform_indices = @transform_7, window_bounds = array<i64: 1, 128>}, {pipeline_mode = #tpu.pipeline_mode<synchronous>, transform_indices = @transform_8, window_bounds = array<i64: 1, 128>}, {pipeline_mode = #tpu.pipeline_mode<synchronous>, transform_indices = @transform_9, window_bounds = array<i64: 128, 256>}, {pipeline_mode = #tpu.pipeline_mode<synchronous>, transform_indices = @transform_10, window_bounds = array<i64: 1, 256>}, {pipeline_mode = #tpu.pipeline_mode<synchronous>, transform_indices = @transform_11, window_bounds = array<i64: 1, 256>}, {pipeline_mode = #tpu.pipeline_mode<synchronous>, transform_indices = @transform_12, window_bounds = array<i64: 1, 256>}, {pipeline_mode = #tpu.pipeline_mode<synchronous>, transform_indices = @transform_13, window_bounds = array<i64: 1, 256>}, {pipeline_mode = #tpu.pipeline_mode<synchronous>, transform_indices = @transform_14, window_bounds = array<i64: 1, 1>}, {transform_indices = @transform_15, window_bounds = array<i64: 8, 1>}]} {
    %c0 = arith.constant 0 : index
    %c0_0 = arith.constant 0 : index
    %0 = vector.load %arg4[%c0, %c0_0] : memref<128x384xbf16, #tpu.memory_space<vmem>>, vector<128x384xbf16>
    %c0_1 = arith.constant 0 : index
    %c0_2 = arith.constant 0 : index
    %1 = vector.load %arg6[%c0_1, %c0_2] : memref<256x512xbf16, #tpu.memory_space<vmem>>, vector<256x512xbf16>
    %c0_3 = arith.constant 0 : index
    %c0_4 = arith.constant 0 : index
    %2 = vector.load %arg5[%c0_3, %c0_4] : memref<1x128xf32, #tpu.memory_space<vmem>>, vector<1x128xf32>
    %3 = vector.shape_cast %2 : vector<1x128xf32> to vector<1x128xf32>
    %4 = vector.broadcast %3 : vector<1x128xf32> to vector<8x128xf32>
    %c0_5 = arith.constant 0 : index
    %c0_6 = arith.constant 0 : index
    %5 = vector.load %arg7[%c0_5, %c0_6] : memref<1x256xf32, #tpu.memory_space<vmem>>, vector<1x128xf32>
    %6 = vector.shape_cast %5 : vector<1x128xf32> to vector<1x128xf32>
    %7 = vector.broadcast %6 : vector<1x128xf32> to vector<8x128xf32>
    %c0_7 = arith.constant 0 : index
    %c128 = arith.constant 128 : index
    %8 = vector.load %arg7[%c0_7, %c128] : memref<1x256xf32, #tpu.memory_space<vmem>>, vector<1x128xf32>
    %9 = vector.shape_cast %8 : vector<1x128xf32> to vector<1x128xf32>
    %10 = vector.broadcast %9 : vector<1x128xf32> to vector<8x128xf32>
    %c0_8 = arith.constant 0 : index
    %c0_9 = arith.constant 0 : index
    %11 = vector.load %arg8[%c0_8, %c0_9] : memref<1x128xf32, #tpu.memory_space<vmem>>, vector<1x128xf32>
    %12 = vector.shape_cast %11 : vector<1x128xf32> to vector<1x128xf32>
    %13 = vector.broadcast %12 : vector<1x128xf32> to vector<8x128xf32>
    %c0_10 = arith.constant 0 : index
    %c0_11 = arith.constant 0 : index
    %14 = vector.load %arg9[%c0_10, %c0_11] : memref<1x128xf32, #tpu.memory_space<vmem>>, vector<1x128xf32>
    %15 = vector.shape_cast %14 : vector<1x128xf32> to vector<1x128xf32>
    %16 = vector.broadcast %15 : vector<1x128xf32> to vector<8x128xf32>
    %cst = arith.constant 0.000000e+00 : bf16
    %17 = vector.broadcast %cst : bf16 to vector<8x256xbf16>
    %c0_12 = arith.constant 0 : index
    %c0_13 = arith.constant 0 : index
    %18 = vector.load %arg17[%c0_12, %c0_13] : memref<8x256xbf16, #tpu.memory_space<vmem>>, vector<8x256xbf16>
    tpu.vector_store %arg17[%c0_12, %c0_13], %17 {strides = array<i32>} : memref<8x256xbf16, #tpu.memory_space<vmem>>, vector<8x256xbf16>,
    %cst_14 = arith.constant 0.000000e+00 : f32
    %19 = vector.broadcast %cst_14 : f32 to vector<8x128xf32>
    %cst_15 = arith.constant 0.000000e+00 : f32
    %20 = vector.broadcast %cst_15 : f32 to vector<8x128xf32>
    %c0_i32 = arith.constant 0 : i32
    %21 = arith.index_cast %c0_i32 : i32 to index
    %c0_16 = arith.constant 0 : index
    %c0_17 = arith.constant 0 : index
    %22 = vector.load %arg1[%21, %c0_16, %c0_17] : memref<8x8x384xf32, #tpu.memory_space<vmem>>, vector<1x8x384xf32>
    %23 = vector.shape_cast %22 : vector<1x8x384xf32> to vector<8x384xf32>
    %c0_18 = arith.constant 0 : index
    %c0_19 = arith.constant 0 : index
    %24 = vector.load %arg17[%c0_18, %c0_19] : memref<8x256xbf16, #tpu.memory_space<vmem>>, vector<8x128xbf16>
    %cst_20 = arith.constant dense<0.000000e+00> : vector<8x384xf32>
    %25 = tpu.matmul %24, %0, %cst_20 {dimension_numbers = #tpu.dot_dimension_numbers<[1], [0], [0], [1], [0, 0, 1, 1], [], []>} : vector<8x128xbf16>, vector<128x384xbf16>, vector<8x384xf32> -> vector<8x384xf32>
    %26 = vector.extract_strided_slice %23 {offsets = [0, 0], sizes = [8, 128], strides = [1, 1]} : vector<8x384xf32> to vector<8x128xf32>
    %27 = vector.extract_strided_slice %25 {offsets = [0, 0], sizes = [8, 128], strides = [1, 1]} : vector<8x384xf32> to vector<8x128xf32>
    %28 = arith.addf %26, %27 : vector<8x128xf32>
    %29 = arith.negf %28 : vector<8x128xf32>
    %30 = math.exp %29 : vector<8x128xf32>
    %cst_21 = arith.constant 1.000000e+00 : f32
    %31 = vector.broadcast %cst_21 : f32 to vector<8x128xf32>
    %32 = arith.addf %31, %30 : vector<8x128xf32>
    %33 = arith.divf %31, %32 : vector<8x128xf32>
    %34 = vector.extract_strided_slice %23 {offsets = [0, 128], sizes = [8, 128], strides = [1, 1]} : vector<8x384xf32> to vector<8x128xf32>
    %35 = vector.extract_strided_slice %25 {offsets = [0, 128], sizes = [8, 128], strides = [1, 1]} : vector<8x384xf32> to vector<8x128xf32>
    %36 = arith.addf %34, %35 : vector<8x128xf32>
    %37 = arith.negf %36 : vector<8x128xf32>
    %38 = math.exp %37 : vector<8x128xf32>
    %cst_22 = arith.constant 1.000000e+00 : f32
    %39 = vector.broadcast %cst_22 : f32 to vector<8x128xf32>
    %40 = arith.addf %39, %38 : vector<8x128xf32>
    %41 = arith.divf %39, %40 : vector<8x128xf32>
    %42 = vector.extract_strided_slice %23 {offsets = [0, 256], sizes = [8, 128], strides = [1, 1]} : vector<8x384xf32> to vector<8x128xf32>
    %43 = vector.extract_strided_slice %25 {offsets = [0, 256], sizes = [8, 128], strides = [1, 1]} : vector<8x384xf32> to vector<8x128xf32>
    %44 = arith.addf %43, %4 : vector<8x128xf32>
    %45 = arith.mulf %33, %44 : vector<8x128xf32>
    %46 = arith.addf %42, %45 : vector<8x128xf32>
    %47 = math.tanh %46 : vector<8x128xf32>
    %cst_23 = arith.constant 1.000000e+00 : f32
    %48 = vector.broadcast %cst_23 : f32 to vector<8x128xf32>
    %49 = arith.subf %48, %41 : vector<8x128xf32>
    %50 = arith.mulf %49, %47 : vector<8x128xf32>
    %51 = arith.mulf %41, %19 : vector<8x128xf32>
    %52 = arith.addf %50, %51 : vector<8x128xf32>
    %53 = arith.truncf %52 : vector<8x128xf32> to vector<8x128xbf16>
    %c0_24 = arith.constant 0 : index
    %c0_25 = arith.constant 0 : index
    %54 = vector.load %arg17[%c0_24, %c0_25] : memref<8x256xbf16, #tpu.memory_space<vmem>>, vector<8x128xbf16>
    tpu.vector_store %arg17[%c0_24, %c0_25], %53 {strides = array<i32>} : memref<8x256xbf16, #tpu.memory_space<vmem>>, vector<8x128xbf16>,
    %c0_26 = arith.constant 0 : index
    %c0_27 = arith.constant 0 : index
    %55 = vector.load %arg17[%c0_26, %c0_27] : memref<8x256xbf16, #tpu.memory_space<vmem>>, vector<8x256xbf16>
    %cst_28 = arith.constant dense<0.000000e+00> : vector<8x512xf32>
    %56 = tpu.matmul %55, %1, %cst_28 {dimension_numbers = #tpu.dot_dimension_numbers<[1], [0], [0], [1], [0, 0, 1, 1], [], []>} : vector<8x256xbf16>, vector<256x512xbf16>, vector<8x512xf32> -> vector<8x512xf32>
    %57 = vector.extract_strided_slice %56 {offsets = [0, 0], sizes = [8, 128], strides = [1, 1]} : vector<8x512xf32> to vector<8x128xf32>
    %58 = arith.addf %57, %7 : vector<8x128xf32>
    %59 = arith.negf %58 : vector<8x128xf32>
    %60 = math.exp %59 : vector<8x128xf32>
    %cst_29 = arith.constant 1.000000e+00 : f32
    %61 = vector.broadcast %cst_29 : f32 to vector<8x128xf32>
    %62 = arith.addf %61, %60 : vector<8x128xf32>
    %63 = arith.divf %61, %62 : vector<8x128xf32>
    %64 = vector.extract_strided_slice %56 {offsets = [0, 128], sizes = [8, 128], strides = [1, 1]} : vector<8x512xf32> to vector<8x128xf32>
    %65 = arith.addf %64, %10 : vector<8x128xf32>
    %66 = arith.negf %65 : vector<8x128xf32>
    %67 = math.exp %66 : vector<8x128xf32>
    %cst_30 = arith.constant 1.000000e+00 : f32
    %68 = vector.broadcast %cst_30 : f32 to vector<8x128xf32>
    %69 = arith.addf %68, %67 : vector<8x128xf32>
    %70 = arith.divf %68, %69 : vector<8x128xf32>
    %71 = vector.extract_strided_slice %56 {offsets = [0, 256], sizes = [8, 128], strides = [1, 1]} : vector<8x512xf32> to vector<8x128xf32>
    %72 = arith.addf %71, %13 : vector<8x128xf32>
    %73 = vector.extract_strided_slice %56 {offsets = [0, 384], sizes = [8, 128], strides = [1, 1]} : vector<8x512xf32> to vector<8x128xf32>
    %74 = arith.addf %73, %16 : vector<8x128xf32>
    %75 = arith.mulf %63, %74 : vector<8x128xf32>
    %76 = arith.addf %72, %75 : vector<8x128xf32>
    %77 = math.tanh %76 : vector<8x128xf32>
    %cst_31 = arith.constant 1.000000e+00 : f32
    %78 = vector.broadcast %cst_31 : f32 to vector<8x128xf32>
    %79 = arith.subf %78, %70 : vector<8x128xf32>
    %80 = arith.mulf %79, %77 : vector<8x128xf32>
    %81 = arith.mulf %70, %20 : vector<8x128xf32>
    %82 = arith.addf %80, %81 : vector<8x128xf32>
    %83 = arith.truncf %82 : vector<8x128xf32> to vector<8x128xbf16>
    %c0_32 = arith.constant 0 : index
    %c128_33 = arith.constant 128 : index
    %84 = vector.load %arg17[%c0_32, %c128_33] : memref<8x256xbf16, #tpu.memory_space<vmem>>, vector<8x128xbf16>
    tpu.vector_store %arg17[%c0_32, %c128_33], %83 {strides = array<i32>} : memref<8x256xbf16, #tpu.memory_space<vmem>>, vector<8x128xbf16>,
    %c1_i32 = arith.constant 1 : i32
    %85 = arith.index_cast %c1_i32 : i32 to index
    %c0_34 = arith.constant 0 : index
    %c0_35 = arith.constant 0 : index
    %86 = vector.load %arg1[%85, %c0_34, %c0_35] : memref<8x8x384xf32, #tpu.memory_space<vmem>>, vector<1x8x384xf32>
    %87 = vector.shape_cast %86 : vector<1x8x384xf32> to vector<8x384xf32>
    %c0_36 = arith.constant 0 : index
    %c0_37 = arith.constant 0 : index
    %88 = vector.load %arg17[%c0_36, %c0_37] : memref<8x256xbf16, #tpu.memory_space<vmem>>, vector<8x128xbf16>
    %cst_38 = arith.constant dense<0.000000e+00> : vector<8x384xf32>
    %89 = tpu.matmul %88, %0, %cst_38 {dimension_numbers = #tpu.dot_dimension_numbers<[1], [0], [0], [1], [0, 0, 1, 1], [], []>} : vector<8x128xbf16>, vector<128x384xbf16>, vector<8x384xf32> -> vector<8x384xf32>
    %90 = vector.extract_strided_slice %87 {offsets = [0, 0], sizes = [8, 128], strides = [1, 1]} : vector<8x384xf32> to vector<8x128xf32>
    %91 = vector.extract_strided_slice %89 {offsets = [0, 0], sizes = [8, 128], strides = [1, 1]} : vector<8x384xf32> to vector<8x128xf32>
    %92 = arith.addf %90, %91 : vector<8x128xf32>
    %93 = arith.negf %92 : vector<8x128xf32>
    %94 = math.exp %93 : vector<8x128xf32>
    %cst_39 = arith.constant 1.000000e+00 : f32
    %95 = vector.broadcast %cst_39 : f32 to vector<8x128xf32>
    %96 = arith.addf %95, %94 : vector<8x128xf32>
    %97 = arith.divf %95, %96 : vector<8x128xf32>
    %98 = vector.extract_strided_slice %87 {offsets = [0, 128], sizes = [8, 128], strides = [1, 1]} : vector<8x384xf32> to vector<8x128xf32>
    %99 = vector.extract_strided_slice %89 {offsets = [0, 128], sizes = [8, 128], strides = [1, 1]} : vector<8x384xf32> to vector<8x128xf32>
    %100 = arith.addf %98, %99 : vector<8x128xf32>
    %101 = arith.negf %100 : vector<8x128xf32>
    %102 = math.exp %101 : vector<8x128xf32>
    %cst_40 = arith.constant 1.000000e+00 : f32
    %103 = vector.broadcast %cst_40 : f32 to vector<8x128xf32>
    %104 = arith.addf %103, %102 : vector<8x128xf32>
    %105 = arith.divf %103, %104 : vector<8x128xf32>
    %106 = vector.extract_strided_slice %87 {offsets = [0, 256], sizes = [8, 128], strides = [1, 1]} : vector<8x384xf32> to vector<8x128xf32>
    %107 = vector.extract_strided_slice %89 {offsets = [0, 256], sizes = [8, 128], strides = [1, 1]} : vector<8x384xf32> to vector<8x128xf32>
    %108 = arith.addf %107, %4 : vector<8x128xf32>
    %109 = arith.mulf %97, %108 : vector<8x128xf32>
    %110 = arith.addf %106, %109 : vector<8x128xf32>
    %111 = math.tanh %110 : vector<8x128xf32>
    %cst_41 = arith.constant 1.000000e+00 : f32
    %112 = vector.broadcast %cst_41 : f32 to vector<8x128xf32>
    %113 = arith.subf %112, %105 : vector<8x128xf32>
    %114 = arith.mulf %113, %111 : vector<8x128xf32>
    %115 = arith.mulf %105, %52 : vector<8x128xf32>
    %116 = arith.addf %114, %115 : vector<8x128xf32>
    %117 = arith.truncf %116 : vector<8x128xf32> to vector<8x128xbf16>
    %c0_42 = arith.constant 0 : index
    %c0_43 = arith.constant 0 : index
    %118 = vector.load %arg17[%c0_42, %c0_43] : memref<8x256xbf16, #tpu.memory_space<vmem>>, vector<8x128xbf16>
    tpu.vector_store %arg17[%c0_42, %c0_43], %117 {strides = array<i32>} : memref<8x256xbf16, #tpu.memory_space<vmem>>, vector<8x128xbf16>,
    %c0_44 = arith.constant 0 : index
    %c0_45 = arith.constant 0 : index
    %119 = vector.load %arg17[%c0_44, %c0_45] : memref<8x256xbf16, #tpu.memory_space<vmem>>, vector<8x256xbf16>
    %cst_46 = arith.constant dense<0.000000e+00> : vector<8x512xf32>
    %120 = tpu.matmul %119, %1, %cst_46 {dimension_numbers = #tpu.dot_dimension_numbers<[1], [0], [0], [1], [0, 0, 1, 1], [], []>} : vector<8x256xbf16>, vector<256x512xbf16>, vector<8x512xf32> -> vector<8x512xf32>
    %121 = vector.extract_strided_slice %120 {offsets = [0, 0], sizes = [8, 128], strides = [1, 1]} : vector<8x512xf32> to vector<8x128xf32>
    %122 = arith.addf %121, %7 : vector<8x128xf32>
    %123 = arith.negf %122 : vector<8x128xf32>
    %124 = math.exp %123 : vector<8x128xf32>
    %cst_47 = arith.constant 1.000000e+00 : f32
    %125 = vector.broadcast %cst_47 : f32 to vector<8x128xf32>
    %126 = arith.addf %125, %124 : vector<8x128xf32>
    %127 = arith.divf %125, %126 : vector<8x128xf32>
    %128 = vector.extract_strided_slice %120 {offsets = [0, 128], sizes = [8, 128], strides = [1, 1]} : vector<8x512xf32> to vector<8x128xf32>
    %129 = arith.addf %128, %10 : vector<8x128xf32>
    %130 = arith.negf %129 : vector<8x128xf32>
    %131 = math.exp %130 : vector<8x128xf32>
    %cst_48 = arith.constant 1.000000e+00 : f32
    %132 = vector.broadcast %cst_48 : f32 to vector<8x128xf32>
    %133 = arith.addf %132, %131 : vector<8x128xf32>
    %134 = arith.divf %132, %133 : vector<8x128xf32>
    %135 = vector.extract_strided_slice %120 {offsets = [0, 256], sizes = [8, 128], strides = [1, 1]} : vector<8x512xf32> to vector<8x128xf32>
    %136 = arith.addf %135, %13 : vector<8x128xf32>
    %137 = vector.extract_strided_slice %120 {offsets = [0, 384], sizes = [8, 128], strides = [1, 1]} : vector<8x512xf32> to vector<8x128xf32>
    %138 = arith.addf %137, %16 : vector<8x128xf32>
    %139 = arith.mulf %127, %138 : vector<8x128xf32>
    %140 = arith.addf %136, %139 : vector<8x128xf32>
    %141 = math.tanh %140 : vector<8x128xf32>
    %cst_49 = arith.constant 1.000000e+00 : f32
    %142 = vector.broadcast %cst_49 : f32 to vector<8x128xf32>
    %143 = arith.subf %142, %134 : vector<8x128xf32>
    %144 = arith.mulf %143, %141 : vector<8x128xf32>
    %145 = arith.mulf %134, %82 : vector<8x128xf32>
    %146 = arith.addf %144, %145 : vector<8x128xf32>
    %147 = arith.truncf %146 : vector<8x128xf32> to vector<8x128xbf16>
    %c0_50 = arith.constant 0 : index
    %c128_51 = arith.constant 128 : index
    %148 = vector.load %arg17[%c0_50, %c128_51] : memref<8x256xbf16, #tpu.memory_space<vmem>>, vector<8x128xbf16>
    tpu.vector_store %arg17[%c0_50, %c128_51], %147 {strides = array<i32>} : memref<8x256xbf16, #tpu.memory_space<vmem>>, vector<8x128xbf16>,
    %c2_i32 = arith.constant 2 : i32
    %149 = arith.index_cast %c2_i32 : i32 to index
    %c0_52 = arith.constant 0 : index
    %c0_53 = arith.constant 0 : index
    %150 = vector.load %arg1[%149, %c0_52, %c0_53] : memref<8x8x384xf32, #tpu.memory_space<vmem>>, vector<1x8x384xf32>
    %151 = vector.shape_cast %150 : vector<1x8x384xf32> to vector<8x384xf32>
    %c0_54 = arith.constant 0 : index
    %c0_55 = arith.constant 0 : index
    %152 = vector.load %arg17[%c0_54, %c0_55] : memref<8x256xbf16, #tpu.memory_space<vmem>>, vector<8x128xbf16>
    %cst_56 = arith.constant dense<0.000000e+00> : vector<8x384xf32>
    %153 = tpu.matmul %152, %0, %cst_56 {dimension_numbers = #tpu.dot_dimension_numbers<[1], [0], [0], [1], [0, 0, 1, 1], [], []>} : vector<8x128xbf16>, vector<128x384xbf16>, vector<8x384xf32> -> vector<8x384xf32>
    %154 = vector.extract_strided_slice %151 {offsets = [0, 0], sizes = [8, 128], strides = [1, 1]} : vector<8x384xf32> to vector<8x128xf32>
    %155 = vector.extract_strided_slice %153 {offsets = [0, 0], sizes = [8, 128], strides = [1, 1]} : vector<8x384xf32> to vector<8x128xf32>
    %156 = arith.addf %154, %155 : vector<8x128xf32>
    %157 = arith.negf %156 : vector<8x128xf32>
    %158 = math.exp %157 : vector<8x128xf32>
    %cst_57 = arith.constant 1.000000e+00 : f32
    %159 = vector.broadcast %cst_57 : f32 to vector<8x128xf32>
    %160 = arith.addf %159, %158 : vector<8x128xf32>
    %161 = arith.divf %159, %160 : vector<8x128xf32>
    %162 = vector.extract_strided_slice %151 {offsets = [0, 128], sizes = [8, 128], strides = [1, 1]} : vector<8x384xf32> to vector<8x128xf32>
    %163 = vector.extract_strided_slice %153 {offsets = [0, 128], sizes = [8, 128], strides = [1, 1]} : vector<8x384xf32> to vector<8x128xf32>
    %164 = arith.addf %162, %163 : vector<8x128xf32>
    %165 = arith.negf %164 : vector<8x128xf32>
    %166 = math.exp %165 : vector<8x128xf32>
    %cst_58 = arith.constant 1.000000e+00 : f32
    %167 = vector.broadcast %cst_58 : f32 to vector<8x128xf32>
    %168 = arith.addf %167, %166 : vector<8x128xf32>
    %169 = arith.divf %167, %168 : vector<8x128xf32>
    %170 = vector.extract_strided_slice %151 {offsets = [0, 256], sizes = [8, 128], strides = [1, 1]} : vector<8x384xf32> to vector<8x128xf32>
    %171 = vector.extract_strided_slice %153 {offsets = [0, 256], sizes = [8, 128], strides = [1, 1]} : vector<8x384xf32> to vector<8x128xf32>
    %172 = arith.addf %171, %4 : vector<8x128xf32>
    %173 = arith.mulf %161, %172 : vector<8x128xf32>
    %174 = arith.addf %170, %173 : vector<8x128xf32>
    %175 = math.tanh %174 : vector<8x128xf32>
    %cst_59 = arith.constant 1.000000e+00 : f32
    %176 = vector.broadcast %cst_59 : f32 to vector<8x128xf32>
    %177 = arith.subf %176, %169 : vector<8x128xf32>
    %178 = arith.mulf %177, %175 : vector<8x128xf32>
    %179 = arith.mulf %169, %116 : vector<8x128xf32>
    %180 = arith.addf %178, %179 : vector<8x128xf32>
    %181 = arith.truncf %180 : vector<8x128xf32> to vector<8x128xbf16>
    %c0_60 = arith.constant 0 : index
    %c0_61 = arith.constant 0 : index
    %182 = vector.load %arg17[%c0_60, %c0_61] : memref<8x256xbf16, #tpu.memory_space<vmem>>, vector<8x128xbf16>
    tpu.vector_store %arg17[%c0_60, %c0_61], %181 {strides = array<i32>} : memref<8x256xbf16, #tpu.memory_space<vmem>>, vector<8x128xbf16>,
    %c0_62 = arith.constant 0 : index
    %c0_63 = arith.constant 0 : index
    %183 = vector.load %arg17[%c0_62, %c0_63] : memref<8x256xbf16, #tpu.memory_space<vmem>>, vector<8x256xbf16>
    %cst_64 = arith.constant dense<0.000000e+00> : vector<8x512xf32>
    %184 = tpu.matmul %183, %1, %cst_64 {dimension_numbers = #tpu.dot_dimension_numbers<[1], [0], [0], [1], [0, 0, 1, 1], [], []>} : vector<8x256xbf16>, vector<256x512xbf16>, vector<8x512xf32> -> vector<8x512xf32>
    %185 = vector.extract_strided_slice %184 {offsets = [0, 0], sizes = [8, 128], strides = [1, 1]} : vector<8x512xf32> to vector<8x128xf32>
    %186 = arith.addf %185, %7 : vector<8x128xf32>
    %187 = arith.negf %186 : vector<8x128xf32>
    %188 = math.exp %187 : vector<8x128xf32>
    %cst_65 = arith.constant 1.000000e+00 : f32
    %189 = vector.broadcast %cst_65 : f32 to vector<8x128xf32>
    %190 = arith.addf %189, %188 : vector<8x128xf32>
    %191 = arith.divf %189, %190 : vector<8x128xf32>
    %192 = vector.extract_strided_slice %184 {offsets = [0, 128], sizes = [8, 128], strides = [1, 1]} : vector<8x512xf32> to vector<8x128xf32>
    %193 = arith.addf %192, %10 : vector<8x128xf32>
    %194 = arith.negf %193 : vector<8x128xf32>
    %195 = math.exp %194 : vector<8x128xf32>
    %cst_66 = arith.constant 1.000000e+00 : f32
    %196 = vector.broadcast %cst_66 : f32 to vector<8x128xf32>
    %197 = arith.addf %196, %195 : vector<8x128xf32>
    %198 = arith.divf %196, %197 : vector<8x128xf32>
    %199 = vector.extract_strided_slice %184 {offsets = [0, 256], sizes = [8, 128], strides = [1, 1]} : vector<8x512xf32> to vector<8x128xf32>
    %200 = arith.addf %199, %13 : vector<8x128xf32>
    %201 = vector.extract_strided_slice %184 {offsets = [0, 384], sizes = [8, 128], strides = [1, 1]} : vector<8x512xf32> to vector<8x128xf32>
    %202 = arith.addf %201, %16 : vector<8x128xf32>
    %203 = arith.mulf %191, %202 : vector<8x128xf32>
    %204 = arith.addf %200, %203 : vector<8x128xf32>
    %205 = math.tanh %204 : vector<8x128xf32>
    %cst_67 = arith.constant 1.000000e+00 : f32
    %206 = vector.broadcast %cst_67 : f32 to vector<8x128xf32>
    %207 = arith.subf %206, %198 : vector<8x128xf32>
    %208 = arith.mulf %207, %205 : vector<8x128xf32>
    %209 = arith.mulf %198, %146 : vector<8x128xf32>
    %210 = arith.addf %208, %209 : vector<8x128xf32>
    %211 = arith.truncf %210 : vector<8x128xf32> to vector<8x128xbf16>
    %c0_68 = arith.constant 0 : index
    %c128_69 = arith.constant 128 : index
    %212 = vector.load %arg17[%c0_68, %c128_69] : memref<8x256xbf16, #tpu.memory_space<vmem>>, vector<8x128xbf16>
    tpu.vector_store %arg17[%c0_68, %c128_69], %211 {strides = array<i32>} : memref<8x256xbf16, #tpu.memory_space<vmem>>, vector<8x128xbf16>,
    %c3_i32 = arith.constant 3 : i32
    %213 = arith.index_cast %c3_i32 : i32 to index
    %c0_70 = arith.constant 0 : index
    %c0_71 = arith.constant 0 : index
    %214 = vector.load %arg1[%213, %c0_70, %c0_71] : memref<8x8x384xf32, #tpu.memory_space<vmem>>, vector<1x8x384xf32>
    %215 = vector.shape_cast %214 : vector<1x8x384xf32> to vector<8x384xf32>
    %c0_72 = arith.constant 0 : index
    %c0_73 = arith.constant 0 : index
    %216 = vector.load %arg17[%c0_72, %c0_73] : memref<8x256xbf16, #tpu.memory_space<vmem>>, vector<8x128xbf16>
    %cst_74 = arith.constant dense<0.000000e+00> : vector<8x384xf32>
    %217 = tpu.matmul %216, %0, %cst_74 {dimension_numbers = #tpu.dot_dimension_numbers<[1], [0], [0], [1], [0, 0, 1, 1], [], []>} : vector<8x128xbf16>, vector<128x384xbf16>, vector<8x384xf32> -> vector<8x384xf32>
    %218 = vector.extract_strided_slice %215 {offsets = [0, 0], sizes = [8, 128], strides = [1, 1]} : vector<8x384xf32> to vector<8x128xf32>
    %219 = vector.extract_strided_slice %217 {offsets = [0, 0], sizes = [8, 128], strides = [1, 1]} : vector<8x384xf32> to vector<8x128xf32>
    %220 = arith.addf %218, %219 : vector<8x128xf32>
    %221 = arith.negf %220 : vector<8x128xf32>
    %222 = math.exp %221 : vector<8x128xf32>
    %cst_75 = arith.constant 1.000000e+00 : f32
    %223 = vector.broadcast %cst_75 : f32 to vector<8x128xf32>
    %224 = arith.addf %223, %222 : vector<8x128xf32>
    %225 = arith.divf %223, %224 : vector<8x128xf32>
    %226 = vector.extract_strided_slice %215 {offsets = [0, 128], sizes = [8, 128], strides = [1, 1]} : vector<8x384xf32> to vector<8x128xf32>
    %227 = vector.extract_strided_slice %217 {offsets = [0, 128], sizes = [8, 128], strides = [1, 1]} : vector<8x384xf32> to vector<8x128xf32>
    %228 = arith.addf %226, %227 : vector<8x128xf32>
    %229 = arith.negf %228 : vector<8x128xf32>
    %230 = math.exp %229 : vector<8x128xf32>
    %cst_76 = arith.constant 1.000000e+00 : f32
    %231 = vector.broadcast %cst_76 : f32 to vector<8x128xf32>
    %232 = arith.addf %231, %230 : vector<8x128xf32>
    %233 = arith.divf %231, %232 : vector<8x128xf32>
    %234 = vector.extract_strided_slice %215 {offsets = [0, 256], sizes = [8, 128], strides = [1, 1]} : vector<8x384xf32> to vector<8x128xf32>
    %235 = vector.extract_strided_slice %217 {offsets = [0, 256], sizes = [8, 128], strides = [1, 1]} : vector<8x384xf32> to vector<8x128xf32>
    %236 = arith.addf %235, %4 : vector<8x128xf32>
    %237 = arith.mulf %225, %236 : vector<8x128xf32>
    %238 = arith.addf %234, %237 : vector<8x128xf32>
    %239 = math.tanh %238 : vector<8x128xf32>
    %cst_77 = arith.constant 1.000000e+00 : f32
    %240 = vector.broadcast %cst_77 : f32 to vector<8x128xf32>
    %241 = arith.subf %240, %233 : vector<8x128xf32>
    %242 = arith.mulf %241, %239 : vector<8x128xf32>
    %243 = arith.mulf %233, %180 : vector<8x128xf32>
    %244 = arith.addf %242, %243 : vector<8x128xf32>
    %245 = arith.truncf %244 : vector<8x128xf32> to vector<8x128xbf16>
    %c0_78 = arith.constant 0 : index
    %c0_79 = arith.constant 0 : index
    %246 = vector.load %arg17[%c0_78, %c0_79] : memref<8x256xbf16, #tpu.memory_space<vmem>>, vector<8x128xbf16>
    tpu.vector_store %arg17[%c0_78, %c0_79], %245 {strides = array<i32>} : memref<8x256xbf16, #tpu.memory_space<vmem>>, vector<8x128xbf16>,
    %c0_80 = arith.constant 0 : index
    %c0_81 = arith.constant 0 : index
    %247 = vector.load %arg17[%c0_80, %c0_81] : memref<8x256xbf16, #tpu.memory_space<vmem>>, vector<8x256xbf16>
    %cst_82 = arith.constant dense<0.000000e+00> : vector<8x512xf32>
    %248 = tpu.matmul %247, %1, %cst_82 {dimension_numbers = #tpu.dot_dimension_numbers<[1], [0], [0], [1], [0, 0, 1, 1], [], []>} : vector<8x256xbf16>, vector<256x512xbf16>, vector<8x512xf32> -> vector<8x512xf32>
    %249 = vector.extract_strided_slice %248 {offsets = [0, 0], sizes = [8, 128], strides = [1, 1]} : vector<8x512xf32> to vector<8x128xf32>
    %250 = arith.addf %249, %7 : vector<8x128xf32>
    %251 = arith.negf %250 : vector<8x128xf32>
    %252 = math.exp %251 : vector<8x128xf32>
    %cst_83 = arith.constant 1.000000e+00 : f32
    %253 = vector.broadcast %cst_83 : f32 to vector<8x128xf32>
    %254 = arith.addf %253, %252 : vector<8x128xf32>
    %255 = arith.divf %253, %254 : vector<8x128xf32>
    %256 = vector.extract_strided_slice %248 {offsets = [0, 128], sizes = [8, 128], strides = [1, 1]} : vector<8x512xf32> to vector<8x128xf32>
    %257 = arith.addf %256, %10 : vector<8x128xf32>
    %258 = arith.negf %257 : vector<8x128xf32>
    %259 = math.exp %258 : vector<8x128xf32>
    %cst_84 = arith.constant 1.000000e+00 : f32
    %260 = vector.broadcast %cst_84 : f32 to vector<8x128xf32>
    %261 = arith.addf %260, %259 : vector<8x128xf32>
    %262 = arith.divf %260, %261 : vector<8x128xf32>
    %263 = vector.extract_strided_slice %248 {offsets = [0, 256], sizes = [8, 128], strides = [1, 1]} : vector<8x512xf32> to vector<8x128xf32>
    %264 = arith.addf %263, %13 : vector<8x128xf32>
    %265 = vector.extract_strided_slice %248 {offsets = [0, 384], sizes = [8, 128], strides = [1, 1]} : vector<8x512xf32> to vector<8x128xf32>
    %266 = arith.addf %265, %16 : vector<8x128xf32>
    %267 = arith.mulf %255, %266 : vector<8x128xf32>
    %268 = arith.addf %264, %267 : vector<8x128xf32>
    %269 = math.tanh %268 : vector<8x128xf32>
    %cst_85 = arith.constant 1.000000e+00 : f32
    %270 = vector.broadcast %cst_85 : f32 to vector<8x128xf32>
    %271 = arith.subf %270, %262 : vector<8x128xf32>
    %272 = arith.mulf %271, %269 : vector<8x128xf32>
    %273 = arith.mulf %262, %210 : vector<8x128xf32>
    %274 = arith.addf %272, %273 : vector<8x128xf32>
    %275 = arith.truncf %274 : vector<8x128xf32> to vector<8x128xbf16>
    %c0_86 = arith.constant 0 : index
    %c128_87 = arith.constant 128 : index
    %276 = vector.load %arg17[%c0_86, %c128_87] : memref<8x256xbf16, #tpu.memory_space<vmem>>, vector<8x128xbf16>
    tpu.vector_store %arg17[%c0_86, %c128_87], %275 {strides = array<i32>} : memref<8x256xbf16, #tpu.memory_space<vmem>>, vector<8x128xbf16>,
    %c4_i32 = arith.constant 4 : i32
    %277 = arith.index_cast %c4_i32 : i32 to index
    %c0_88 = arith.constant 0 : index
    %c0_89 = arith.constant 0 : index
    %278 = vector.load %arg1[%277, %c0_88, %c0_89] : memref<8x8x384xf32, #tpu.memory_space<vmem>>, vector<1x8x384xf32>
    %279 = vector.shape_cast %278 : vector<1x8x384xf32> to vector<8x384xf32>
    %c0_90 = arith.constant 0 : index
    %c0_91 = arith.constant 0 : index
    %280 = vector.load %arg17[%c0_90, %c0_91] : memref<8x256xbf16, #tpu.memory_space<vmem>>, vector<8x128xbf16>
    %cst_92 = arith.constant dense<0.000000e+00> : vector<8x384xf32>
    %281 = tpu.matmul %280, %0, %cst_92 {dimension_numbers = #tpu.dot_dimension_numbers<[1], [0], [0], [1], [0, 0, 1, 1], [], []>} : vector<8x128xbf16>, vector<128x384xbf16>, vector<8x384xf32> -> vector<8x384xf32>
    %282 = vector.extract_strided_slice %279 {offsets = [0, 0], sizes = [8, 128], strides = [1, 1]} : vector<8x384xf32> to vector<8x128xf32>
    %283 = vector.extract_strided_slice %281 {offsets = [0, 0], sizes = [8, 128], strides = [1, 1]} : vector<8x384xf32> to vector<8x128xf32>
    %284 = arith.addf %282, %283 : vector<8x128xf32>
    %285 = arith.negf %284 : vector<8x128xf32>
    %286 = math.exp %285 : vector<8x128xf32>
    %cst_93 = arith.constant 1.000000e+00 : f32
    %287 = vector.broadcast %cst_93 : f32 to vector<8x128xf32>
    %288 = arith.addf %287, %286 : vector<8x128xf32>
    %289 = arith.divf %287, %288 : vector<8x128xf32>
    %290 = vector.extract_strided_slice %279 {offsets = [0, 128], sizes = [8, 128], strides = [1, 1]} : vector<8x384xf32> to vector<8x128xf32>
    %291 = vector.extract_strided_slice %281 {offsets = [0, 128], sizes = [8, 128], strides = [1, 1]} : vector<8x384xf32> to vector<8x128xf32>
    %292 = arith.addf %290, %291 : vector<8x128xf32>
    %293 = arith.negf %292 : vector<8x128xf32>
    %294 = math.exp %293 : vector<8x128xf32>
    %cst_94 = arith.constant 1.000000e+00 : f32
    %295 = vector.broadcast %cst_94 : f32 to vector<8x128xf32>
    %296 = arith.addf %295, %294 : vector<8x128xf32>
    %297 = arith.divf %295, %296 : vector<8x128xf32>
    %298 = vector.extract_strided_slice %279 {offsets = [0, 256], sizes = [8, 128], strides = [1, 1]} : vector<8x384xf32> to vector<8x128xf32>
    %299 = vector.extract_strided_slice %281 {offsets = [0, 256], sizes = [8, 128], strides = [1, 1]} : vector<8x384xf32> to vector<8x128xf32>
    %300 = arith.addf %299, %4 : vector<8x128xf32>
    %301 = arith.mulf %289, %300 : vector<8x128xf32>
    %302 = arith.addf %298, %301 : vector<8x128xf32>
    %303 = math.tanh %302 : vector<8x128xf32>
    %cst_95 = arith.constant 1.000000e+00 : f32
    %304 = vector.broadcast %cst_95 : f32 to vector<8x128xf32>
    %305 = arith.subf %304, %297 : vector<8x128xf32>
    %306 = arith.mulf %305, %303 : vector<8x128xf32>
    %307 = arith.mulf %297, %244 : vector<8x128xf32>
    %308 = arith.addf %306, %307 : vector<8x128xf32>
    %309 = arith.truncf %308 : vector<8x128xf32> to vector<8x128xbf16>
    %c0_96 = arith.constant 0 : index
    %c0_97 = arith.constant 0 : index
    %310 = vector.load %arg17[%c0_96, %c0_97] : memref<8x256xbf16, #tpu.memory_space<vmem>>, vector<8x128xbf16>
    tpu.vector_store %arg17[%c0_96, %c0_97], %309 {strides = array<i32>} : memref<8x256xbf16, #tpu.memory_space<vmem>>, vector<8x128xbf16>,
    %c0_98 = arith.constant 0 : index
    %c0_99 = arith.constant 0 : index
    %311 = vector.load %arg17[%c0_98, %c0_99] : memref<8x256xbf16, #tpu.memory_space<vmem>>, vector<8x256xbf16>
    %cst_100 = arith.constant dense<0.000000e+00> : vector<8x512xf32>
    %312 = tpu.matmul %311, %1, %cst_100 {dimension_numbers = #tpu.dot_dimension_numbers<[1], [0], [0], [1], [0, 0, 1, 1], [], []>} : vector<8x256xbf16>, vector<256x512xbf16>, vector<8x512xf32> -> vector<8x512xf32>
    %313 = vector.extract_strided_slice %312 {offsets = [0, 0], sizes = [8, 128], strides = [1, 1]} : vector<8x512xf32> to vector<8x128xf32>
    %314 = arith.addf %313, %7 : vector<8x128xf32>
    %315 = arith.negf %314 : vector<8x128xf32>
    %316 = math.exp %315 : vector<8x128xf32>
    %cst_101 = arith.constant 1.000000e+00 : f32
    %317 = vector.broadcast %cst_101 : f32 to vector<8x128xf32>
    %318 = arith.addf %317, %316 : vector<8x128xf32>
    %319 = arith.divf %317, %318 : vector<8x128xf32>
    %320 = vector.extract_strided_slice %312 {offsets = [0, 128], sizes = [8, 128], strides = [1, 1]} : vector<8x512xf32> to vector<8x128xf32>
    %321 = arith.addf %320, %10 : vector<8x128xf32>
    %322 = arith.negf %321 : vector<8x128xf32>
    %323 = math.exp %322 : vector<8x128xf32>
    %cst_102 = arith.constant 1.000000e+00 : f32
    %324 = vector.broadcast %cst_102 : f32 to vector<8x128xf32>
    %325 = arith.addf %324, %323 : vector<8x128xf32>
    %326 = arith.divf %324, %325 : vector<8x128xf32>
    %327 = vector.extract_strided_slice %312 {offsets = [0, 256], sizes = [8, 128], strides = [1, 1]} : vector<8x512xf32> to vector<8x128xf32>
    %328 = arith.addf %327, %13 : vector<8x128xf32>
    %329 = vector.extract_strided_slice %312 {offsets = [0, 384], sizes = [8, 128], strides = [1, 1]} : vector<8x512xf32> to vector<8x128xf32>
    %330 = arith.addf %329, %16 : vector<8x128xf32>
    %331 = arith.mulf %319, %330 : vector<8x128xf32>
    %332 = arith.addf %328, %331 : vector<8x128xf32>
    %333 = math.tanh %332 : vector<8x128xf32>
    %cst_103 = arith.constant 1.000000e+00 : f32
    %334 = vector.broadcast %cst_103 : f32 to vector<8x128xf32>
    %335 = arith.subf %334, %326 : vector<8x128xf32>
    %336 = arith.mulf %335, %333 : vector<8x128xf32>
    %337 = arith.mulf %326, %274 : vector<8x128xf32>
    %338 = arith.addf %336, %337 : vector<8x128xf32>
    %339 = arith.truncf %338 : vector<8x128xf32> to vector<8x128xbf16>
    %c0_104 = arith.constant 0 : index
    %c128_105 = arith.constant 128 : index
    %340 = vector.load %arg17[%c0_104, %c128_105] : memref<8x256xbf16, #tpu.memory_space<vmem>>, vector<8x128xbf16>
    tpu.vector_store %arg17[%c0_104, %c128_105], %339 {strides = array<i32>} : memref<8x256xbf16, #tpu.memory_space<vmem>>, vector<8x128xbf16>,
    %c5_i32 = arith.constant 5 : i32
    %341 = arith.index_cast %c5_i32 : i32 to index
    %c0_106 = arith.constant 0 : index
    %c0_107 = arith.constant 0 : index
    %342 = vector.load %arg1[%341, %c0_106, %c0_107] : memref<8x8x384xf32, #tpu.memory_space<vmem>>, vector<1x8x384xf32>
    %343 = vector.shape_cast %342 : vector<1x8x384xf32> to vector<8x384xf32>
    %c0_108 = arith.constant 0 : index
    %c0_109 = arith.constant 0 : index
    %344 = vector.load %arg17[%c0_108, %c0_109] : memref<8x256xbf16, #tpu.memory_space<vmem>>, vector<8x128xbf16>
    %cst_110 = arith.constant dense<0.000000e+00> : vector<8x384xf32>
    %345 = tpu.matmul %344, %0, %cst_110 {dimension_numbers = #tpu.dot_dimension_numbers<[1], [0], [0], [1], [0, 0, 1, 1], [], []>} : vector<8x128xbf16>, vector<128x384xbf16>, vector<8x384xf32> -> vector<8x384xf32>
    %346 = vector.extract_strided_slice %343 {offsets = [0, 0], sizes = [8, 128], strides = [1, 1]} : vector<8x384xf32> to vector<8x128xf32>
    %347 = vector.extract_strided_slice %345 {offsets = [0, 0], sizes = [8, 128], strides = [1, 1]} : vector<8x384xf32> to vector<8x128xf32>
    %348 = arith.addf %346, %347 : vector<8x128xf32>
    %349 = arith.negf %348 : vector<8x128xf32>
    %350 = math.exp %349 : vector<8x128xf32>
    %cst_111 = arith.constant 1.000000e+00 : f32
    %351 = vector.broadcast %cst_111 : f32 to vector<8x128xf32>
    %352 = arith.addf %351, %350 : vector<8x128xf32>
    %353 = arith.divf %351, %352 : vector<8x128xf32>
    %354 = vector.extract_strided_slice %343 {offsets = [0, 128], sizes = [8, 128], strides = [1, 1]} : vector<8x384xf32> to vector<8x128xf32>
    %355 = vector.extract_strided_slice %345 {offsets = [0, 128], sizes = [8, 128], strides = [1, 1]} : vector<8x384xf32> to vector<8x128xf32>
    %356 = arith.addf %354, %355 : vector<8x128xf32>
    %357 = arith.negf %356 : vector<8x128xf32>
    %358 = math.exp %357 : vector<8x128xf32>
    %cst_112 = arith.constant 1.000000e+00 : f32
    %359 = vector.broadcast %cst_112 : f32 to vector<8x128xf32>
    %360 = arith.addf %359, %358 : vector<8x128xf32>
    %361 = arith.divf %359, %360 : vector<8x128xf32>
    %362 = vector.extract_strided_slice %343 {offsets = [0, 256], sizes = [8, 128], strides = [1, 1]} : vector<8x384xf32> to vector<8x128xf32>
    %363 = vector.extract_strided_slice %345 {offsets = [0, 256], sizes = [8, 128], strides = [1, 1]} : vector<8x384xf32> to vector<8x128xf32>
    %364 = arith.addf %363, %4 : vector<8x128xf32>
    %365 = arith.mulf %353, %364 : vector<8x128xf32>
    %366 = arith.addf %362, %365 : vector<8x128xf32>
    %367 = math.tanh %366 : vector<8x128xf32>
    %cst_113 = arith.constant 1.000000e+00 : f32
    %368 = vector.broadcast %cst_113 : f32 to vector<8x128xf32>
    %369 = arith.subf %368, %361 : vector<8x128xf32>
    %370 = arith.mulf %369, %367 : vector<8x128xf32>
    %371 = arith.mulf %361, %308 : vector<8x128xf32>
    %372 = arith.addf %370, %371 : vector<8x128xf32>
    %373 = arith.truncf %372 : vector<8x128xf32> to vector<8x128xbf16>
    %c0_114 = arith.constant 0 : index
    %c0_115 = arith.constant 0 : index
    %374 = vector.load %arg17[%c0_114, %c0_115] : memref<8x256xbf16, #tpu.memory_space<vmem>>, vector<8x128xbf16>
    tpu.vector_store %arg17[%c0_114, %c0_115], %373 {strides = array<i32>} : memref<8x256xbf16, #tpu.memory_space<vmem>>, vector<8x128xbf16>,
    %c0_116 = arith.constant 0 : index
    %c0_117 = arith.constant 0 : index
    %375 = vector.load %arg17[%c0_116, %c0_117] : memref<8x256xbf16, #tpu.memory_space<vmem>>, vector<8x256xbf16>
    %cst_118 = arith.constant dense<0.000000e+00> : vector<8x512xf32>
    %376 = tpu.matmul %375, %1, %cst_118 {dimension_numbers = #tpu.dot_dimension_numbers<[1], [0], [0], [1], [0, 0, 1, 1], [], []>} : vector<8x256xbf16>, vector<256x512xbf16>, vector<8x512xf32> -> vector<8x512xf32>
    %377 = vector.extract_strided_slice %376 {offsets = [0, 0], sizes = [8, 128], strides = [1, 1]} : vector<8x512xf32> to vector<8x128xf32>
    %378 = arith.addf %377, %7 : vector<8x128xf32>
    %379 = arith.negf %378 : vector<8x128xf32>
    %380 = math.exp %379 : vector<8x128xf32>
    %cst_119 = arith.constant 1.000000e+00 : f32
    %381 = vector.broadcast %cst_119 : f32 to vector<8x128xf32>
    %382 = arith.addf %381, %380 : vector<8x128xf32>
    %383 = arith.divf %381, %382 : vector<8x128xf32>
    %384 = vector.extract_strided_slice %376 {offsets = [0, 128], sizes = [8, 128], strides = [1, 1]} : vector<8x512xf32> to vector<8x128xf32>
    %385 = arith.addf %384, %10 : vector<8x128xf32>
    %386 = arith.negf %385 : vector<8x128xf32>
    %387 = math.exp %386 : vector<8x128xf32>
    %cst_120 = arith.constant 1.000000e+00 : f32
    %388 = vector.broadcast %cst_120 : f32 to vector<8x128xf32>
    %389 = arith.addf %388, %387 : vector<8x128xf32>
    %390 = arith.divf %388, %389 : vector<8x128xf32>
    %391 = vector.extract_strided_slice %376 {offsets = [0, 256], sizes = [8, 128], strides = [1, 1]} : vector<8x512xf32> to vector<8x128xf32>
    %392 = arith.addf %391, %13 : vector<8x128xf32>
    %393 = vector.extract_strided_slice %376 {offsets = [0, 384], sizes = [8, 128], strides = [1, 1]} : vector<8x512xf32> to vector<8x128xf32>
    %394 = arith.addf %393, %16 : vector<8x128xf32>
    %395 = arith.mulf %383, %394 : vector<8x128xf32>
    %396 = arith.addf %392, %395 : vector<8x128xf32>
    %397 = math.tanh %396 : vector<8x128xf32>
    %cst_121 = arith.constant 1.000000e+00 : f32
    %398 = vector.broadcast %cst_121 : f32 to vector<8x128xf32>
    %399 = arith.subf %398, %390 : vector<8x128xf32>
    %400 = arith.mulf %399, %397 : vector<8x128xf32>
    %401 = arith.mulf %390, %338 : vector<8x128xf32>
    %402 = arith.addf %400, %401 : vector<8x128xf32>
    %403 = arith.truncf %402 : vector<8x128xf32> to vector<8x128xbf16>
    %c0_122 = arith.constant 0 : index
    %c128_123 = arith.constant 128 : index
    %404 = vector.load %arg17[%c0_122, %c128_123] : memref<8x256xbf16, #tpu.memory_space<vmem>>, vector<8x128xbf16>
    tpu.vector_store %arg17[%c0_122, %c128_123], %403 {strides = array<i32>} : memref<8x256xbf16, #tpu.memory_space<vmem>>, vector<8x128xbf16>,
    %c6_i32 = arith.constant 6 : i32
    %405 = arith.index_cast %c6_i32 : i32 to index
    %c0_124 = arith.constant 0 : index
    %c0_125 = arith.constant 0 : index
    %406 = vector.load %arg1[%405, %c0_124, %c0_125] : memref<8x8x384xf32, #tpu.memory_space<vmem>>, vector<1x8x384xf32>
    %407 = vector.shape_cast %406 : vector<1x8x384xf32> to vector<8x384xf32>
    %c0_126 = arith.constant 0 : index
    %c0_127 = arith.constant 0 : index
    %408 = vector.load %arg17[%c0_126, %c0_127] : memref<8x256xbf16, #tpu.memory_space<vmem>>, vector<8x128xbf16>
    %cst_128 = arith.constant dense<0.000000e+00> : vector<8x384xf32>
    %409 = tpu.matmul %408, %0, %cst_128 {dimension_numbers = #tpu.dot_dimension_numbers<[1], [0], [0], [1], [0, 0, 1, 1], [], []>} : vector<8x128xbf16>, vector<128x384xbf16>, vector<8x384xf32> -> vector<8x384xf32>
    %410 = vector.extract_strided_slice %407 {offsets = [0, 0], sizes = [8, 128], strides = [1, 1]} : vector<8x384xf32> to vector<8x128xf32>
    %411 = vector.extract_strided_slice %409 {offsets = [0, 0], sizes = [8, 128], strides = [1, 1]} : vector<8x384xf32> to vector<8x128xf32>
    %412 = arith.addf %410, %411 : vector<8x128xf32>
    %413 = arith.negf %412 : vector<8x128xf32>
    %414 = math.exp %413 : vector<8x128xf32>
    %cst_129 = arith.constant 1.000000e+00 : f32
    %415 = vector.broadcast %cst_129 : f32 to vector<8x128xf32>
    %416 = arith.addf %415, %414 : vector<8x128xf32>
    %417 = arith.divf %415, %416 : vector<8x128xf32>
    %418 = vector.extract_strided_slice %407 {offsets = [0, 128], sizes = [8, 128], strides = [1, 1]} : vector<8x384xf32> to vector<8x128xf32>
    %419 = vector.extract_strided_slice %409 {offsets = [0, 128], sizes = [8, 128], strides = [1, 1]} : vector<8x384xf32> to vector<8x128xf32>
    %420 = arith.addf %418, %419 : vector<8x128xf32>
    %421 = arith.negf %420 : vector<8x128xf32>
    %422 = math.exp %421 : vector<8x128xf32>
    %cst_130 = arith.constant 1.000000e+00 : f32
    %423 = vector.broadcast %cst_130 : f32 to vector<8x128xf32>
    %424 = arith.addf %423, %422 : vector<8x128xf32>
    %425 = arith.divf %423, %424 : vector<8x128xf32>
    %426 = vector.extract_strided_slice %407 {offsets = [0, 256], sizes = [8, 128], strides = [1, 1]} : vector<8x384xf32> to vector<8x128xf32>
    %427 = vector.extract_strided_slice %409 {offsets = [0, 256], sizes = [8, 128], strides = [1, 1]} : vector<8x384xf32> to vector<8x128xf32>
    %428 = arith.addf %427, %4 : vector<8x128xf32>
    %429 = arith.mulf %417, %428 : vector<8x128xf32>
    %430 = arith.addf %426, %429 : vector<8x128xf32>
    %431 = math.tanh %430 : vector<8x128xf32>
    %cst_131 = arith.constant 1.000000e+00 : f32
    %432 = vector.broadcast %cst_131 : f32 to vector<8x128xf32>
    %433 = arith.subf %432, %425 : vector<8x128xf32>
    %434 = arith.mulf %433, %431 : vector<8x128xf32>
    %435 = arith.mulf %425, %372 : vector<8x128xf32>
    %436 = arith.addf %434, %435 : vector<8x128xf32>
    %437 = arith.truncf %436 : vector<8x128xf32> to vector<8x128xbf16>
    %c0_132 = arith.constant 0 : index
    %c0_133 = arith.constant 0 : index
    %438 = vector.load %arg17[%c0_132, %c0_133] : memref<8x256xbf16, #tpu.memory_space<vmem>>, vector<8x128xbf16>
    tpu.vector_store %arg17[%c0_132, %c0_133], %437 {strides = array<i32>} : memref<8x256xbf16, #tpu.memory_space<vmem>>, vector<8x128xbf16>,
    %c0_134 = arith.constant 0 : index
    %c0_135 = arith.constant 0 : index
    %439 = vector.load %arg17[%c0_134, %c0_135] : memref<8x256xbf16, #tpu.memory_space<vmem>>, vector<8x256xbf16>
    %cst_136 = arith.constant dense<0.000000e+00> : vector<8x512xf32>
    %440 = tpu.matmul %439, %1, %cst_136 {dimension_numbers = #tpu.dot_dimension_numbers<[1], [0], [0], [1], [0, 0, 1, 1], [], []>} : vector<8x256xbf16>, vector<256x512xbf16>, vector<8x512xf32> -> vector<8x512xf32>
    %441 = vector.extract_strided_slice %440 {offsets = [0, 0], sizes = [8, 128], strides = [1, 1]} : vector<8x512xf32> to vector<8x128xf32>
    %442 = arith.addf %441, %7 : vector<8x128xf32>
    %443 = arith.negf %442 : vector<8x128xf32>
    %444 = math.exp %443 : vector<8x128xf32>
    %cst_137 = arith.constant 1.000000e+00 : f32
    %445 = vector.broadcast %cst_137 : f32 to vector<8x128xf32>
    %446 = arith.addf %445, %444 : vector<8x128xf32>
    %447 = arith.divf %445, %446 : vector<8x128xf32>
    %448 = vector.extract_strided_slice %440 {offsets = [0, 128], sizes = [8, 128], strides = [1, 1]} : vector<8x512xf32> to vector<8x128xf32>
    %449 = arith.addf %448, %10 : vector<8x128xf32>
    %450 = arith.negf %449 : vector<8x128xf32>
    %451 = math.exp %450 : vector<8x128xf32>
    %cst_138 = arith.constant 1.000000e+00 : f32
    %452 = vector.broadcast %cst_138 : f32 to vector<8x128xf32>
    %453 = arith.addf %452, %451 : vector<8x128xf32>
    %454 = arith.divf %452, %453 : vector<8x128xf32>
    %455 = vector.extract_strided_slice %440 {offsets = [0, 256], sizes = [8, 128], strides = [1, 1]} : vector<8x512xf32> to vector<8x128xf32>
    %456 = arith.addf %455, %13 : vector<8x128xf32>
    %457 = vector.extract_strided_slice %440 {offsets = [0, 384], sizes = [8, 128], strides = [1, 1]} : vector<8x512xf32> to vector<8x128xf32>
    %458 = arith.addf %457, %16 : vector<8x128xf32>
    %459 = arith.mulf %447, %458 : vector<8x128xf32>
    %460 = arith.addf %456, %459 : vector<8x128xf32>
    %461 = math.tanh %460 : vector<8x128xf32>
    %cst_139 = arith.constant 1.000000e+00 : f32
    %462 = vector.broadcast %cst_139 : f32 to vector<8x128xf32>
    %463 = arith.subf %462, %454 : vector<8x128xf32>
    %464 = arith.mulf %463, %461 : vector<8x128xf32>
    %465 = arith.mulf %454, %402 : vector<8x128xf32>
    %466 = arith.addf %464, %465 : vector<8x128xf32>
    %467 = arith.truncf %466 : vector<8x128xf32> to vector<8x128xbf16>
    %c0_140 = arith.constant 0 : index
    %c128_141 = arith.constant 128 : index
    %468 = vector.load %arg17[%c0_140, %c128_141] : memref<8x256xbf16, #tpu.memory_space<vmem>>, vector<8x128xbf16>
    tpu.vector_store %arg17[%c0_140, %c128_141], %467 {strides = array<i32>} : memref<8x256xbf16, #tpu.memory_space<vmem>>, vector<8x128xbf16>,
    %c7_i32 = arith.constant 7 : i32
    %469 = arith.index_cast %c7_i32 : i32 to index
    %c0_142 = arith.constant 0 : index
    %c0_143 = arith.constant 0 : index
    %470 = vector.load %arg1[%469, %c0_142, %c0_143] : memref<8x8x384xf32, #tpu.memory_space<vmem>>, vector<1x8x384xf32>
    %471 = vector.shape_cast %470 : vector<1x8x384xf32> to vector<8x384xf32>
    %c0_144 = arith.constant 0 : index
    %c0_145 = arith.constant 0 : index
    %472 = vector.load %arg17[%c0_144, %c0_145] : memref<8x256xbf16, #tpu.memory_space<vmem>>, vector<8x128xbf16>
    %cst_146 = arith.constant dense<0.000000e+00> : vector<8x384xf32>
    %473 = tpu.matmul %472, %0, %cst_146 {dimension_numbers = #tpu.dot_dimension_numbers<[1], [0], [0], [1], [0, 0, 1, 1], [], []>} : vector<8x128xbf16>, vector<128x384xbf16>, vector<8x384xf32> -> vector<8x384xf32>
    %474 = vector.extract_strided_slice %471 {offsets = [0, 0], sizes = [8, 128], strides = [1, 1]} : vector<8x384xf32> to vector<8x128xf32>
    %475 = vector.extract_strided_slice %473 {offsets = [0, 0], sizes = [8, 128], strides = [1, 1]} : vector<8x384xf32> to vector<8x128xf32>
    %476 = arith.addf %474, %475 : vector<8x128xf32>
    %477 = arith.negf %476 : vector<8x128xf32>
    %478 = math.exp %477 : vector<8x128xf32>
    %cst_147 = arith.constant 1.000000e+00 : f32
    %479 = vector.broadcast %cst_147 : f32 to vector<8x128xf32>
    %480 = arith.addf %479, %478 : vector<8x128xf32>
    %481 = arith.divf %479, %480 : vector<8x128xf32>
    %482 = vector.extract_strided_slice %471 {offsets = [0, 128], sizes = [8, 128], strides = [1, 1]} : vector<8x384xf32> to vector<8x128xf32>
    %483 = vector.extract_strided_slice %473 {offsets = [0, 128], sizes = [8, 128], strides = [1, 1]} : vector<8x384xf32> to vector<8x128xf32>
    %484 = arith.addf %482, %483 : vector<8x128xf32>
    %485 = arith.negf %484 : vector<8x128xf32>
    %486 = math.exp %485 : vector<8x128xf32>
    %cst_148 = arith.constant 1.000000e+00 : f32
    %487 = vector.broadcast %cst_148 : f32 to vector<8x128xf32>
    %488 = arith.addf %487, %486 : vector<8x128xf32>
    %489 = arith.divf %487, %488 : vector<8x128xf32>
    %490 = vector.extract_strided_slice %471 {offsets = [0, 256], sizes = [8, 128], strides = [1, 1]} : vector<8x384xf32> to vector<8x128xf32>
    %491 = vector.extract_strided_slice %473 {offsets = [0, 256], sizes = [8, 128], strides = [1, 1]} : vector<8x384xf32> to vector<8x128xf32>
    %492 = arith.addf %491, %4 : vector<8x128xf32>
    %493 = arith.mulf %481, %492 : vector<8x128xf32>
    %494 = arith.addf %490, %493 : vector<8x128xf32>
    %495 = math.tanh %494 : vector<8x128xf32>
    %cst_149 = arith.constant 1.000000e+00 : f32
    %496 = vector.broadcast %cst_149 : f32 to vector<8x128xf32>
    %497 = arith.subf %496, %489 : vector<8x128xf32>
    %498 = arith.mulf %497, %495 : vector<8x128xf32>
    %499 = arith.mulf %489, %436 : vector<8x128xf32>
    %500 = arith.addf %498, %499 : vector<8x128xf32>
    %501 = arith.truncf %500 : vector<8x128xf32> to vector<8x128xbf16>
    %c0_150 = arith.constant 0 : index
    %c0_151 = arith.constant 0 : index
    %502 = vector.load %arg17[%c0_150, %c0_151] : memref<8x256xbf16, #tpu.memory_space<vmem>>, vector<8x128xbf16>
    tpu.vector_store %arg17[%c0_150, %c0_151], %501 {strides = array<i32>} : memref<8x256xbf16, #tpu.memory_space<vmem>>, vector<8x128xbf16>,
    %c0_152 = arith.constant 0 : index
    %c0_153 = arith.constant 0 : index
    %503 = vector.load %arg17[%c0_152, %c0_153] : memref<8x256xbf16, #tpu.memory_space<vmem>>, vector<8x256xbf16>
    %cst_154 = arith.constant dense<0.000000e+00> : vector<8x512xf32>
    %504 = tpu.matmul %503, %1, %cst_154 {dimension_numbers = #tpu.dot_dimension_numbers<[1], [0], [0], [1], [0, 0, 1, 1], [], []>} : vector<8x256xbf16>, vector<256x512xbf16>, vector<8x512xf32> -> vector<8x512xf32>
    %505 = vector.extract_strided_slice %504 {offsets = [0, 0], sizes = [8, 128], strides = [1, 1]} : vector<8x512xf32> to vector<8x128xf32>
    %506 = arith.addf %505, %7 : vector<8x128xf32>
    %507 = arith.negf %506 : vector<8x128xf32>
    %508 = math.exp %507 : vector<8x128xf32>
    %cst_155 = arith.constant 1.000000e+00 : f32
    %509 = vector.broadcast %cst_155 : f32 to vector<8x128xf32>
    %510 = arith.addf %509, %508 : vector<8x128xf32>
    %511 = arith.divf %509, %510 : vector<8x128xf32>
    %512 = vector.extract_strided_slice %504 {offsets = [0, 128], sizes = [8, 128], strides = [1, 1]} : vector<8x512xf32> to vector<8x128xf32>
    %513 = arith.addf %512, %10 : vector<8x128xf32>
    %514 = arith.negf %513 : vector<8x128xf32>
    %515 = math.exp %514 : vector<8x128xf32>
    %cst_156 = arith.constant 1.000000e+00 : f32
    %516 = vector.broadcast %cst_156 : f32 to vector<8x128xf32>
    %517 = arith.addf %516, %515 : vector<8x128xf32>
    %518 = arith.divf %516, %517 : vector<8x128xf32>
    %519 = vector.extract_strided_slice %504 {offsets = [0, 256], sizes = [8, 128], strides = [1, 1]} : vector<8x512xf32> to vector<8x128xf32>
    %520 = arith.addf %519, %13 : vector<8x128xf32>
    %521 = vector.extract_strided_slice %504 {offsets = [0, 384], sizes = [8, 128], strides = [1, 1]} : vector<8x512xf32> to vector<8x128xf32>
    %522 = arith.addf %521, %16 : vector<8x128xf32>
    %523 = arith.mulf %511, %522 : vector<8x128xf32>
    %524 = arith.addf %520, %523 : vector<8x128xf32>
    %525 = math.tanh %524 : vector<8x128xf32>
    %cst_157 = arith.constant 1.000000e+00 : f32
    %526 = vector.broadcast %cst_157 : f32 to vector<8x128xf32>
    %527 = arith.subf %526, %518 : vector<8x128xf32>
    %528 = arith.mulf %527, %525 : vector<8x128xf32>
    %529 = arith.mulf %518, %466 : vector<8x128xf32>
    %530 = arith.addf %528, %529 : vector<8x128xf32>
    %531 = arith.truncf %530 : vector<8x128xf32> to vector<8x128xbf16>
    %c0_158 = arith.constant 0 : index
    %c128_159 = arith.constant 128 : index
    %532 = vector.load %arg17[%c0_158, %c128_159] : memref<8x256xbf16, #tpu.memory_space<vmem>>, vector<8x128xbf16>
    tpu.vector_store %arg17[%c0_158, %c128_159], %531 {strides = array<i32>} : memref<8x256xbf16, #tpu.memory_space<vmem>>, vector<8x128xbf16>,
    %c8_i32 = arith.constant 8 : i32
    %c0_160 = arith.constant 0 : index
    %c128_161 = arith.constant 128 : index
    %533 = vector.load %arg17[%c0_160, %c128_161] : memref<8x256xbf16, #tpu.memory_space<vmem>>, vector<8x128xbf16>
    %c0_162 = arith.constant 0 : index
    %c0_163 = arith.constant 0 : index
    %534 = vector.load %arg10[%c0_162, %c0_163] : memref<128x256xbf16, #tpu.memory_space<vmem>>, vector<128x256xbf16>
    %cst_164 = arith.constant dense<0.000000e+00> : vector<8x256xf32>
    %535 = tpu.matmul %533, %534, %cst_164 {dimension_numbers = #tpu.dot_dimension_numbers<[1], [0], [0], [1], [0, 0, 1, 1], [], []>} : vector<8x128xbf16>, vector<128x256xbf16>, vector<8x256xf32> -> vector<8x256xf32>
    %c0_165 = arith.constant 0 : index
    %c0_166 = arith.constant 0 : index
    %536 = vector.load %arg2[%c0_165, %c0_166] : memref<8x1xf32, #tpu.memory_space<vmem>>, vector<8x1xf32>
    %c0_167 = arith.constant 0 : index
    %c0_168 = arith.constant 0 : index
    %537 = vector.load %arg11[%c0_167, %c0_168] : memref<1x256xf32, #tpu.memory_space<vmem>>, vector<1x256xf32>
    %538 = vector.broadcast %536 : vector<8x1xf32> to vector<8x256xf32>
    %539 = vector.broadcast %537 : vector<1x256xf32> to vector<8x256xf32>
    %540 = arith.mulf %538, %539 : vector<8x256xf32>
    %541 = arith.addf %535, %540 : vector<8x256xf32>
    %c0_169 = arith.constant 0 : index
    %c0_170 = arith.constant 0 : index
    %542 = vector.load %arg3[%c0_169, %c0_170] : memref<8x1xf32, #tpu.memory_space<vmem>>, vector<8x1xf32>
    %c0_171 = arith.constant 0 : index
    %c0_172 = arith.constant 0 : index
    %543 = vector.load %arg12[%c0_171, %c0_172] : memref<1x256xf32, #tpu.memory_space<vmem>>, vector<1x256xf32>
    %544 = vector.broadcast %542 : vector<8x1xf32> to vector<8x256xf32>
    %545 = vector.broadcast %543 : vector<1x256xf32> to vector<8x256xf32>
    %546 = arith.mulf %544, %545 : vector<8x256xf32>
    %547 = arith.addf %541, %546 : vector<8x256xf32>
    %c0_173 = arith.constant 0 : index
    %c0_174 = arith.constant 0 : index
    %548 = vector.load %arg13[%c0_173, %c0_174] : memref<1x256xf32, #tpu.memory_space<vmem>>, vector<1x256xf32>
    %549 = vector.broadcast %548 : vector<1x256xf32> to vector<8x256xf32>
    %550 = arith.addf %547, %549 : vector<8x256xf32>
    %cst_175 = arith.constant 0.000000e+00 : f32
    %551 = vector.broadcast %cst_175 : f32 to vector<8x256xf32>
    %552 = arith.maximumf %550, %551 : vector<8x256xf32>
    %c0_176 = arith.constant 0 : index
    %c0_177 = arith.constant 0 : index
    %553 = vector.load %arg14[%c0_176, %c0_177] : memref<1x256xf32, #tpu.memory_space<vmem>>, vector<1x256xf32>
    %554 = vector.broadcast %553 : vector<1x256xf32> to vector<8x256xf32>
    %555 = arith.mulf %552, %554 : vector<8x256xf32>
    %cst_178 = arith.constant dense<0.000000e+00> : vector<8xf32>
    %556 = vector.multi_reduction <add>, %555, %cst_178 [1] : vector<8x256xf32> to vector<8xf32>
    %557 = vector.shape_cast %556 : vector<8xf32> to vector<8x1xf32>
    %c0_179 = arith.constant 0 : index
    %c0_180 = arith.constant 0 : index
    %558 = vector.load %arg15[%c0_179, %c0_180] : memref<1x1xf32, #tpu.memory_space<vmem>>, vector<1x1xf32>
    %559 = vector.broadcast %558 : vector<1x1xf32> to vector<8x1xf32>
    %560 = arith.addf %557, %559 : vector<8x1xf32>
    %c0_181 = arith.constant 0 : index
    %c0_182 = arith.constant 0 : index
    %561 = vector.load %arg16[%c0_181, %c0_182] : memref<8x1xf32, #tpu.memory_space<vmem>>, vector<8x1xf32>
    tpu.vector_store %arg16[%c0_181, %c0_182], %560 {strides = array<i32>} : memref<8x1xf32, #tpu.memory_space<vmem>>, vector<8x1xf32>,
    return
  }
  func.func @transform_0(%arg0: i32) -> (i32, i32, i32) {
    %c0_i32 = arith.constant 0 : i32
    %c0_i32_0 = arith.constant 0 : i32
    %c0_i32_1 = arith.constant 0 : i32
    return %c0_i32, %arg0, %c0_i32_0 : i32, i32, i32
  }
  func.func @transform_1(%arg0: i32) -> (i32, i32) {
    %c0_i32 = arith.constant 0 : i32
    %c0_i32_0 = arith.constant 0 : i32
    return %arg0, %c0_i32 : i32, i32
  }
  func.func @transform_2(%arg0: i32) -> (i32, i32) {
    %c0_i32 = arith.constant 0 : i32
    %c0_i32_0 = arith.constant 0 : i32
    return %arg0, %c0_i32 : i32, i32
  }
  func.func @transform_3(%arg0: i32) -> (i32, i32) {
    %c0_i32 = arith.constant 0 : i32
    %c0_i32_0 = arith.constant 0 : i32
    %c0_i32_1 = arith.constant 0 : i32
    return %c0_i32, %c0_i32_0 : i32, i32
  }
  func.func @transform_4(%arg0: i32) -> (i32, i32) {
    %c0_i32 = arith.constant 0 : i32
    %c0_i32_0 = arith.constant 0 : i32
    %c0_i32_1 = arith.constant 0 : i32
    return %c0_i32, %c0_i32_0 : i32, i32
  }
  func.func @transform_5(%arg0: i32) -> (i32, i32) {
    %c0_i32 = arith.constant 0 : i32
    %c0_i32_0 = arith.constant 0 : i32
    %c0_i32_1 = arith.constant 0 : i32
    return %c0_i32, %c0_i32_0 : i32, i32
  }
  func.func @transform_6(%arg0: i32) -> (i32, i32) {
    %c0_i32 = arith.constant 0 : i32
    %c0_i32_0 = arith.constant 0 : i32
    %c0_i32_1 = arith.constant 0 : i32
    return %c0_i32, %c0_i32_0 : i32, i32
  }
  func.func @transform_7(%arg0: i32) -> (i32, i32) {
    %c0_i32 = arith.constant 0 : i32
    %c0_i32_0 = arith.constant 0 : i32
    %c0_i32_1 = arith.constant 0 : i32
    return %c0_i32, %c0_i32_0 : i32, i32
  }
  func.func @transform_8(%arg0: i32) -> (i32, i32) {
    %c0_i32 = arith.constant 0 : i32
    %c0_i32_0 = arith.constant 0 : i32
    %c0_i32_1 = arith.constant 0 : i32
    return %c0_i32, %c0_i32_0 : i32, i32
  }
  func.func @transform_9(%arg0: i32) -> (i32, i32) {
    %c0_i32 = arith.constant 0 : i32
    %c0_i32_0 = arith.constant 0 : i32
    %c0_i32_1 = arith.constant 0 : i32
    return %c0_i32, %c0_i32_0 : i32, i32
  }
  func.func @transform_10(%arg0: i32) -> (i32, i32) {
    %c0_i32 = arith.constant 0 : i32
    %c0_i32_0 = arith.constant 0 : i32
    %c0_i32_1 = arith.constant 0 : i32
    return %c0_i32, %c0_i32_0 : i32, i32
  }
  func.func @transform_11(%arg0: i32) -> (i32, i32) {
    %c0_i32 = arith.constant 0 : i32
    %c0_i32_0 = arith.constant 0 : i32
    %c0_i32_1 = arith.constant 0 : i32
    return %c0_i32, %c0_i32_0 : i32, i32
  }
  func.func @transform_12(%arg0: i32) -> (i32, i32) {
    %c0_i32 = arith.constant 0 : i32
    %c0_i32_0 = arith.constant 0 : i32
    %c0_i32_1 = arith.constant 0 : i32
    return %c0_i32, %c0_i32_0 : i32, i32
  }
  func.func @transform_13(%arg0: i32) -> (i32, i32) {
    %c0_i32 = arith.constant 0 : i32
    %c0_i32_0 = arith.constant 0 : i32
    %c0_i32_1 = arith.constant 0 : i32
    return %c0_i32, %c0_i32_0 : i32, i32
  }
  func.func @transform_14(%arg0: i32) -> (i32, i32) {
    %c0_i32 = arith.constant 0 : i32
    %c0_i32_0 = arith.constant 0 : i32
    %c0_i32_1 = arith.constant 0 : i32
    return %c0_i32, %c0_i32_0 : i32, i32
  }
  func.func @transform_15(%arg0: i32) -> (i32, i32) {
    %c0_i32 = arith.constant 0 : i32
    %c0_i32_0 = arith.constant 0 : i32
    return %arg0, %c0_i32 : i32, i32
  }
}

</mosaic_0001>

<llo_original>
// kernel: tpu_custom_call.1
$region0: #{tpu_custom_call.1}
  #allocation0 [shape = 'u32[]', space=smem, size = 0x4, offset = 0x4, fixed_abs, tag = 'smem constant byte address 0x4 - core index']
  #allocation1 [shape = 'u32[144,128]{1,0:T(1,128)}', space=vmem, size = 0x12000, scoped, tag = 'internal scratch']
  #allocation2 [shape = 'bf16[8,256]{1,0:T(8,128)(2,1)}', space=vmem, size = 0x1000, scoped, tag = 'scratch operand']
  #allocation3 [shape = 'f32[1,1]{1,0:T(1,128)S(1)}', space=vmem, size = 0x200, scoped, tag = 'scoped memory for tpu_custom_call.1']
  %s0 = inlined_call_operand.hbm [shape: f32[8,8,384], index: 0, kind: input, shape index: {}]
  %s1 = inlined_call_operand.vmem [shape: f32[8,1], index: 1, kind: input, shape index: {}]
  %s2 = inlined_call_operand.vmem [shape: f32[8,1], index: 2, kind: input, shape index: {}]
  %s3 = inlined_call_operand.hbm [shape: bf16[128,384], index: 3, kind: input, shape index: {}]
  %s4 = inlined_call_operand.vmem [shape: f32[1,128], index: 4, kind: input, shape index: {}]
  %s5 = inlined_call_operand.hbm [shape: bf16[256,512], index: 5, kind: input, shape index: {}]
  %s6 = inlined_call_operand.vmem [shape: f32[1,256], index: 6, kind: input, shape index: {}]
  %s7 = inlined_call_operand.vmem [shape: f32[1,128], index: 7, kind: input, shape index: {}]
  %s8 = inlined_call_operand.vmem [shape: f32[1,128], index: 8, kind: input, shape index: {}]
  %s9 = inlined_call_operand.hbm [shape: bf16[128,256], index: 9, kind: input, shape index: {}]
  %s10 = inlined_call_operand.vmem [shape: f32[1,256], index: 10, kind: input, shape index: {}]
  %s11 = inlined_call_operand.vmem [shape: f32[1,256], index: 11, kind: input, shape index: {}]
  %s12 = inlined_call_operand.vmem [shape: f32[1,256], index: 12, kind: input, shape index: {}]
  %s13 = inlined_call_operand.vmem [shape: f32[1,256], index: 13, kind: input, shape index: {}]
  %s14 = inlined_call_operand.<no memory space> [shape: f32[1,1], index: 14, kind: input, shape index: {}]
  %s15 = inlined_call_operand.vmem [shape: f32[8,1], index: 15, kind: output, shape index: {}]
  %s16 = sld [smem:[#allocation0]]
  $region86: #{tpu_custom_call.1} parent=0
    _
  %s18 = ssub.s32 1, %s16
  %s19 = scalar_select 0, %s18, %s16
  %v20 = vstv %s14
  %21 = vst [vmem:[#allocation3] sm:$0x1] %v20
  $region1: #{tpu_custom_call.1} parent=0
    #allocation4 [shape = 'u8[98304]{0}', space=vmem, size = 0x18000, scoped, tag = 'input window, operand 0, single buffered']
    #allocation5 [shape = 's32[1]{0}', space=sflag, size = 0x4, scoped, tag = 'scoped memory for tpu_custom_call.1']
    #allocation6 [shape = 'u8[98304]{0}', space=vmem, size = 0x18000, scoped, tag = 'input window, operand 3, single buffered']
    #allocation7 [shape = 's32[1]{0}', space=sflag, size = 0x4, scoped, tag = 'scoped memory for tpu_custom_call.1']
    #allocation8 [shape = 'u8[262144]{0}', space=vmem, size = 0x40000, scoped, tag = 'input window, operand 5, single buffered']
    #allocation9 [shape = 'u8[65536]{0}', space=vmem, size = 0x10000, scoped, tag = 'input window, operand 9, single buffered']
    #allocation10 [shape = 's32[1]{0}', space=sflag, size = 0x4, scoped, tag = 'scoped memory for tpu_custom_call.1']
    %22 = vsyncpa [#allocation5], 0
    %23 = vsyncpa [#allocation7], 0
    %24 = vsyncpa [#allocation10], 0
    // Predicated region
    $region2: #{tpu_custom_call.1} parent=1 // pred_check
      _
    $region3: #{tpu_custom_call.1} parent=1 // pred_check_branch
      %26 = sbr.rel (0) target = $region5
    $region4: #{tpu_custom_call.1} parent=1 // pred_region
      %s28 = ssub.s32 3072, 3072
      %29 = vsyncadd [#allocation5], %s28
      %s30 = sshll.u32 [#allocation4], 4
      %s31 = int_to_ptr.vmem [resolvable:$true] %s30
      %36 = dma.hbm_to_vmem [thread:$0]  %s0, 3072, %s31, [#allocation5], 384, 384, 24
    $region5: #{tpu_custom_call.1} parent=1 // pred_fallthru
      _
    // Predicated region
    $region6: #{tpu_custom_call.1} parent=1 // pred_check
      _
    $region7: #{tpu_custom_call.1} parent=1 // pred_check_branch
      %38 = sbr.rel (0) target = $region9
    $region8: #{tpu_custom_call.1} parent=1 // pred_region
      _
    $region9: #{tpu_custom_call.1} parent=1 // pred_fallthru
      _
    // Predicated region
    $region10: #{tpu_custom_call.1} parent=1 // pred_check
      _
    $region11: #{tpu_custom_call.1} parent=1 // pred_check_branch
      %40 = sbr.rel (0) target = $region13
    $region12: #{tpu_custom_call.1} parent=1 // pred_region
      _
    $region13: #{tpu_custom_call.1} parent=1 // pred_fallthru
      _
    // Predicated region
    $region14: #{tpu_custom_call.1} parent=1 // pred_check
      _
    $region15: #{tpu_custom_call.1} parent=1 // pred_check_branch
      %42 = sbr.rel (0) target = $region17
    $region16: #{tpu_custom_call.1} parent=1 // pred_region
      %s44 = ssub.s32 3072, 3072
      %45 = vsyncadd [#allocation7], %s44
      %s46 = sshll.u32 [#allocation6], 4
      %s47 = int_to_ptr.vmem [resolvable:$true] %s46
      %52 = dma.hbm_to_vmem [thread:$0]  %s3, 3072, %s47, [#allocation7], 192, 192, 12
    $region17: #{tpu_custom_call.1} parent=1 // pred_fallthru
      _
    // Predicated region
    $region18: #{tpu_custom_call.1} parent=1 // pred_check
      _
    $region19: #{tpu_custom_call.1} parent=1 // pred_check_branch
      %54 = sbr.rel (0) target = $region21
    $region20: #{tpu_custom_call.1} parent=1 // pred_region
      _
    $region21: #{tpu_custom_call.1} parent=1 // pred_fallthru
      _
    // Predicated region
    $region22: #{tpu_custom_call.1} parent=1 // pred_check
      _
    $region23: #{tpu_custom_call.1} parent=1 // pred_check_branch
      %56 = sbr.rel (0) target = $region25
    $region24: #{tpu_custom_call.1} parent=1 // pred_region
      %s58 = ssub.s32 8192, 8192
      %59 = vsyncadd [#allocation7], %s58
      %s60 = sshll.u32 [#allocation8], 4
      %s61 = int_to_ptr.vmem [resolvable:$true] %s60
      %66 = dma.hbm_to_vmem [thread:$0]  %s5, 8192, %s61, [#allocation7], 256, 256, 16
    $region25: #{tpu_custom_call.1} parent=1 // pred_fallthru
      _
    // Predicated region
    $region26: #{tpu_custom_call.1} parent=1 // pred_check
      _
    $region27: #{tpu_custom_call.1} parent=1 // pred_check_branch
      %68 = sbr.rel (0) target = $region29
    $region28: #{tpu_custom_call.1} parent=1 // pred_region
      _
    $region29: #{tpu_custom_call.1} parent=1 // pred_fallthru
      _
    // Predicated region
    $region30: #{tpu_custom_call.1} parent=1 // pred_check
      _
    $region31: #{tpu_custom_call.1} parent=1 // pred_check_branch
      %70 = sbr.rel (0) target = $region33
    $region32: #{tpu_custom_call.1} parent=1 // pred_region
      _
    $region33: #{tpu_custom_call.1} parent=1 // pred_fallthru
      _
    // Predicated region
    $region34: #{tpu_custom_call.1} parent=1 // pred_check
      _
    $region35: #{tpu_custom_call.1} parent=1 // pred_check_branch
      %72 = sbr.rel (0) target = $region37
    $region36: #{tpu_custom_call.1} parent=1 // pred_region
      _
    $region37: #{tpu_custom_call.1} parent=1 // pred_fallthru
      _
    // Predicated region
    $region38: #{tpu_custom_call.1} parent=1 // pred_check
      _
    $region39: #{tpu_custom_call.1} parent=1 // pred_check_branch
      %74 = sbr.rel (0) target = $region41
    $region40: #{tpu_custom_call.1} parent=1 // pred_region
      %s76 = ssub.s32 2048, 2048
      %77 = vsyncadd [#allocation10], %s76
      %s78 = sshll.u32 [#allocation9], 4
      %s79 = int_to_ptr.vmem [resolvable:$true] %s78
      %84 = dma.hbm_to_vmem [thread:$0]  %s9, 2048, %s79, [#allocation10], 128, 128, 8
    $region41: #{tpu_custom_call.1} parent=1 // pred_fallthru
      _
    // Predicated region
    $region42: #{tpu_custom_call.1} parent=1 // pred_check
      _
    $region43: #{tpu_custom_call.1} parent=1 // pred_check_branch
      %86 = sbr.rel (0) target = $region45
    $region44: #{tpu_custom_call.1} parent=1 // pred_region
      _
    $region45: #{tpu_custom_call.1} parent=1 // pred_fallthru
      _
    // Predicated region
    $region46: #{tpu_custom_call.1} parent=1 // pred_check
      _
    $region47: #{tpu_custom_call.1} parent=1 // pred_check_branch
      %88 = sbr.rel (0) target = $region49
    $region48: #{tpu_custom_call.1} parent=1 // pred_region
      _
    $region49: #{tpu_custom_call.1} parent=1 // pred_fallthru
      _
    // Predicated region
    $region50: #{tpu_custom_call.1} parent=1 // pred_check
      _
    $region51: #{tpu_custom_call.1} parent=1 // pred_check_branch
      %90 = sbr.rel (0) target = $region53
    $region52: #{tpu_custom_call.1} parent=1 // pred_region
      _
    $region53: #{tpu_custom_call.1} parent=1 // pred_fallthru
      _
    // Predicated region
    $region54: #{tpu_custom_call.1} parent=1 // pred_check
      _
    $region55: #{tpu_custom_call.1} parent=1 // pred_check_branch
      %92 = sbr.rel (0) target = $region57
    $region56: #{tpu_custom_call.1} parent=1 // pred_region
      _
    $region57: #{tpu_custom_call.1} parent=1 // pred_fallthru
      _
    // Predicated region
    $region58: #{tpu_custom_call.1} parent=1 // pred_check
      _
    $region59: #{tpu_custom_call.1} parent=1 // pred_check_branch
      %94 = sbr.rel (0) target = $region61
    $region60: #{tpu_custom_call.1} parent=1 // pred_region
      _
    $region61: #{tpu_custom_call.1} parent=1 // pred_fallthru
      _
    // Predicated region
    $region62: #{tpu_custom_call.1} parent=1 // pred_check
      _
    $region63: #{tpu_custom_call.1} parent=1 // pred_check_branch
      %96 = sbr.rel (0) target = $region65
    $region64: #{tpu_custom_call.1} parent=1 // pred_region
      %97 = dma.done [#allocation5], 3072
    $region65: #{tpu_custom_call.1} parent=1 // pred_fallthru
      _
    // Predicated region
    $region66: #{tpu_custom_call.1} parent=1 // pred_check
      _
    $region67: #{tpu_custom_call.1} parent=1 // pred_check_branch
      %99 = sbr.rel (0) target = $region69
    $region68: #{tpu_custom_call.1} parent=1 // pred_region
      %100 = dma.done [#allocation7], 3072
    $region69: #{tpu_custom_call.1} parent=1 // pred_fallthru
      _
    // Predicated region
    $region70: #{tpu_custom_call.1} parent=1 // pred_check
      _
    $region71: #{tpu_custom_call.1} parent=1 // pred_check_branch
      %102 = sbr.rel (0) target = $region73
    $region72: #{tpu_custom_call.1} parent=1 // pred_region
      %103 = dma.done [#allocation7], 8192
    $region73: #{tpu_custom_call.1} parent=1 // pred_fallthru
      _
    // Predicated region
    $region74: #{tpu_custom_call.1} parent=1 // pred_check
      _
    $region75: #{tpu_custom_call.1} parent=1 // pred_check_branch
      %105 = sbr.rel (0) target = $region77
    $region76: #{tpu_custom_call.1} parent=1 // pred_region
      %106 = dma.done [#allocation10], 2048
    $region77: #{tpu_custom_call.1} parent=1 // pred_fallthru
      _
    %v108 = vld [vmem:[#allocation6] sm:$0xff]
    %v109 = vld [vmem:[#allocation6 + $0x8] sm:$0xf]
    %v110 = vld [vmem:[#allocation6 + $0xc] sm:$0xff]
    %v111 = vld [vmem:[#allocation6 + $0x14] sm:$0xf]
    %v112 = vld [vmem:[#allocation6 + $0x18] sm:$0xff]
    %v113 = vld [vmem:[#allocation6 + $0x20] sm:$0xf]
    %v114 = vld [vmem:[#allocation6 + $0x24] sm:$0xff]
    %v115 = vld [vmem:[#allocation6 + $0x2c] sm:$0xf]
    %v116 = vld [vmem:[#allocation6 + $0x30] sm:$0xff]
    %v117 = vld [vmem:[#allocation6 + $0x38] sm:$0xf]
    %v118 = vld [vmem:[#allocation6 + $0x3c] sm:$0xff]
    %v119 = vld [vmem:[#allocation6 + $0x44] sm:$0xf]
    %v120 = vld [vmem:[#allocation6 + $0x48] sm:$0xff]
    %v121 = vld [vmem:[#allocation6 + $0x50] sm:$0xf]
    %v122 = vld [vmem:[#allocation6 + $0x54] sm:$0xff]
    %v123 = vld [vmem:[#allocation6 + $0x5c] sm:$0xf]
    %v124 = vld [vmem:[#allocation6 + $0x60] sm:$0xff]
    %v125 = vld [vmem:[#allocation6 + $0x68] sm:$0xf]
    %v126 = vld [vmem:[#allocation6 + $0x6c] sm:$0xff]
    %v127 = vld [vmem:[#allocation6 + $0x74] sm:$0xf]
    %v128 = vld [vmem:[#allocation6 + $0x78] sm:$0xff]
    %v129 = vld [vmem:[#allocation6 + $0x80] sm:$0xf]
    %v130 = vld [vmem:[#allocation6 + $0x84] sm:$0xff]
    %v131 = vld [vmem:[#allocation6 + $0x8c] sm:$0xf]
    %v132 = vld [vmem:[#allocation6 + $0x90] sm:$0xff]
    %v133 = vld [vmem:[#allocation6 + $0x98] sm:$0xf]
    %v134 = vld [vmem:[#allocation6 + $0x9c] sm:$0xff]
    %v135 = vld [vmem:[#allocation6 + $0xa4] sm:$0xf]
    %v136 = vld [vmem:[#allocation6 + $0xa8] sm:$0xff]
    %v137 = vld [vmem:[#allocation6 + $0xb0] sm:$0xf]
    %v138 = vld [vmem:[#allocation6 + $0xb4] sm:$0xff]
    %v139 = vld [vmem:[#allocation6 + $0xbc] sm:$0xf]
    %v140 = vld [vmem:[#allocation8] sm:$0xff]
    %v141 = vld [vmem:[#allocation8 + $0x8] sm:$0xff]
    %v142 = vld [vmem:[#allocation8 + $0x10] sm:$0xff]
    %v143 = vld [vmem:[#allocation8 + $0x18] sm:$0xff]
    %v144 = vld [vmem:[#allocation8 + $0x20] sm:$0xff]
    %v145 = vld [vmem:[#allocation8 + $0x28] sm:$0xff]
    %v146 = vld [vmem:[#allocation8 + $0x30] sm:$0xff]
    %v147 = vld [vmem:[#allocation8 + $0x38] sm:$0xff]
    %v148 = vld [vmem:[#allocation8 + $0x40] sm:$0xff]
    %v149 = vld [vmem:[#allocation8 + $0x48] sm:$0xff]
    %v150 = vld [vmem:[#allocation8 + $0x50] sm:$0xff]
    %v151 = vld [vmem:[#allocation8 + $0x58] sm:$0xff]
    %v152 = vld [vmem:[#allocation8 + $0x60] sm:$0xff]
    %v153 = vld [vmem:[#allocation8 + $0x68] sm:$0xff]
    %v154 = vld [vmem:[#allocation8 + $0x70] sm:$0xff]
    %v155 = vld [vmem:[#allocation8 + $0x78] sm:$0xff]
    %v156 = vld [vmem:[#allocation8 + $0x80] sm:$0xff]
    %v157 = vld [vmem:[#allocation8 + $0x88] sm:$0xff]
    %v158 = vld [vmem:[#allocation8 + $0x90] sm:$0xff]
    %v159 = vld [vmem:[#allocation8 + $0x98] sm:$0xff]
    %v160 = vld [vmem:[#allocation8 + $0xa0] sm:$0xff]
    %v161 = vld [vmem:[#allocation8 + $0xa8] sm:$0xff]
    %v162 = vld [vmem:[#allocation8 + $0xb0] sm:$0xff]
    %v163 = vld [vmem:[#allocation8 + $0xb8] sm:$0xff]
    %v164 = vld [vmem:[#allocation8 + $0xc0] sm:$0xff]
    %v165 = vld [vmem:[#allocation8 + $0xc8] sm:$0xff]
    %v166 = vld [vmem:[#allocation8 + $0xd0] sm:$0xff]
    %v167 = vld [vmem:[#allocation8 + $0xd8] sm:$0xff]
    %v168 = vld [vmem:[#allocation8 + $0xe0] sm:$0xff]
    %v169 = vld [vmem:[#allocation8 + $0xe8] sm:$0xff]
    %v170 = vld [vmem:[#allocation8 + $0xf0] sm:$0xff]
    %v171 = vld [vmem:[#allocation8 + $0xf8] sm:$0xff]
    %v172 = vld [vmem:[#allocation8 + $0x100] sm:$0xff]
    %v173 = vld [vmem:[#allocation8 + $0x108] sm:$0xff]
    %v174 = vld [vmem:[#allocation8 + $0x110] sm:$0xff]
    %v175 = vld [vmem:[#allocation8 + $0x118] sm:$0xff]
    %v176 = vld [vmem:[#allocation8 + $0x120] sm:$0xff]
    %v177 = vld [vmem:[#allocation8 + $0x128] sm:$0xff]
    %v178 = vld [vmem:[#allocation8 + $0x130] sm:$0xff]
    %v179 = vld [vmem:[#allocation8 + $0x138] sm:$0xff]
    %v180 = vld [vmem:[#allocation8 + $0x140] sm:$0xff]
    %v181 = vld [vmem:[#allocation8 + $0x148] sm:$0xff]
    %v182 = vld [vmem:[#allocation8 + $0x150] sm:$0xff]
    %v183 = vld [vmem:[#allocation8 + $0x158] sm:$0xff]
    %v184 = vld [vmem:[#allocation8 + $0x160] sm:$0xff]
    %v185 = vld [vmem:[#allocation8 + $0x168] sm:$0xff]
    %v186 = vld [vmem:[#allocation8 + $0x170] sm:$0xff]
    %v187 = vld [vmem:[#allocation8 + $0x178] sm:$0xff]
    %v188 = vld [vmem:[#allocation8 + $0x180] sm:$0xff]
    %v189 = vld [vmem:[#allocation8 + $0x188] sm:$0xff]
    %v190 = vld [vmem:[#allocation8 + $0x190] sm:$0xff]
    %v191 = vld [vmem:[#allocation8 + $0x198] sm:$0xff]
    %v192 = vld [vmem:[#allocation8 + $0x1a0] sm:$0xff]
    %v193 = vld [vmem:[#allocation8 + $0x1a8] sm:$0xff]
    %v194 = vld [vmem:[#allocation8 + $0x1b0] sm:$0xff]
    %v195 = vld [vmem:[#allocation8 + $0x1b8] sm:$0xff]
    %v196 = vld [vmem:[#allocation8 + $0x1c0] sm:$0xff]
    %v197 = vld [vmem:[#allocation8 + $0x1c8] sm:$0xff]
    %v198 = vld [vmem:[#allocation8 + $0x1d0] sm:$0xff]
    %v199 = vld [vmem:[#allocation8 + $0x1d8] sm:$0xff]
    %v200 = vld [vmem:[#allocation8 + $0x1e0] sm:$0xff]
    %v201 = vld [vmem:[#allocation8 + $0x1e8] sm:$0xff]
    %v202 = vld [vmem:[#allocation8 + $0x1f0] sm:$0xff]
    %v203 = vld [vmem:[#allocation8 + $0x1f8] sm:$0xff]
    %v204 = vld [vmem:[%s4] sm:$0x1]
    %v206 = vlaneseq
    %v207 = vshrl.u32 %v206, 7
    %v208 = vsub.s32 0, %v207
    %v209 = vrot.slane %v204, %v208
    %v211 = vld [vmem:[%s6] sm:$0x1]
    %v213 = vlaneseq
    %v214 = vshrl.u32 %v213, 7
    %v215 = vsub.s32 0, %v214
    %v216 = vrot.slane %v211, %v215
    %v218 = vld [vmem:[%s6 + $0x1] sm:$0x1]
    %v220 = vlaneseq
    %v221 = vshrl.u32 %v220, 7
    %v222 = vsub.s32 0, %v221
    %v223 = vrot.slane %v218, %v222
    %v225 = vld [vmem:[%s7] sm:$0x1]
    %v227 = vlaneseq
    %v228 = vshrl.u32 %v227, 7
    %v229 = vsub.s32 0, %v228
    %v230 = vrot.slane %v225, %v229
    %v232 = vld [vmem:[%s8] sm:$0x1]
    %v234 = vlaneseq
    %v235 = vshrl.u32 %v234, 7
    %v236 = vsub.s32 0, %v235
    %v237 = vrot.slane %v232, %v236
    %239 = vst [vmem:[#allocation2] sm:$0xff] 0
    %v240 = vld [vmem:[#allocation4] sm:$0xff]
    %v241 = vld [vmem:[#allocation4 + $0x8] sm:$0xff]
    %v242 = vld [vmem:[#allocation4 + $0x10] sm:$0xff]
    %v243 = vld [vmem:[#allocation2] sm:$0xf]
    %v276 = vunpack.c.l.b16 %v108
    %v277 = vunpack.c.h.b16 %v108
    %v278 = vunpack.c.l.b16 %v109
    %v279 = vunpack.c.l.b16 %v110
    %v280 = vunpack.c.h.b16 %v110
    %v281 = vunpack.c.l.b16 %v111
    %v282 = vunpack.c.l.b16 %v112
    %v283 = vunpack.c.h.b16 %v112
    %v284 = vunpack.c.l.b16 %v113
    %v285 = vunpack.c.l.b16 %v114
    %v286 = vunpack.c.h.b16 %v114
    %v287 = vunpack.c.l.b16 %v115
    %v288 = vunpack.c.l.b16 %v116
    %v289 = vunpack.c.h.b16 %v116
    %v290 = vunpack.c.l.b16 %v117
    %v291 = vunpack.c.l.b16 %v118
    %v292 = vunpack.c.h.b16 %v118
    %v293 = vunpack.c.l.b16 %v119
    %v294 = vunpack.c.l.b16 %v120
    %v295 = vunpack.c.h.b16 %v120
    %v296 = vunpack.c.l.b16 %v121
    %v297 = vunpack.c.l.b16 %v122
    %v298 = vunpack.c.h.b16 %v122
    %v299 = vunpack.c.l.b16 %v123
    %v300 = vunpack.c.l.b16 %v124
    %v301 = vunpack.c.h.b16 %v124
    %v302 = vunpack.c.l.b16 %v125
    %v303 = vunpack.c.l.b16 %v126
    %v304 = vunpack.c.h.b16 %v126
    %v305 = vunpack.c.l.b16 %v127
    %v306 = vunpack.c.l.b16 %v128
    %v307 = vunpack.c.h.b16 %v128
    %v308 = vunpack.c.l.b16 %v129
    %v309 = vunpack.c.l.b16 %v130
    %v310 = vunpack.c.h.b16 %v130
    %v311 = vunpack.c.l.b16 %v131
    %v312 = vunpack.c.l.b16 %v132
    %v313 = vunpack.c.h.b16 %v132
    %v314 = vunpack.c.l.b16 %v133
    %v315 = vunpack.c.l.b16 %v134
    %v316 = vunpack.c.h.b16 %v134
    %v317 = vunpack.c.l.b16 %v135
    %v318 = vunpack.c.l.b16 %v136
    %v319 = vunpack.c.h.b16 %v136
    %v320 = vunpack.c.l.b16 %v137
    %v321 = vunpack.c.l.b16 %v138
    %v322 = vunpack.c.h.b16 %v138
    %v323 = vunpack.c.l.b16 %v139
    %v324 = vpack.c.b16 %v279, %v276
    %v325 = vpack.c.b16 %v280, %v277
    %v326 = vpack.c.b16 %v281, %v278
    %v327 = vpack.c.b16 %v285, %v282
    %v328 = vpack.c.b16 %v286, %v283
    %v329 = vpack.c.b16 %v287, %v284
    %v330 = vpack.c.b16 %v291, %v288
    %v331 = vpack.c.b16 %v292, %v289
    %v332 = vpack.c.b16 %v293, %v290
    %v333 = vpack.c.b16 %v297, %v294
    %v334 = vpack.c.b16 %v298, %v295
    %v335 = vpack.c.b16 %v299, %v296
    %v336 = vpack.c.b16 %v303, %v300
    %v337 = vpack.c.b16 %v304, %v301
    %v338 = vpack.c.b16 %v305, %v302
    %v339 = vpack.c.b16 %v309, %v306
    %v340 = vpack.c.b16 %v310, %v307
    %v341 = vpack.c.b16 %v311, %v308
    %v342 = vpack.c.b16 %v315, %v312
    %v343 = vpack.c.b16 %v316, %v313
    %v344 = vpack.c.b16 %v317, %v314
    %v345 = vpack.c.b16 %v321, %v318
    %v346 = vpack.c.b16 %v322, %v319
    %v347 = vpack.c.b16 %v323, %v320
    %372 = vmatprep.subr.bf16.mxu0 %v346
    %373 = vmatpush1.bf16.msra.mxu0 %v345
    %374 = vmatprep.subr.bf16.mxu0 %v343
    %375 = vmatpush1.bf16.msra.mxu0 %v342
    %376 = vmatprep.subr.bf16.mxu0 %v340
    %377 = vmatpush1.bf16.msra.mxu0 %v339
    %378 = vmatprep.subr.bf16.mxu0 %v337
    %379 = vmatpush1.bf16.msra.mxu0 %v336
    %380 = vmatprep.subr.bf16.mxu0 %v334
    %381 = vmatpush1.bf16.msra.mxu0 %v333
    %382 = vmatprep.subr.bf16.mxu0 %v331
    %383 = vmatpush1.bf16.msra.mxu0 %v330
    %384 = vmatprep.subr.bf16.mxu0 %v328
    %385 = vmatpush1.bf16.msra.mxu0 %v327
    %386 = vmatprep.subr.bf16.mxu0 %v325
    %387 = vmatpush1.bf16.msra.mxu0 %v324
    %388 = vmatprep.subr.bf16.mxu0 0
    %389 = vmatpush2.bf16.msra.mxu0 0
    %390 = vmatprep.subr.bf16.mxu0 0
    %391 = vmatpush2.bf16.msra.mxu0 0
    %392 = vmatprep.subr.bf16.mxu0 0
    %393 = vmatpush2.bf16.msra.mxu0 0
    %394 = vmatprep.subr.bf16.mxu0 0
    %395 = vmatpush2.bf16.msra.mxu0 0
    %396 = vmatprep.subr.bf16.mxu0 0
    %397 = vmatpush2.bf16.msra.mxu0 0
    %398 = vmatprep.subr.bf16.mxu0 0
    %399 = vmatpush2.bf16.msra.mxu0 0
    %400 = vmatprep.subr.bf16.mxu0 0
    %401 = vmatpush2.bf16.msra.mxu0 0
    %402 = vmatprep.subr.bf16.mxu0 0
    %403 = vmatpush2.bf16.msra.mxu0 0
    %404 = vmatprep.mubr.bf16.mxu0 0
    %405 = vmatmul.mubr.bf16.gmra.mxu0 %v243
    %v406 = vpop.f32.mrf.mxu0
    %v407 = vadd.f32 0.0, %v406
    %v408 = vpop.f32.mrf.mxu0
    %v409 = vadd.f32 0.0, %v408
    %v410 = vpop.f32.mrf.mxu0
    %v411 = vpop.f32.mrf.mxu0
    %412 = vdwg.mxu0
    %413 = vmatprep.subr.bf16.mxu0 0
    %414 = vmatpush1.bf16.msra.mxu0 %v347
    %415 = vmatprep.subr.bf16.mxu0 0
    %416 = vmatpush1.bf16.msra.mxu0 %v344
    %417 = vmatprep.subr.bf16.mxu0 0
    %418 = vmatpush1.bf16.msra.mxu0 %v341
    %419 = vmatprep.subr.bf16.mxu0 0
    %420 = vmatpush1.bf16.msra.mxu0 %v338
    %421 = vmatprep.subr.bf16.mxu0 0
    %422 = vmatpush1.bf16.msra.mxu0 %v335
    %423 = vmatprep.subr.bf16.mxu0 0
    %424 = vmatpush1.bf16.msra.mxu0 %v332
    %425 = vmatprep.subr.bf16.mxu0 0
    %426 = vmatpush1.bf16.msra.mxu0 %v329
    %427 = vmatprep.subr.bf16.mxu0 0
    %428 = vmatpush1.bf16.msra.mxu0 %v326
    %429 = vmatprep.subr.bf16.mxu0 0
    %430 = vmatpush2.bf16.msra.mxu0 0
    %431 = vmatprep.subr.bf16.mxu0 0
    %432 = vmatpush2.bf16.msra.mxu0 0
    %433 = vmatprep.subr.bf16.mxu0 0
    %434 = vmatpush2.bf16.msra.mxu0 0
    %435 = vmatprep.subr.bf16.mxu0 0
    %436 = vmatpush2.bf16.msra.mxu0 0
    %437 = vmatprep.subr.bf16.mxu0 0
    %438 = vmatpush2.bf16.msra.mxu0 0
    %439 = vmatprep.subr.bf16.mxu0 0
    %440 = vmatpush2.bf16.msra.mxu0 0
    %441 = vmatprep.subr.bf16.mxu0 0
    %442 = vmatpush2.bf16.msra.mxu0 0
    %443 = vmatprep.subr.bf16.mxu0 0
    %444 = vmatpush2.bf16.msra.mxu0 0
    %445 = vmatprep.mubr.bf16.mxu0 0
    %446 = vmatmul.mubr.bf16.gmra.mxu0 %v243
    %v447 = vpop.f32.mrf.mxu0
    %v448 = vadd.f32 0.0, %v447
    %v449 = vpop.f32.mrf.mxu0
    %v450 = vpop.f32.mrf.mxu0
    %v451 = vpop.f32.mrf.mxu0
    %452 = vdwg.mxu0
    %v453 = vadd.f32 %v240, %v407
    %v454 = vxor.u32 %v453, 2147483648
    %v455 = vmul.f32 %v454, 1.442695
    %v456 = vpow.pop %v455
    %v457 = vadd.f32 %v456, 1.0
    %v458 = vrcp.pop %v457
    %v459 = vmul.f32 1.0, %v458
    %v460 = vadd.f32 %v241, %v409
    %v461 = vxor.u32 %v460, 2147483648
    %v462 = vmul.f32 %v461, 1.442695
    %v463 = vpow.pop %v462
    %v464 = vadd.f32 %v463, 1.0
    %v465 = vrcp.pop %v464
    %v466 = vmul.f32 1.0, %v465
    %v467 = vadd.f32 %v448, %v209
    %v468 = vmul.f32 %v459, %v467
    %v469 = vadd.f32 %v242, %v468
    %v470 = vtanh.pop %v469
    %v471 = vsub.f32 1.0, %v466
    %v472 = vmul.f32 %v471, %v470
    %v473 = vmul.f32 %v466, 0.0
    %v474 = vadd.f32 %v472, %v473
    %v475 = vpack.c.bf16 %v474, %v474
    %476 = vst [vmem:[#allocation2] sm:$0xf] %v475
    %v477 = vld [vmem:[#allocation2] sm:$0xff]
    %v479 = vunpack.c.l.b16 %v477
    %v480 = vunpack.c.h.b16 %v477
    %v481 = vpack.c.b16 %v479, %v479
    %v482 = vpack.c.b16 %v480, %v480
    %v549 = vunpack.c.l.b16 %v140
    %v550 = vunpack.c.h.b16 %v140
    %v551 = vunpack.c.l.b16 %v141
    %v552 = vunpack.c.h.b16 %v141
    %v553 = vunpack.c.l.b16 %v142
    %v554 = vunpack.c.h.b16 %v142
    %v555 = vunpack.c.l.b16 %v143
    %v556 = vunpack.c.h.b16 %v143
    %v557 = vunpack.c.l.b16 %v144
    %v558 = vunpack.c.h.b16 %v144
    %v559 = vunpack.c.l.b16 %v145
    %v560 = vunpack.c.h.b16 %v145
    %v561 = vunpack.c.l.b16 %v146
    %v562 = vunpack.c.h.b16 %v146
    %v563 = vunpack.c.l.b16 %v147
    %v564 = vunpack.c.h.b16 %v147
    %v565 = vunpack.c.l.b16 %v148
    %v566 = vunpack.c.h.b16 %v148
    %v567 = vunpack.c.l.b16 %v149
    %v568 = vunpack.c.h.b16 %v149
    %v569 = vunpack.c.l.b16 %v150
    %v570 = vunpack.c.h.b16 %v150
    %v571 = vunpack.c.l.b16 %v151
    %v572 = vunpack.c.h.b16 %v151
    %v573 = vunpack.c.l.b16 %v152
    %v574 = vunpack.c.h.b16 %v152
    %v575 = vunpack.c.l.b16 %v153
    %v576 = vunpack.c.h.b16 %v153
    %v577 = vunpack.c.l.b16 %v154
    %v578 = vunpack.c.h.b16 %v154
    %v579 = vunpack.c.l.b16 %v155
    %v580 = vunpack.c.h.b16 %v155
    %v581 = vunpack.c.l.b16 %v156
    %v582 = vunpack.c.h.b16 %v156
    %v583 = vunpack.c.l.b16 %v157
    %v584 = vunpack.c.h.b16 %v157
    %v585 = vunpack.c.l.b16 %v158
    %v586 = vunpack.c.h.b16 %v158
    %v587 = vunpack.c.l.b16 %v159
    %v588 = vunpack.c.h.b16 %v159
    %v589 = vunpack.c.l.b16 %v160
    %v590 = vunpack.c.h.b16 %v160
    %v591 = vunpack.c.l.b16 %v161
    %v592 = vunpack.c.h.b16 %v161
    %v593 = vunpack.c.l.b16 %v162
    %v594 = vunpack.c.h.b16 %v162
    %v595 = vunpack.c.l.b16 %v163
    %v596 = vunpack.c.h.b16 %v163
    %v597 = vunpack.c.l.b16 %v164
    %v598 = vunpack.c.h.b16 %v164
    %v599 = vunpack.c.l.b16 %v165
    %v600 = vunpack.c.h.b16 %v165
    %v601 = vunpack.c.l.b16 %v166
    %v602 = vunpack.c.h.b16 %v166
    %v603 = vunpack.c.l.b16 %v167
    %v604 = vunpack.c.h.b16 %v167
    %v605 = vunpack.c.l.b16 %v168
    %v606 = vunpack.c.h.b16 %v168
    %v607 = vunpack.c.l.b16 %v169
    %v608 = vunpack.c.h.b16 %v169
    %v609 = vunpack.c.l.b16 %v170
    %v610 = vunpack.c.h.b16 %v170
    %v611 = vunpack.c.l.b16 %v171
    %v612 = vunpack.c.h.b16 %v171
    %v613 = vunpack.c.l.b16 %v172
    %v614 = vunpack.c.h.b16 %v172
    %v615 = vunpack.c.l.b16 %v173
    %v616 = vunpack.c.h.b16 %v173
    %v617 = vunpack.c.l.b16 %v174
    %v618 = vunpack.c.h.b16 %v174
    %v619 = vunpack.c.l.b16 %v175
    %v620 = vunpack.c.h.b16 %v175
    %v621 = vunpack.c.l.b16 %v176
    %v622 = vunpack.c.h.b16 %v176
    %v623 = vunpack.c.l.b16 %v177
    %v624 = vunpack.c.h.b16 %v177
    %v625 = vunpack.c.l.b16 %v178
    %v626 = vunpack.c.h.b16 %v178
    %v627 = vunpack.c.l.b16 %v179
    %v628 = vunpack.c.h.b16 %v179
    %v629 = vunpack.c.l.b16 %v180
    %v630 = vunpack.c.h.b16 %v180
    %v631 = vunpack.c.l.b16 %v181
    %v632 = vunpack.c.h.b16 %v181
    %v633 = vunpack.c.l.b16 %v182
    %v634 = vunpack.c.h.b16 %v182
    %v635 = vunpack.c.l.b16 %v183
    %v636 = vunpack.c.h.b16 %v183
    %v637 = vunpack.c.l.b16 %v184
    %v638 = vunpack.c.h.b16 %v184
    %v639 = vunpack.c.l.b16 %v185
    %v640 = vunpack.c.h.b16 %v185
    %v641 = vunpack.c.l.b16 %v186
    %v642 = vunpack.c.h.b16 %v186
    %v643 = vunpack.c.l.b16 %v187
    %v644 = vunpack.c.h.b16 %v187
    %v645 = vunpack.c.l.b16 %v188
    %v646 = vunpack.c.h.b16 %v188
    %v647 = vunpack.c.l.b16 %v189
    %v648 = vunpack.c.h.b16 %v189
    %v649 = vunpack.c.l.b16 %v190
    %v650 = vunpack.c.h.b16 %v190
    %v651 = vunpack.c.l.b16 %v191
    %v652 = vunpack.c.h.b16 %v191
    %v653 = vunpack.c.l.b16 %v192
    %v654 = vunpack.c.h.b16 %v192
    %v655 = vunpack.c.l.b16 %v193
    %v656 = vunpack.c.h.b16 %v193
    %v657 = vunpack.c.l.b16 %v194
    %v658 = vunpack.c.h.b16 %v194
    %v659 = vunpack.c.l.b16 %v195
    %v660 = vunpack.c.h.b16 %v195
    %v661 = vunpack.c.l.b16 %v196
    %v662 = vunpack.c.h.b16 %v196
    %v663 = vunpack.c.l.b16 %v197
    %v664 = vunpack.c.h.b16 %v197
    %v665 = vunpack.c.l.b16 %v198
    %v666 = vunpack.c.h.b16 %v198
    %v667 = vunpack.c.l.b16 %v199
    %v668 = vunpack.c.h.b16 %v199
    %v669 = vunpack.c.l.b16 %v200
    %v670 = vunpack.c.h.b16 %v200
    %v671 = vunpack.c.l.b16 %v201
    %v672 = vunpack.c.h.b16 %v201
    %v673 = vunpack.c.l.b16 %v202
    %v674 = vunpack.c.h.b16 %v202
    %v675 = vunpack.c.l.b16 %v203
    %v676 = vunpack.c.h.b16 %v203
    %v677 = vpack.c.b16 %v553, %v549
    %v678 = vpack.c.b16 %v554, %v550
    %v679 = vpack.c.b16 %v555, %v551
    %v680 = vpack.c.b16 %v556, %v552
    %v681 = vpack.c.b16 %v561, %v557
    %v682 = vpack.c.b16 %v562, %v558
    %v683 = vpack.c.b16 %v563, %v559
    %v684 = vpack.c.b16 %v564, %v560
    %v685 = vpack.c.b16 %v569, %v565
    %v686 = vpack.c.b16 %v570, %v566
    %v687 = vpack.c.b16 %v571, %v567
    %v688 = vpack.c.b16 %v572, %v568
    %v689 = vpack.c.b16 %v577, %v573
    %v690 = vpack.c.b16 %v578, %v574
    %v691 = vpack.c.b16 %v579, %v575
    %v692 = vpack.c.b16 %v580, %v576
    %v693 = vpack.c.b16 %v585, %v581
    %v694 = vpack.c.b16 %v586, %v582
    %v695 = vpack.c.b16 %v587, %v583
    %v696 = vpack.c.b16 %v588, %v584
    %v697 = vpack.c.b16 %v593, %v589
    %v698 = vpack.c.b16 %v594, %v590
    %v699 = vpack.c.b16 %v595, %v591
    %v700 = vpack.c.b16 %v596, %v592
    %v701 = vpack.c.b16 %v601, %v597
    %v702 = vpack.c.b16 %v602, %v598
    %v703 = vpack.c.b16 %v603, %v599
    %v704 = vpack.c.b16 %v604, %v600
    %v705 = vpack.c.b16 %v609, %v605
    %v706 = vpack.c.b16 %v610, %v606
    %v707 = vpack.c.b16 %v611, %v607
    %v708 = vpack.c.b16 %v612, %v608
    %v709 = vpack.c.b16 %v617, %v613
    %v710 = vpack.c.b16 %v618, %v614
    %v711 = vpack.c.b16 %v619, %v615
    %v712 = vpack.c.b16 %v620, %v616
    %v713 = vpack.c.b16 %v625, %v621
    %v714 = vpack.c.b16 %v626, %v622
    %v715 = vpack.c.b16 %v627, %v623
    %v716 = vpack.c.b16 %v628, %v624
    %v717 = vpack.c.b16 %v633, %v629
    %v718 = vpack.c.b16 %v634, %v630
    %v719 = vpack.c.b16 %v635, %v631
    %v720 = vpack.c.b16 %v636, %v632
    %v721 = vpack.c.b16 %v641, %v637
    %v722 = vpack.c.b16 %v642, %v638
    %v723 = vpack.c.b16 %v643, %v639
    %v724 = vpack.c.b16 %v644, %v640
    %v725 = vpack.c.b16 %v649, %v645
    %v726 = vpack.c.b16 %v650, %v646
    %v727 = vpack.c.b16 %v651, %v647
    %v728 = vpack.c.b16 %v652, %v648
    %v729 = vpack.c.b16 %v657, %v653
    %v730 = vpack.c.b16 %v658, %v654
    %v731 = vpack.c.b16 %v659, %v655
    %v732 = vpack.c.b16 %v660, %v656
    %v733 = vpack.c.b16 %v665, %v661
    %v734 = vpack.c.b16 %v666, %v662
    %v735 = vpack.c.b16 %v667, %v663
    %v736 = vpack.c.b16 %v668, %v664
    %v737 = vpack.c.b16 %v673, %v669
    %v738 = vpack.c.b16 %v674, %v670
    %v739 = vpack.c.b16 %v675, %v671
    %v740 = vpack.c.b16 %v676, %v672
    %805 = vmatprep.subr.bf16.mxu0 %v706
    %806 = vmatpush1.bf16.msra.mxu0 %v705
    %807 = vmatprep.subr.bf16.mxu0 %v702
    %808 = vmatpush1.bf16.msra.mxu0 %v701
    %809 = vmatprep.subr.bf16.mxu0 %v698
    %810 = vmatpush1.bf16.msra.mxu0 %v697
    %811 = vmatprep.subr.bf16.mxu0 %v694
    %812 = vmatpush1.bf16.msra.mxu0 %v693
    %813 = vmatprep.subr.bf16.mxu0 %v690
    %814 = vmatpush1.bf16.msra.mxu0 %v689
    %815 = vmatprep.subr.bf16.mxu0 %v686
    %816 = vmatpush1.bf16.msra.mxu0 %v685
    %817 = vmatprep.subr.bf16.mxu0 %v682
    %818 = vmatpush1.bf16.msra.mxu0 %v681
    %819 = vmatprep.subr.bf16.mxu0 %v678
    %820 = vmatpush1.bf16.msra.mxu0 %v677
    %821 = vmatprep.subr.bf16.mxu0 %v738
    %822 = vmatpush2.bf16.msra.mxu0 %v737
    %823 = vmatprep.subr.bf16.mxu0 %v734
    %824 = vmatpush2.bf16.msra.mxu0 %v733
    %825 = vmatprep.subr.bf16.mxu0 %v730
    %826 = vmatpush2.bf16.msra.mxu0 %v729
    %827 = vmatprep.subr.bf16.mxu0 %v726
    %828 = vmatpush2.bf16.msra.mxu0 %v725
    %829 = vmatprep.subr.bf16.mxu0 %v722
    %830 = vmatpush2.bf16.msra.mxu0 %v721
    %831 = vmatprep.subr.bf16.mxu0 %v718
    %832 = vmatpush2.bf16.msra.mxu0 %v717
    %833 = vmatprep.subr.bf16.mxu0 %v714
    %834 = vmatpush2.bf16.msra.mxu0 %v713
    %835 = vmatprep.subr.bf16.mxu0 %v710
    %836 = vmatpush2.bf16.msra.mxu0 %v709
    %837 = vmatprep.mubr.bf16.mxu0 %v482
    %838 = vmatmul.mubr.bf16.gmra.mxu0 %v481
    %v839 = vpop.f32.mrf.mxu0
    %v840 = vadd.f32 0.0, %v839
    %v841 = vpop.f32.mrf.mxu0
    %v842 = vadd.f32 0.0, %v841
    %v843 = vpop.f32.mrf.mxu0
    %v844 = vpop.f32.mrf.mxu0
    %845 = vdwg.mxu0
    %846 = vmatprep.subr.bf16.mxu0 %v708
    %847 = vmatpush1.bf16.msra.mxu0 %v707
    %848 = vmatprep.subr.bf16.mxu0 %v704
    %849 = vmatpush1.bf16.msra.mxu0 %v703
    %850 = vmatprep.subr.bf16.mxu0 %v700
    %851 = vmatpush1.bf16.msra.mxu0 %v699
    %852 = vmatprep.subr.bf16.mxu0 %v696
    %853 = vmatpush1.bf16.msra.mxu0 %v695
    %854 = vmatprep.subr.bf16.mxu0 %v692
    %855 = vmatpush1.bf16.msra.mxu0 %v691
    %856 = vmatprep.subr.bf16.mxu0 %v688
    %857 = vmatpush1.bf16.msra.mxu0 %v687
    %858 = vmatprep.subr.bf16.mxu0 %v684
    %859 = vmatpush1.bf16.msra.mxu0 %v683
    %860 = vmatprep.subr.bf16.mxu0 %v680
    %861 = vmatpush1.bf16.msra.mxu0 %v679
    %862 = vmatprep.subr.bf16.mxu0 %v740
    %863 = vmatpush2.bf16.msra.mxu0 %v739
    %864 = vmatprep.subr.bf16.mxu0 %v736
    %865 = vmatpush2.bf16.msra.mxu0 %v735
    %866 = vmatprep.subr.bf16.mxu0 %v732
    %867 = vmatpush2.bf16.msra.mxu0 %v731
    %868 = vmatprep.subr.bf16.mxu0 %v728
    %869 = vmatpush2.bf16.msra.mxu0 %v727
    %870 = vmatprep.subr.bf16.mxu0 %v724
    %871 = vmatpush2.bf16.msra.mxu0 %v723
    %872 = vmatprep.subr.bf16.mxu0 %v720
    %873 = vmatpush2.bf16.msra.mxu0 %v719
    %874 = vmatprep.subr.bf16.mxu0 %v716
    %875 = vmatpush2.bf16.msra.mxu0 %v715
    %876 = vmatprep.subr.bf16.mxu0 %v712
    %877 = vmatpush2.bf16.msra.mxu0 %v711
    %878 = vmatprep.mubr.bf16.mxu0 %v482
    %879 = vmatmul.mubr.bf16.gmra.mxu0 %v481
    %v880 = vpop.f32.mrf.mxu0
    %v881 = vadd.f32 0.0, %v880
    %v882 = vpop.f32.mrf.mxu0
    %v883 = vadd.f32 0.0, %v882
    %v884 = vpop.f32.mrf.mxu0
    %v885 = vpop.f32.mrf.mxu0
    %886 = vdwg.mxu0
    %v887 = vadd.f32 %v840, %v216
    %v888 = vxor.u32 %v887, 2147483648
    %v889 = vmul.f32 %v888, 1.442695
    %v890 = vpow.pop %v889
    %v891 = vadd.f32 %v890, 1.0
    %v892 = vrcp.pop %v891
    %v893 = vmul.f32 1.0, %v892
    %v894 = vadd.f32 %v842, %v223
    %v895 = vxor.u32 %v894, 2147483648
    %v896 = vmul.f32 %v895, 1.442695
    %v897 = vpow.pop %v896
    %v898 = vadd.f32 %v897, 1.0
    %v899 = vrcp.pop %v898
    %v900 = vmul.f32 1.0, %v899
    %v901 = vadd.f32 %v881, %v230
    %v902 = vadd.f32 %v883, %v237
    %v903 = vmul.f32 %v893, %v902
    %v904 = vadd.f32 %v901, %v903
    %v905 = vtanh.pop %v904
    %v906 = vsub.f32 1.0, %v900
    %v907 = vmul.f32 %v906, %v905
    %v908 = vmul.f32 %v900, 0.0
    %v909 = vadd.f32 %v907, %v908
    %v910 = vpack.c.bf16 %v909, %v909
    %911 = vst [vmem:[#allocation2 + $0x4] sm:$0xf] %v910
    %s912 = scalar_lea.vmem [#allocation4], 24
    %v913 = vld [vmem:[%s912] sm:$0xff]
    %v914 = vld [vmem:[%s912 + $0x8] sm:$0xff]
    %v915 = vld [vmem:[%s912 + $0x10] sm:$0xff]
    %v916 = vld [vmem:[#allocation2] sm:$0xf]
    %917 = vmatprep.subr.bf16.mxu0 %v346
    %918 = vmatpush1.bf16.msra.mxu0 %v345
    %919 = vmatprep.subr.bf16.mxu0 %v343
    %920 = vmatpush1.bf16.msra.mxu0 %v342
    %921 = vmatprep.subr.bf16.mxu0 %v340
    %922 = vmatpush1.bf16.msra.mxu0 %v339
    %923 = vmatprep.subr.bf16.mxu0 %v337
    %924 = vmatpush1.bf16.msra.mxu0 %v336
    %925 = vmatprep.subr.bf16.mxu0 %v334
    %926 = vmatpush1.bf16.msra.mxu0 %v333
    %927 = vmatprep.subr.bf16.mxu0 %v331
    %928 = vmatpush1.bf16.msra.mxu0 %v330
    %929 = vmatprep.subr.bf16.mxu0 %v328
    %930 = vmatpush1.bf16.msra.mxu0 %v327
    %931 = vmatprep.subr.bf16.mxu0 %v325
    %932 = vmatpush1.bf16.msra.mxu0 %v324
    %933 = vmatprep.subr.bf16.mxu0 0
    %934 = vmatpush2.bf16.msra.mxu0 0
    %935 = vmatprep.subr.bf16.mxu0 0
    %936 = vmatpush2.bf16.msra.mxu0 0
    %937 = vmatprep.subr.bf16.mxu0 0
    %938 = vmatpush2.bf16.msra.mxu0 0
    %939 = vmatprep.subr.bf16.mxu0 0
    %940 = vmatpush2.bf16.msra.mxu0 0
    %941 = vmatprep.subr.bf16.mxu0 0
    %942 = vmatpush2.bf16.msra.mxu0 0
    %943 = vmatprep.subr.bf16.mxu0 0
    %944 = vmatpush2.bf16.msra.mxu0 0
    %945 = vmatprep.subr.bf16.mxu0 0
    %946 = vmatpush2.bf16.msra.mxu0 0
    %947 = vmatprep.subr.bf16.mxu0 0
    %948 = vmatpush2.bf16.msra.mxu0 0
    %949 = vmatprep.mubr.bf16.mxu0 0
    %950 = vmatmul.mubr.bf16.gmra.mxu0 %v916
    %v951 = vpop.f32.mrf.mxu0
    %v952 = vadd.f32 0.0, %v951
    %v953 = vpop.f32.mrf.mxu0
    %v954 = vadd.f32 0.0, %v953
    %v955 = vpop.f32.mrf.mxu0
    %v956 = vpop.f32.mrf.mxu0
    %957 = vdwg.mxu0
    %958 = vmatprep.subr.bf16.mxu0 0
    %959 = vmatpush1.bf16.msra.mxu0 %v347
    %960 = vmatprep.subr.bf16.mxu0 0
    %961 = vmatpush1.bf16.msra.mxu0 %v344
    %962 = vmatprep.subr.bf16.mxu0 0
    %963 = vmatpush1.bf16.msra.mxu0 %v341
    %964 = vmatprep.subr.bf16.mxu0 0
    %965 = vmatpush1.bf16.msra.mxu0 %v338
    %966 = vmatprep.subr.bf16.mxu0 0
    %967 = vmatpush1.bf16.msra.mxu0 %v335
    %968 = vmatprep.subr.bf16.mxu0 0
    %969 = vmatpush1.bf16.msra.mxu0 %v332
    %970 = vmatprep.subr.bf16.mxu0 0
    %971 = vmatpush1.bf16.msra.mxu0 %v329
    %972 = vmatprep.subr.bf16.mxu0 0
    %973 = vmatpush1.bf16.msra.mxu0 %v326
    %974 = vmatprep.subr.bf16.mxu0 0
    %975 = vmatpush2.bf16.msra.mxu0 0
    %976 = vmatprep.subr.bf16.mxu0 0
    %977 = vmatpush2.bf16.msra.mxu0 0
    %978 = vmatprep.subr.bf16.mxu0 0
    %979 = vmatpush2.bf16.msra.mxu0 0
    %980 = vmatprep.subr.bf16.mxu0 0
    %981 = vmatpush2.bf16.msra.mxu0 0
    %982 = vmatprep.subr.bf16.mxu0 0
    %983 = vmatpush2.bf16.msra.mxu0 0
    %984 = vmatprep.subr.bf16.mxu0 0
    %985 = vmatpush2.bf16.msra.mxu0 0
    %986 = vmatprep.subr.bf16.mxu0 0
    %987 = vmatpush2.bf16.msra.mxu0 0
    %988 = vmatprep.subr.bf16.mxu0 0
    %989 = vmatpush2.bf16.msra.mxu0 0
    %990 = vmatprep.mubr.bf16.mxu0 0
    %991 = vmatmul.mubr.bf16.gmra.mxu0 %v916
    %v992 = vpop.f32.mrf.mxu0
    %v993 = vadd.f32 0.0, %v992
    %v994 = vpop.f32.mrf.mxu0
    %v995 = vpop.f32.mrf.mxu0
    %v996 = vpop.f32.mrf.mxu0
    %997 = vdwg.mxu0
    %v998 = vadd.f32 %v913, %v952
    %v999 = vxor.u32 %v998, 2147483648
    %v1000 = vmul.f32 %v999, 1.442695
    %v1001 = vpow.pop %v1000
    %v1002 = vadd.f32 %v1001, 1.0
    %v1003 = vrcp.pop %v1002
    %v1004 = vmul.f32 1.0, %v1003
    %v1005 = vadd.f32 %v914, %v954
    %v1006 = vxor.u32 %v1005, 2147483648
    %v1007 = vmul.f32 %v1006, 1.442695
    %v1008 = vpow.pop %v1007
    %v1009 = vadd.f32 %v1008, 1.0
    %v1010 = vrcp.pop %v1009
    %v1011 = vmul.f32 1.0, %v1010
    %v1012 = vadd.f32 %v993, %v209
    %v1013 = vmul.f32 %v1004, %v1012
    %v1014 = vadd.f32 %v915, %v1013
    %v1015 = vtanh.pop %v1014
    %v1016 = vsub.f32 1.0, %v1011
    %v1017 = vmul.f32 %v1016, %v1015
    %v1018 = vmul.f32 %v1011, %v474
    %v1019 = vadd.f32 %v1017, %v1018
    %v1020 = vpack.c.bf16 %v1019, %v1019
    %1021 = vst [vmem:[#allocation2] sm:$0xf] %v1020
    %v1022 = vld [vmem:[#allocation2] sm:$0xff]
    %v1024 = vunpack.c.l.b16 %v1022
    %v1025 = vunpack.c.h.b16 %v1022
    %v1026 = vpack.c.b16 %v1024, %v1024
    %v1027 = vpack.c.b16 %v1025, %v1025
    %1030 = vmatprep.subr.bf16.mxu0 %v706
    %1031 = vmatpush1.bf16.msra.mxu0 %v705
    %1032 = vmatprep.subr.bf16.mxu0 %v702
    %1033 = vmatpush1.bf16.msra.mxu0 %v701
    %1034 = vmatprep.subr.bf16.mxu0 %v698
    %1035 = vmatpush1.bf16.msra.mxu0 %v697
    %1036 = vmatprep.subr.bf16.mxu0 %v694
    %1037 = vmatpush1.bf16.msra.mxu0 %v693
    %1038 = vmatprep.subr.bf16.mxu0 %v690
    %1039 = vmatpush1.bf16.msra.mxu0 %v689
    %1040 = vmatprep.subr.bf16.mxu0 %v686
    %1041 = vmatpush1.bf16.msra.mxu0 %v685
    %1042 = vmatprep.subr.bf16.mxu0 %v682
    %1043 = vmatpush1.bf16.msra.mxu0 %v681
    %1044 = vmatprep.subr.bf16.mxu0 %v678
    %1045 = vmatpush1.bf16.msra.mxu0 %v677
    %1046 = vmatprep.subr.bf16.mxu0 %v738
    %1047 = vmatpush2.bf16.msra.mxu0 %v737
    %1048 = vmatprep.subr.bf16.mxu0 %v734
    %1049 = vmatpush2.bf16.msra.mxu0 %v733
    %1050 = vmatprep.subr.bf16.mxu0 %v730
    %1051 = vmatpush2.bf16.msra.mxu0 %v729
    %1052 = vmatprep.subr.bf16.mxu0 %v726
    %1053 = vmatpush2.bf16.msra.mxu0 %v725
    %1054 = vmatprep.subr.bf16.mxu0 %v722
    %1055 = vmatpush2.bf16.msra.mxu0 %v721
    %1056 = vmatprep.subr.bf16.mxu0 %v718
    %1057 = vmatpush2.bf16.msra.mxu0 %v717
    %1058 = vmatprep.subr.bf16.mxu0 %v714
    %1059 = vmatpush2.bf16.msra.mxu0 %v713
    %1060 = vmatprep.subr.bf16.mxu0 %v710
    %1061 = vmatpush2.bf16.msra.mxu0 %v709
    %1062 = vmatprep.mubr.bf16.mxu0 %v1027
    %1063 = vmatmul.mubr.bf16.gmra.mxu0 %v1026
    %v1064 = vpop.f32.mrf.mxu0
    %v1065 = vadd.f32 0.0, %v1064
    %v1066 = vpop.f32.mrf.mxu0
    %v1067 = vadd.f32 0.0, %v1066
    %v1068 = vpop.f32.mrf.mxu0
    %v1069 = vpop.f32.mrf.mxu0
    %1070 = vdwg.mxu0
    %1071 = vmatprep.subr.bf16.mxu0 %v708
    %1072 = vmatpush1.bf16.msra.mxu0 %v707
    %1073 = vmatprep.subr.bf16.mxu0 %v704
    %1074 = vmatpush1.bf16.msra.mxu0 %v703
    %1075 = vmatprep.subr.bf16.mxu0 %v700
    %1076 = vmatpush1.bf16.msra.mxu0 %v699
    %1077 = vmatprep.subr.bf16.mxu0 %v696
    %1078 = vmatpush1.bf16.msra.mxu0 %v695
    %1079 = vmatprep.subr.bf16.mxu0 %v692
    %1080 = vmatpush1.bf16.msra.mxu0 %v691
    %1081 = vmatprep.subr.bf16.mxu0 %v688
    %1082 = vmatpush1.bf16.msra.mxu0 %v687
    %1083 = vmatprep.subr.bf16.mxu0 %v684
    %1084 = vmatpush1.bf16.msra.mxu0 %v683
    %1085 = vmatprep.subr.bf16.mxu0 %v680
    %1086 = vmatpush1.bf16.msra.mxu0 %v679
    %1087 = vmatprep.subr.bf16.mxu0 %v740
    %1088 = vmatpush2.bf16.msra.mxu0 %v739
    %1089 = vmatprep.subr.bf16.mxu0 %v736
    %1090 = vmatpush2.bf16.msra.mxu0 %v735
    %1091 = vmatprep.subr.bf16.mxu0 %v732
    %1092 = vmatpush2.bf16.msra.mxu0 %v731
    %1093 = vmatprep.subr.bf16.mxu0 %v728
    %1094 = vmatpush2.bf16.msra.mxu0 %v727
    %1095 = vmatprep.subr.bf16.mxu0 %v724
    %1096 = vmatpush2.bf16.msra.mxu0 %v723
    %1097 = vmatprep.subr.bf16.mxu0 %v720
    %1098 = vmatpush2.bf16.msra.mxu0 %v719
    %1099 = vmatprep.subr.bf16.mxu0 %v716
    %1100 = vmatpush2.bf16.msra.mxu0 %v715
    %1101 = vmatprep.subr.bf16.mxu0 %v712
    %1102 = vmatpush2.bf16.msra.mxu0 %v711
    %1103 = vmatprep.mubr.bf16.mxu0 %v1027
    %1104 = vmatmul.mubr.bf16.gmra.mxu0 %v1026
    %v1105 = vpop.f32.mrf.mxu0
    %v1106 = vadd.f32 0.0, %v1105
    %v1107 = vpop.f32.mrf.mxu0
    %v1108 = vadd.f32 0.0, %v1107
    %v1109 = vpop.f32.mrf.mxu0
    %v1110 = vpop.f32.mrf.mxu0
    %1111 = vdwg.mxu0
    %v1112 = vadd.f32 %v1065, %v216
    %v1113 = vxor.u32 %v1112, 2147483648
    %v1114 = vmul.f32 %v1113, 1.442695
    %v1115 = vpow.pop %v1114
    %v1116 = vadd.f32 %v1115, 1.0
    %v1117 = vrcp.pop %v1116
    %v1118 = vmul.f32 1.0, %v1117
    %v1119 = vadd.f32 %v1067, %v223
    %v1120 = vxor.u32 %v1119, 2147483648
    %v1121 = vmul.f32 %v1120, 1.442695
    %v1122 = vpow.pop %v1121
    %v1123 = vadd.f32 %v1122, 1.0
    %v1124 = vrcp.pop %v1123
    %v1125 = vmul.f32 1.0, %v1124
    %v1126 = vadd.f32 %v1106, %v230
    %v1127 = vadd.f32 %v1108, %v237
    %v1128 = vmul.f32 %v1118, %v1127
    %v1129 = vadd.f32 %v1126, %v1128
    %v1130 = vtanh.pop %v1129
    %v1131 = vsub.f32 1.0, %v1125
    %v1132 = vmul.f32 %v1131, %v1130
    %v1133 = vmul.f32 %v1125, %v909
    %v1134 = vadd.f32 %v1132, %v1133
    %v1135 = vpack.c.bf16 %v1134, %v1134
    %1136 = vst [vmem:[#allocation2 + $0x4] sm:$0xf] %v1135
    %s1137 = scalar_lea.vmem [#allocation4], 48
    %v1138 = vld [vmem:[%s1137] sm:$0xff]
    %v1139 = vld [vmem:[%s1137 + $0x8] sm:$0xff]
    %v1140 = vld [vmem:[%s1137 + $0x10] sm:$0xff]
    %v1141 = vld [vmem:[#allocation2] sm:$0xf]
    %1142 = vmatprep.subr.bf16.mxu0 %v346
    %1143 = vmatpush1.bf16.msra.mxu0 %v345
    %1144 = vmatprep.subr.bf16.mxu0 %v343
    %1145 = vmatpush1.bf16.msra.mxu0 %v342
    %1146 = vmatprep.subr.bf16.mxu0 %v340
    %1147 = vmatpush1.bf16.msra.mxu0 %v339
    %1148 = vmatprep.subr.bf16.mxu0 %v337
    %1149 = vmatpush1.bf16.msra.mxu0 %v336
    %1150 = vmatprep.subr.bf16.mxu0 %v334
    %1151 = vmatpush1.bf16.msra.mxu0 %v333
    %1152 = vmatprep.subr.bf16.mxu0 %v331
    %1153 = vmatpush1.bf16.msra.mxu0 %v330
    %1154 = vmatprep.subr.bf16.mxu0 %v328
    %1155 = vmatpush1.bf16.msra.mxu0 %v327
    %1156 = vmatprep.subr.bf16.mxu0 %v325
    %1157 = vmatpush1.bf16.msra.mxu0 %v324
    %1158 = vmatprep.subr.bf16.mxu0 0
    %1159 = vmatpush2.bf16.msra.mxu0 0
    %1160 = vmatprep.subr.bf16.mxu0 0
    %1161 = vmatpush2.bf16.msra.mxu0 0
    %1162 = vmatprep.subr.bf16.mxu0 0
    %1163 = vmatpush2.bf16.msra.mxu0 0
    %1164 = vmatprep.subr.bf16.mxu0 0
    %1165 = vmatpush2.bf16.msra.mxu0 0
    %1166 = vmatprep.subr.bf16.mxu0 0
    %1167 = vmatpush2.bf16.msra.mxu0 0
    %1168 = vmatprep.subr.bf16.mxu0 0
    %1169 = vmatpush2.bf16.msra.mxu0 0
    %1170 = vmatprep.subr.bf16.mxu0 0
    %1171 = vmatpush2.bf16.msra.mxu0 0
    %1172 = vmatprep.subr.bf16.mxu0 0
    %1173 = vmatpush2.bf16.msra.mxu0 0
    %1174 = vmatprep.mubr.bf16.mxu0 0
    %1175 = vmatmul.mubr.bf16.gmra.mxu0 %v1141
    %v1176 = vpop.f32.mrf.mxu0
    %v1177 = vadd.f32 0.0, %v1176
    %v1178 = vpop.f32.mrf.mxu0
    %v1179 = vadd.f32 0.0, %v1178
    %v1180 = vpop.f32.mrf.mxu0
    %v1181 = vpop.f32.mrf.mxu0
    %1182 = vdwg.mxu0
    %1183 = vmatprep.subr.bf16.mxu0 0
    %1184 = vmatpush1.bf16.msra.mxu0 %v347
    %1185 = vmatprep.subr.bf16.mxu0 0
    %1186 = vmatpush1.bf16.msra.mxu0 %v344
    %1187 = vmatprep.subr.bf16.mxu0 0
    %1188 = vmatpush1.bf16.msra.mxu0 %v341
    %1189 = vmatprep.subr.bf16.mxu0 0
    %1190 = vmatpush1.bf16.msra.mxu0 %v338
    %1191 = vmatprep.subr.bf16.mxu0 0
    %1192 = vmatpush1.bf16.msra.mxu0 %v335
    %1193 = vmatprep.subr.bf16.mxu0 0
    %1194 = vmatpush1.bf16.msra.mxu0 %v332
    %1195 = vmatprep.subr.bf16.mxu0 0
    %1196 = vmatpush1.bf16.msra.mxu0 %v329
    %1197 = vmatprep.subr.bf16.mxu0 0
    %1198 = vmatpush1.bf16.msra.mxu0 %v326
    %1199 = vmatprep.subr.bf16.mxu0 0
    %1200 = vmatpush2.bf16.msra.mxu0 0
    %1201 = vmatprep.subr.bf16.mxu0 0
    %1202 = vmatpush2.bf16.msra.mxu0 0
    %1203 = vmatprep.subr.bf16.mxu0 0
    %1204 = vmatpush2.bf16.msra.mxu0 0
    %1205 = vmatprep.subr.bf16.mxu0 0
    %1206 = vmatpush2.bf16.msra.mxu0 0
    %1207 = vmatprep.subr.bf16.mxu0 0
    %1208 = vmatpush2.bf16.msra.mxu0 0
    %1209 = vmatprep.subr.bf16.mxu0 0
    %1210 = vmatpush2.bf16.msra.mxu0 0
    %1211 = vmatprep.subr.bf16.mxu0 0
    %1212 = vmatpush2.bf16.msra.mxu0 0
    %1213 = vmatprep.subr.bf16.mxu0 0
    %1214 = vmatpush2.bf16.msra.mxu0 0
    %1215 = vmatprep.mubr.bf16.mxu0 0
    %1216 = vmatmul.mubr.bf16.gmra.mxu0 %v1141
    %v1217 = vpop.f32.mrf.mxu0
    %v1218 = vadd.f32 0.0, %v1217
    %v1219 = vpop.f32.mrf.mxu0
    %v1220 = vpop.f32.mrf.mxu0
    %v1221 = vpop.f32.mrf.mxu0
    %1222 = vdwg.mxu0
    %v1223 = vadd.f32 %v1138, %v1177
    %v1224 = vxor.u32 %v1223, 2147483648
    %v1225 = vmul.f32 %v1224, 1.442695
    %v1226 = vpow.pop %v1225
    %v1227 = vadd.f32 %v1226, 1.0
    %v1228 = vrcp.pop %v1227
    %v1229 = vmul.f32 1.0, %v1228
    %v1230 = vadd.f32 %v1139, %v1179
    %v1231 = vxor.u32 %v1230, 2147483648
    %v1232 = vmul.f32 %v1231, 1.442695
    %v1233 = vpow.pop %v1232
    %v1234 = vadd.f32 %v1233, 1.0
    %v1235 = vrcp.pop %v1234
    %v1236 = vmul.f32 1.0, %v1235
    %v1237 = vadd.f32 %v1218, %v209
    %v1238 = vmul.f32 %v1229, %v1237
    %v1239 = vadd.f32 %v1140, %v1238
    %v1240 = vtanh.pop %v1239
    %v1241 = vsub.f32 1.0, %v1236
    %v1242 = vmul.f32 %v1241, %v1240
    %v1243 = vmul.f32 %v1236, %v1019
    %v1244 = vadd.f32 %v1242, %v1243
    %v1245 = vpack.c.bf16 %v1244, %v1244
    %1246 = vst [vmem:[#allocation2] sm:$0xf] %v1245
    %v1247 = vld [vmem:[#allocation2] sm:$0xff]
    %v1249 = vunpack.c.l.b16 %v1247
    %v1250 = vunpack.c.h.b16 %v1247
    %v1251 = vpack.c.b16 %v1249, %v1249
    %v1252 = vpack.c.b16 %v1250, %v1250
    %1255 = vmatprep.subr.bf16.mxu0 %v706
    %1256 = vmatpush1.bf16.msra.mxu0 %v705
    %1257 = vmatprep.subr.bf16.mxu0 %v702
    %1258 = vmatpush1.bf16.msra.mxu0 %v701
    %1259 = vmatprep.subr.bf16.mxu0 %v698
    %1260 = vmatpush1.bf16.msra.mxu0 %v697
    %1261 = vmatprep.subr.bf16.mxu0 %v694
    %1262 = vmatpush1.bf16.msra.mxu0 %v693
    %1263 = vmatprep.subr.bf16.mxu0 %v690
    %1264 = vmatpush1.bf16.msra.mxu0 %v689
    %1265 = vmatprep.subr.bf16.mxu0 %v686
    %1266 = vmatpush1.bf16.msra.mxu0 %v685
    %1267 = vmatprep.subr.bf16.mxu0 %v682
    %1268 = vmatpush1.bf16.msra.mxu0 %v681
    %1269 = vmatprep.subr.bf16.mxu0 %v678
    %1270 = vmatpush1.bf16.msra.mxu0 %v677
    %1271 = vmatprep.subr.bf16.mxu0 %v738
    %1272 = vmatpush2.bf16.msra.mxu0 %v737
    %1273 = vmatprep.subr.bf16.mxu0 %v734
    %1274 = vmatpush2.bf16.msra.mxu0 %v733
    %1275 = vmatprep.subr.bf16.mxu0 %v730
    %1276 = vmatpush2.bf16.msra.mxu0 %v729
    %1277 = vmatprep.subr.bf16.mxu0 %v726
    %1278 = vmatpush2.bf16.msra.mxu0 %v725
    %1279 = vmatprep.subr.bf16.mxu0 %v722
    %1280 = vmatpush2.bf16.msra.mxu0 %v721
    %1281 = vmatprep.subr.bf16.mxu0 %v718
    %1282 = vmatpush2.bf16.msra.mxu0 %v717
    %1283 = vmatprep.subr.bf16.mxu0 %v714
    %1284 = vmatpush2.bf16.msra.mxu0 %v713
    %1285 = vmatprep.subr.bf16.mxu0 %v710
    %1286 = vmatpush2.bf16.msra.mxu0 %v709
    %1287 = vmatprep.mubr.bf16.mxu0 %v1252
    %1288 = vmatmul.mubr.bf16.gmra.mxu0 %v1251
    %v1289 = vpop.f32.mrf.mxu0
    %v1290 = vadd.f32 0.0, %v1289
    %v1291 = vpop.f32.mrf.mxu0
    %v1292 = vadd.f32 0.0, %v1291
    %v1293 = vpop.f32.mrf.mxu0
    %v1294 = vpop.f32.mrf.mxu0
    %1295 = vdwg.mxu0
    %1296 = vmatprep.subr.bf16.mxu0 %v708
    %1297 = vmatpush1.bf16.msra.mxu0 %v707
    %1298 = vmatprep.subr.bf16.mxu0 %v704
    %1299 = vmatpush1.bf16.msra.mxu0 %v703
    %1300 = vmatprep.subr.bf16.mxu0 %v700
    %1301 = vmatpush1.bf16.msra.mxu0 %v699
    %1302 = vmatprep.subr.bf16.mxu0 %v696
    %1303 = vmatpush1.bf16.msra.mxu0 %v695
    %1304 = vmatprep.subr.bf16.mxu0 %v692
    %1305 = vmatpush1.bf16.msra.mxu0 %v691
    %1306 = vmatprep.subr.bf16.mxu0 %v688
    %1307 = vmatpush1.bf16.msra.mxu0 %v687
    %1308 = vmatprep.subr.bf16.mxu0 %v684
    %1309 = vmatpush1.bf16.msra.mxu0 %v683
    %1310 = vmatprep.subr.bf16.mxu0 %v680
    %1311 = vmatpush1.bf16.msra.mxu0 %v679
    %1312 = vmatprep.subr.bf16.mxu0 %v740
    %1313 = vmatpush2.bf16.msra.mxu0 %v739
    %1314 = vmatprep.subr.bf16.mxu0 %v736
    %1315 = vmatpush2.bf16.msra.mxu0 %v735
    %1316 = vmatprep.subr.bf16.mxu0 %v732
    %1317 = vmatpush2.bf16.msra.mxu0 %v731
    %1318 = vmatprep.subr.bf16.mxu0 %v728
    %1319 = vmatpush2.bf16.msra.mxu0 %v727
    %1320 = vmatprep.subr.bf16.mxu0 %v724
    %1321 = vmatpush2.bf16.msra.mxu0 %v723
    %1322 = vmatprep.subr.bf16.mxu0 %v720
    %1323 = vmatpush2.bf16.msra.mxu0 %v719
    %1324 = vmatprep.subr.bf16.mxu0 %v716
    %1325 = vmatpush2.bf16.msra.mxu0 %v715
    %1326 = vmatprep.subr.bf16.mxu0 %v712
    %1327 = vmatpush2.bf16.msra.mxu0 %v711
    %1328 = vmatprep.mubr.bf16.mxu0 %v1252
    %1329 = vmatmul.mubr.bf16.gmra.mxu0 %v1251
    %v1330 = vpop.f32.mrf.mxu0
    %v1331 = vadd.f32 0.0, %v1330
    %v1332 = vpop.f32.mrf.mxu0
    %v1333 = vadd.f32 0.0, %v1332
    %v1334 = vpop.f32.mrf.mxu0
    %v1335 = vpop.f32.mrf.mxu0
    %1336 = vdwg.mxu0
    %v1337 = vadd.f32 %v1290, %v216
    %v1338 = vxor.u32 %v1337, 2147483648
    %v1339 = vmul.f32 %v1338, 1.442695
    %v1340 = vpow.pop %v1339
    %v1341 = vadd.f32 %v1340, 1.0
    %v1342 = vrcp.pop %v1341
    %v1343 = vmul.f32 1.0, %v1342
    %v1344 = vadd.f32 %v1292, %v223
    %v1345 = vxor.u32 %v1344, 2147483648
    %v1346 = vmul.f32 %v1345, 1.442695
    %v1347 = vpow.pop %v1346
    %v1348 = vadd.f32 %v1347, 1.0
    %v1349 = vrcp.pop %v1348
    %v1350 = vmul.f32 1.0, %v1349
    %v1351 = vadd.f32 %v1331, %v230
    %v1352 = vadd.f32 %v1333, %v237
    %v1353 = vmul.f32 %v1343, %v1352
    %v1354 = vadd.f32 %v1351, %v1353
    %v1355 = vtanh.pop %v1354
    %v1356 = vsub.f32 1.0, %v1350
    %v1357 = vmul.f32 %v1356, %v1355
    %v1358 = vmul.f32 %v1350, %v1134
    %v1359 = vadd.f32 %v1357, %v1358
    %v1360 = vpack.c.bf16 %v1359, %v1359
    %1361 = vst [vmem:[#allocation2 + $0x4] sm:$0xf] %v1360
    %s1362 = scalar_lea.vmem [#allocation4], 72
    %v1363 = vld [vmem:[%s1362] sm:$0xff]
    %v1364 = vld [vmem:[%s1362 + $0x8] sm:$0xff]
    %v1365 = vld [vmem:[%s1362 + $0x10] sm:$0xff]
    %v1366 = vld [vmem:[#allocation2] sm:$0xf]
    %1367 = vmatprep.subr.bf16.mxu0 %v346
    %1368 = vmatpush1.bf16.msra.mxu0 %v345
    %1369 = vmatprep.subr.bf16.mxu0 %v343
    %1370 = vmatpush1.bf16.msra.mxu0 %v342
    %1371 = vmatprep.subr.bf16.mxu0 %v340
    %1372 = vmatpush1.bf16.msra.mxu0 %v339
    %1373 = vmatprep.subr.bf16.mxu0 %v337
    %1374 = vmatpush1.bf16.msra.mxu0 %v336
    %1375 = vmatprep.subr.bf16.mxu0 %v334
    %1376 = vmatpush1.bf16.msra.mxu0 %v333
    %1377 = vmatprep.subr.bf16.mxu0 %v331
    %1378 = vmatpush1.bf16.msra.mxu0 %v330
    %1379 = vmatprep.subr.bf16.mxu0 %v328
    %1380 = vmatpush1.bf16.msra.mxu0 %v327
    %1381 = vmatprep.subr.bf16.mxu0 %v325
    %1382 = vmatpush1.bf16.msra.mxu0 %v324
    %1383 = vmatprep.subr.bf16.mxu0 0
    %1384 = vmatpush2.bf16.msra.mxu0 0
    %1385 = vmatprep.subr.bf16.mxu0 0
    %1386 = vmatpush2.bf16.msra.mxu0 0
    %1387 = vmatprep.subr.bf16.mxu0 0
    %1388 = vmatpush2.bf16.msra.mxu0 0
    %1389 = vmatprep.subr.bf16.mxu0 0
    %1390 = vmatpush2.bf16.msra.mxu0 0
    %1391 = vmatprep.subr.bf16.mxu0 0
    %1392 = vmatpush2.bf16.msra.mxu0 0
    %1393 = vmatprep.subr.bf16.mxu0 0
    %1394 = vmatpush2.bf16.msra.mxu0 0
    %1395 = vmatprep.subr.bf16.mxu0 0
    %1396 = vmatpush2.bf16.msra.mxu0 0
    %1397 = vmatprep.subr.bf16.mxu0 0
    %1398 = vmatpush2.bf16.msra.mxu0 0
    %1399 = vmatprep.mubr.bf16.mxu0 0
    %1400 = vmatmul.mubr.bf16.gmra.mxu0 %v1366
    %v1401 = vpop.f32.mrf.mxu0
    %v1402 = vadd.f32 0.0, %v1401
    %v1403 = vpop.f32.mrf.mxu0
    %v1404 = vadd.f32 0.0, %v1403
    %v1405 = vpop.f32.mrf.mxu0
    %v1406 = vpop.f32.mrf.mxu0
    %1407 = vdwg.mxu0
    %1408 = vmatprep.subr.bf16.mxu0 0
    %1409 = vmatpush1.bf16.msra.mxu0 %v347
    %1410 = vmatprep.subr.bf16.mxu0 0
    %1411 = vmatpush1.bf16.msra.mxu0 %v344
    %1412 = vmatprep.subr.bf16.mxu0 0
    %1413 = vmatpush1.bf16.msra.mxu0 %v341
    %1414 = vmatprep.subr.bf16.mxu0 0
    %1415 = vmatpush1.bf16.msra.mxu0 %v338
    %1416 = vmatprep.subr.bf16.mxu0 0
    %1417 = vmatpush1.bf16.msra.mxu0 %v335
    %1418 = vmatprep.subr.bf16.mxu0 0
    %1419 = vmatpush1.bf16.msra.mxu0 %v332
    %1420 = vmatprep.subr.bf16.mxu0 0
    %1421 = vmatpush1.bf16.msra.mxu0 %v329
    %1422 = vmatprep.subr.bf16.mxu0 0
    %1423 = vmatpush1.bf16.msra.mxu0 %v326
    %1424 = vmatprep.subr.bf16.mxu0 0
    %1425 = vmatpush2.bf16.msra.mxu0 0
    %1426 = vmatprep.subr.bf16.mxu0 0
    %1427 = vmatpush2.bf16.msra.mxu0 0
    %1428 = vmatprep.subr.bf16.mxu0 0
    %1429 = vmatpush2.bf16.msra.mxu0 0
    %1430 = vmatprep.subr.bf16.mxu0 0
    %1431 = vmatpush2.bf16.msra.mxu0 0
    %1432 = vmatprep.subr.bf16.mxu0 0
    %1433 = vmatpush2.bf16.msra.mxu0 0
    %1434 = vmatprep.subr.bf16.mxu0 0
    %1435 = vmatpush2.bf16.msra.mxu0 0
    %1436 = vmatprep.subr.bf16.mxu0 0
    %1437 = vmatpush2.bf16.msra.mxu0 0
    %1438 = vmatprep.subr.bf16.mxu0 0
    %1439 = vmatpush2.bf16.msra.mxu0 0
    %1440 = vmatprep.mubr.bf16.mxu0 0
    %1441 = vmatmul.mubr.bf16.gmra.mxu0 %v1366
    %v1442 = vpop.f32.mrf.mxu0
    %v1443 = vadd.f32 0.0, %v1442
    %v1444 = vpop.f32.mrf.mxu0
    %v1445 = vpop.f32.mrf.mxu0
    %v1446 = vpop.f32.mrf.mxu0
    %1447 = vdwg.mxu0
    %v1448 = vadd.f32 %v1363, %v1402
    %v1449 = vxor.u32 %v1448, 2147483648
    %v1450 = vmul.f32 %v1449, 1.442695
    %v1451 = vpow.pop %v1450
    %v1452 = vadd.f32 %v1451, 1.0
    %v1453 = vrcp.pop %v1452
    %v1454 = vmul.f32 1.0, %v1453
    %v1455 = vadd.f32 %v1364, %v1404
    %v1456 = vxor.u32 %v1455, 2147483648
    %v1457 = vmul.f32 %v1456, 1.442695
    %v1458 = vpow.pop %v1457
    %v1459 = vadd.f32 %v1458, 1.0
    %v1460 = vrcp.pop %v1459
    %v1461 = vmul.f32 1.0, %v1460
    %v1462 = vadd.f32 %v1443, %v209
    %v1463 = vmul.f32 %v1454, %v1462
    %v1464 = vadd.f32 %v1365, %v1463
    %v1465 = vtanh.pop %v1464
    %v1466 = vsub.f32 1.0, %v1461
    %v1467 = vmul.f32 %v1466, %v1465
    %v1468 = vmul.f32 %v1461, %v1244
    %v1469 = vadd.f32 %v1467, %v1468
    %v1470 = vpack.c.bf16 %v1469, %v1469
    %1471 = vst [vmem:[#allocation2] sm:$0xf] %v1470
    %v1472 = vld [vmem:[#allocation2] sm:$0xff]
    %v1474 = vunpack.c.l.b16 %v1472
    %v1475 = vunpack.c.h.b16 %v1472
    %v1476 = vpack.c.b16 %v1474, %v1474
    %v1477 = vpack.c.b16 %v1475, %v1475
    %1480 = vmatprep.subr.bf16.mxu0 %v706
    %1481 = vmatpush1.bf16.msra.mxu0 %v705
    %1482 = vmatprep.subr.bf16.mxu0 %v702
    %1483 = vmatpush1.bf16.msra.mxu0 %v701
    %1484 = vmatprep.subr.bf16.mxu0 %v698
    %1485 = vmatpush1.bf16.msra.mxu0 %v697
    %1486 = vmatprep.subr.bf16.mxu0 %v694
    %1487 = vmatpush1.bf16.msra.mxu0 %v693
    %1488 = vmatprep.subr.bf16.mxu0 %v690
    %1489 = vmatpush1.bf16.msra.mxu0 %v689
    %1490 = vmatprep.subr.bf16.mxu0 %v686
    %1491 = vmatpush1.bf16.msra.mxu0 %v685
    %1492 = vmatprep.subr.bf16.mxu0 %v682
    %1493 = vmatpush1.bf16.msra.mxu0 %v681
    %1494 = vmatprep.subr.bf16.mxu0 %v678
    %1495 = vmatpush1.bf16.msra.mxu0 %v677
    %1496 = vmatprep.subr.bf16.mxu0 %v738
    %1497 = vmatpush2.bf16.msra.mxu0 %v737
    %1498 = vmatprep.subr.bf16.mxu0 %v734
    %1499 = vmatpush2.bf16.msra.mxu0 %v733
    %1500 = vmatprep.subr.bf16.mxu0 %v730
    %1501 = vmatpush2.bf16.msra.mxu0 %v729
    %1502 = vmatprep.subr.bf16.mxu0 %v726
    %1503 = vmatpush2.bf16.msra.mxu0 %v725
    %1504 = vmatprep.subr.bf16.mxu0 %v722
    %1505 = vmatpush2.bf16.msra.mxu0 %v721
    %1506 = vmatprep.subr.bf16.mxu0 %v718
    %1507 = vmatpush2.bf16.msra.mxu0 %v717
    %1508 = vmatprep.subr.bf16.mxu0 %v714
    %1509 = vmatpush2.bf16.msra.mxu0 %v713
    %1510 = vmatprep.subr.bf16.mxu0 %v710
    %1511 = vmatpush2.bf16.msra.mxu0 %v709
    %1512 = vmatprep.mubr.bf16.mxu0 %v1477
    %1513 = vmatmul.mubr.bf16.gmra.mxu0 %v1476
    %v1514 = vpop.f32.mrf.mxu0
    %v1515 = vadd.f32 0.0, %v1514
    %v1516 = vpop.f32.mrf.mxu0
    %v1517 = vadd.f32 0.0, %v1516
    %v1518 = vpop.f32.mrf.mxu0
    %v1519 = vpop.f32.mrf.mxu0
    %1520 = vdwg.mxu0
    %1521 = vmatprep.subr.bf16.mxu0 %v708
    %1522 = vmatpush1.bf16.msra.mxu0 %v707
    %1523 = vmatprep.subr.bf16.mxu0 %v704
    %1524 = vmatpush1.bf16.msra.mxu0 %v703
    %1525 = vmatprep.subr.bf16.mxu0 %v700
    %1526 = vmatpush1.bf16.msra.mxu0 %v699
    %1527 = vmatprep.subr.bf16.mxu0 %v696
    %1528 = vmatpush1.bf16.msra.mxu0 %v695
    %1529 = vmatprep.subr.bf16.mxu0 %v692
    %1530 = vmatpush1.bf16.msra.mxu0 %v691
    %1531 = vmatprep.subr.bf16.mxu0 %v688
    %1532 = vmatpush1.bf16.msra.mxu0 %v687
    %1533 = vmatprep.subr.bf16.mxu0 %v684
    %1534 = vmatpush1.bf16.msra.mxu0 %v683
    %1535 = vmatprep.subr.bf16.mxu0 %v680
    %1536 = vmatpush1.bf16.msra.mxu0 %v679
    %1537 = vmatprep.subr.bf16.mxu0 %v740
    %1538 = vmatpush2.bf16.msra.mxu0 %v739
    %1539 = vmatprep.subr.bf16.mxu0 %v736
    %1540 = vmatpush2.bf16.msra.mxu0 %v735
    %1541 = vmatprep.subr.bf16.mxu0 %v732
    %1542 = vmatpush2.bf16.msra.mxu0 %v731
    %1543 = vmatprep.subr.bf16.mxu0 %v728
    %1544 = vmatpush2.bf16.msra.mxu0 %v727
    %1545 = vmatprep.subr.bf16.mxu0 %v724
    %1546 = vmatpush2.bf16.msra.mxu0 %v723
    %1547 = vmatprep.subr.bf16.mxu0 %v720
    %1548 = vmatpush2.bf16.msra.mxu0 %v719
    %1549 = vmatprep.subr.bf16.mxu0 %v716
    %1550 = vmatpush2.bf16.msra.mxu0 %v715
    %1551 = vmatprep.subr.bf16.mxu0 %v712
    %1552 = vmatpush2.bf16.msra.mxu0 %v711
    %1553 = vmatprep.mubr.bf16.mxu0 %v1477
    %1554 = vmatmul.mubr.bf16.gmra.mxu0 %v1476
    %v1555 = vpop.f32.mrf.mxu0
    %v1556 = vadd.f32 0.0, %v1555
    %v1557 = vpop.f32.mrf.mxu0
    %v1558 = vadd.f32 0.0, %v1557
    %v1559 = vpop.f32.mrf.mxu0
    %v1560 = vpop.f32.mrf.mxu0
    %1561 = vdwg.mxu0
    %v1562 = vadd.f32 %v1515, %v216
    %v1563 = vxor.u32 %v1562, 2147483648
    %v1564 = vmul.f32 %v1563, 1.442695
    %v1565 = vpow.pop %v1564
    %v1566 = vadd.f32 %v1565, 1.0
    %v1567 = vrcp.pop %v1566
    %v1568 = vmul.f32 1.0, %v1567
    %v1569 = vadd.f32 %v1517, %v223
    %v1570 = vxor.u32 %v1569, 2147483648
    %v1571 = vmul.f32 %v1570, 1.442695
    %v1572 = vpow.pop %v1571
    %v1573 = vadd.f32 %v1572, 1.0
    %v1574 = vrcp.pop %v1573
    %v1575 = vmul.f32 1.0, %v1574
    %v1576 = vadd.f32 %v1556, %v230
    %v1577 = vadd.f32 %v1558, %v237
    %v1578 = vmul.f32 %v1568, %v1577
    %v1579 = vadd.f32 %v1576, %v1578
    %v1580 = vtanh.pop %v1579
    %v1581 = vsub.f32 1.0, %v1575
    %v1582 = vmul.f32 %v1581, %v1580
    %v1583 = vmul.f32 %v1575, %v1359
    %v1584 = vadd.f32 %v1582, %v1583
    %v1585 = vpack.c.bf16 %v1584, %v1584
    %1586 = vst [vmem:[#allocation2 + $0x4] sm:$0xf] %v1585
    %s1587 = scalar_lea.vmem [#allocation4], 96
    %v1588 = vld [vmem:[%s1587] sm:$0xff]
    %v1589 = vld [vmem:[%s1587 + $0x8] sm:$0xff]
    %v1590 = vld [vmem:[%s1587 + $0x10] sm:$0xff]
    %v1591 = vld [vmem:[#allocation2] sm:$0xf]
    %1592 = vmatprep.subr.bf16.mxu0 %v346
    %1593 = vmatpush1.bf16.msra.mxu0 %v345
    %1594 = vmatprep.subr.bf16.mxu0 %v343
    %1595 = vmatpush1.bf16.msra.mxu0 %v342
    %1596 = vmatprep.subr.bf16.mxu0 %v340
    %1597 = vmatpush1.bf16.msra.mxu0 %v339
    %1598 = vmatprep.subr.bf16.mxu0 %v337
    %1599 = vmatpush1.bf16.msra.mxu0 %v336
    %1600 = vmatprep.subr.bf16.mxu0 %v334
    %1601 = vmatpush1.bf16.msra.mxu0 %v333
    %1602 = vmatprep.subr.bf16.mxu0 %v331
    %1603 = vmatpush1.bf16.msra.mxu0 %v330
    %1604 = vmatprep.subr.bf16.mxu0 %v328
    %1605 = vmatpush1.bf16.msra.mxu0 %v327
    %1606 = vmatprep.subr.bf16.mxu0 %v325
    %1607 = vmatpush1.bf16.msra.mxu0 %v324
    %1608 = vmatprep.subr.bf16.mxu0 0
    %1609 = vmatpush2.bf16.msra.mxu0 0
    %1610 = vmatprep.subr.bf16.mxu0 0
    %1611 = vmatpush2.bf16.msra.mxu0 0
    %1612 = vmatprep.subr.bf16.mxu0 0
    %1613 = vmatpush2.bf16.msra.mxu0 0
    %1614 = vmatprep.subr.bf16.mxu0 0
    %1615 = vmatpush2.bf16.msra.mxu0 0
    %1616 = vmatprep.subr.bf16.mxu0 0
    %1617 = vmatpush2.bf16.msra.mxu0 0
    %1618 = vmatprep.subr.bf16.mxu0 0
    %1619 = vmatpush2.bf16.msra.mxu0 0
    %1620 = vmatprep.subr.bf16.mxu0 0
    %1621 = vmatpush2.bf16.msra.mxu0 0
    %1622 = vmatprep.subr.bf16.mxu0 0
    %1623 = vmatpush2.bf16.msra.mxu0 0
    %1624 = vmatprep.mubr.bf16.mxu0 0
    %1625 = vmatmul.mubr.bf16.gmra.mxu0 %v1591
    %v1626 = vpop.f32.mrf.mxu0
    %v1627 = vadd.f32 0.0, %v1626
    %v1628 = vpop.f32.mrf.mxu0
    %v1629 = vadd.f32 0.0, %v1628
    %v1630 = vpop.f32.mrf.mxu0
    %v1631 = vpop.f32.mrf.mxu0
    %1632 = vdwg.mxu0
    %1633 = vmatprep.subr.bf16.mxu0 0
    %1634 = vmatpush1.bf16.msra.mxu0 %v347
    %1635 = vmatprep.subr.bf16.mxu0 0
    %1636 = vmatpush1.bf16.msra.mxu0 %v344
    %1637 = vmatprep.subr.bf16.mxu0 0
    %1638 = vmatpush1.bf16.msra.mxu0 %v341
    %1639 = vmatprep.subr.bf16.mxu0 0
    %1640 = vmatpush1.bf16.msra.mxu0 %v338
    %1641 = vmatprep.subr.bf16.mxu0 0
    %1642 = vmatpush1.bf16.msra.mxu0 %v335
    %1643 = vmatprep.subr.bf16.mxu0 0
    %1644 = vmatpush1.bf16.msra.mxu0 %v332
    %1645 = vmatprep.subr.bf16.mxu0 0
    %1646 = vmatpush1.bf16.msra.mxu0 %v329
    %1647 = vmatprep.subr.bf16.mxu0 0
    %1648 = vmatpush1.bf16.msra.mxu0 %v326
    %1649 = vmatprep.subr.bf16.mxu0 0
    %1650 = vmatpush2.bf16.msra.mxu0 0
    %1651 = vmatprep.subr.bf16.mxu0 0
    %1652 = vmatpush2.bf16.msra.mxu0 0
    %1653 = vmatprep.subr.bf16.mxu0 0
    %1654 = vmatpush2.bf16.msra.mxu0 0
    %1655 = vmatprep.subr.bf16.mxu0 0
    %1656 = vmatpush2.bf16.msra.mxu0 0
    %1657 = vmatprep.subr.bf16.mxu0 0
    %1658 = vmatpush2.bf16.msra.mxu0 0
    %1659 = vmatprep.subr.bf16.mxu0 0
    %1660 = vmatpush2.bf16.msra.mxu0 0
    %1661 = vmatprep.subr.bf16.mxu0 0
    %1662 = vmatpush2.bf16.msra.mxu0 0
    %1663 = vmatprep.subr.bf16.mxu0 0
    %1664 = vmatpush2.bf16.msra.mxu0 0
    %1665 = vmatprep.mubr.bf16.mxu0 0
    %1666 = vmatmul.mubr.bf16.gmra.mxu0 %v1591
    %v1667 = vpop.f32.mrf.mxu0
    %v1668 = vadd.f32 0.0, %v1667
    %v1669 = vpop.f32.mrf.mxu0
    %v1670 = vpop.f32.mrf.mxu0
    %v1671 = vpop.f32.mrf.mxu0
    %1672 = vdwg.mxu0
    %v1673 = vadd.f32 %v1588, %v1627
    %v1674 = vxor.u32 %v1673, 2147483648
    %v1675 = vmul.f32 %v1674, 1.442695
    %v1676 = vpow.pop %v1675
    %v1677 = vadd.f32 %v1676, 1.0
    %v1678 = vrcp.pop %v1677
    %v1679 = vmul.f32 1.0, %v1678
    %v1680 = vadd.f32 %v1589, %v1629
    %v1681 = vxor.u32 %v1680, 2147483648
    %v1682 = vmul.f32 %v1681, 1.442695
    %v1683 = vpow.pop %v1682
    %v1684 = vadd.f32 %v1683, 1.0
    %v1685 = vrcp.pop %v1684
    %v1686 = vmul.f32 1.0, %v1685
    %v1687 = vadd.f32 %v1668, %v209
    %v1688 = vmul.f32 %v1679, %v1687
    %v1689 = vadd.f32 %v1590, %v1688
    %v1690 = vtanh.pop %v1689
    %v1691 = vsub.f32 1.0, %v1686
    %v1692 = vmul.f32 %v1691, %v1690
    %v1693 = vmul.f32 %v1686, %v1469
    %v1694 = vadd.f32 %v1692, %v1693
    %v1695 = vpack.c.bf16 %v1694, %v1694
    %1696 = vst [vmem:[#allocation2] sm:$0xf] %v1695
    %v1697 = vld [vmem:[#allocation2] sm:$0xff]
    %v1699 = vunpack.c.l.b16 %v1697
    %v1700 = vunpack.c.h.b16 %v1697
    %v1701 = vpack.c.b16 %v1699, %v1699
    %v1702 = vpack.c.b16 %v1700, %v1700
    %1705 = vmatprep.subr.bf16.mxu0 %v706
    %1706 = vmatpush1.bf16.msra.mxu0 %v705
    %1707 = vmatprep.subr.bf16.mxu0 %v702
    %1708 = vmatpush1.bf16.msra.mxu0 %v701
    %1709 = vmatprep.subr.bf16.mxu0 %v698
    %1710 = vmatpush1.bf16.msra.mxu0 %v697
    %1711 = vmatprep.subr.bf16.mxu0 %v694
    %1712 = vmatpush1.bf16.msra.mxu0 %v693
    %1713 = vmatprep.subr.bf16.mxu0 %v690
    %1714 = vmatpush1.bf16.msra.mxu0 %v689
    %1715 = vmatprep.subr.bf16.mxu0 %v686
    %1716 = vmatpush1.bf16.msra.mxu0 %v685
    %1717 = vmatprep.subr.bf16.mxu0 %v682
    %1718 = vmatpush1.bf16.msra.mxu0 %v681
    %1719 = vmatprep.subr.bf16.mxu0 %v678
    %1720 = vmatpush1.bf16.msra.mxu0 %v677
    %1721 = vmatprep.subr.bf16.mxu0 %v738
    %1722 = vmatpush2.bf16.msra.mxu0 %v737
    %1723 = vmatprep.subr.bf16.mxu0 %v734
    %1724 = vmatpush2.bf16.msra.mxu0 %v733
    %1725 = vmatprep.subr.bf16.mxu0 %v730
    %1726 = vmatpush2.bf16.msra.mxu0 %v729
    %1727 = vmatprep.subr.bf16.mxu0 %v726
    %1728 = vmatpush2.bf16.msra.mxu0 %v725
    %1729 = vmatprep.subr.bf16.mxu0 %v722
    %1730 = vmatpush2.bf16.msra.mxu0 %v721
    %1731 = vmatprep.subr.bf16.mxu0 %v718
    %1732 = vmatpush2.bf16.msra.mxu0 %v717
    %1733 = vmatprep.subr.bf16.mxu0 %v714
    %1734 = vmatpush2.bf16.msra.mxu0 %v713
    %1735 = vmatprep.subr.bf16.mxu0 %v710
    %1736 = vmatpush2.bf16.msra.mxu0 %v709
    %1737 = vmatprep.mubr.bf16.mxu0 %v1702
    %1738 = vmatmul.mubr.bf16.gmra.mxu0 %v1701
    %v1739 = vpop.f32.mrf.mxu0
    %v1740 = vadd.f32 0.0, %v1739
    %v1741 = vpop.f32.mrf.mxu0
    %v1742 = vadd.f32 0.0, %v1741
    %v1743 = vpop.f32.mrf.mxu0
    %v1744 = vpop.f32.mrf.mxu0
    %1745 = vdwg.mxu0
    %1746 = vmatprep.subr.bf16.mxu0 %v708
    %1747 = vmatpush1.bf16.msra.mxu0 %v707
    %1748 = vmatprep.subr.bf16.mxu0 %v704
    %1749 = vmatpush1.bf16.msra.mxu0 %v703
    %1750 = vmatprep.subr.bf16.mxu0 %v700
    %1751 = vmatpush1.bf16.msra.mxu0 %v699
    %1752 = vmatprep.subr.bf16.mxu0 %v696
    %1753 = vmatpush1.bf16.msra.mxu0 %v695
    %1754 = vmatprep.subr.bf16.mxu0 %v692
    %1755 = vmatpush1.bf16.msra.mxu0 %v691
    %1756 = vmatprep.subr.bf16.mxu0 %v688
    %1757 = vmatpush1.bf16.msra.mxu0 %v687
    %1758 = vmatprep.subr.bf16.mxu0 %v684
    %1759 = vmatpush1.bf16.msra.mxu0 %v683
    %1760 = vmatprep.subr.bf16.mxu0 %v680
    %1761 = vmatpush1.bf16.msra.mxu0 %v679
    %1762 = vmatprep.subr.bf16.mxu0 %v740
    %1763 = vmatpush2.bf16.msra.mxu0 %v739
    %1764 = vmatprep.subr.bf16.mxu0 %v736
    %1765 = vmatpush2.bf16.msra.mxu0 %v735
    %1766 = vmatprep.subr.bf16.mxu0 %v732
    %1767 = vmatpush2.bf16.msra.mxu0 %v731
    %1768 = vmatprep.subr.bf16.mxu0 %v728
    %1769 = vmatpush2.bf16.msra.mxu0 %v727
    %1770 = vmatprep.subr.bf16.mxu0 %v724
    %1771 = vmatpush2.bf16.msra.mxu0 %v723
    %1772 = vmatprep.subr.bf16.mxu0 %v720
    %1773 = vmatpush2.bf16.msra.mxu0 %v719
    %1774 = vmatprep.subr.bf16.mxu0 %v716
    %1775 = vmatpush2.bf16.msra.mxu0 %v715
    %1776 = vmatprep.subr.bf16.mxu0 %v712
    %1777 = vmatpush2.bf16.msra.mxu0 %v711
    %1778 = vmatprep.mubr.bf16.mxu0 %v1702
    %1779 = vmatmul.mubr.bf16.gmra.mxu0 %v1701
    %v1780 = vpop.f32.mrf.mxu0
    %v1781 = vadd.f32 0.0, %v1780
    %v1782 = vpop.f32.mrf.mxu0
    %v1783 = vadd.f32 0.0, %v1782
    %v1784 = vpop.f32.mrf.mxu0
    %v1785 = vpop.f32.mrf.mxu0
    %1786 = vdwg.mxu0
    %v1787 = vadd.f32 %v1740, %v216
    %v1788 = vxor.u32 %v1787, 2147483648
    %v1789 = vmul.f32 %v1788, 1.442695
    %v1790 = vpow.pop %v1789
    %v1791 = vadd.f32 %v1790, 1.0
    %v1792 = vrcp.pop %v1791
    %v1793 = vmul.f32 1.0, %v1792
    %v1794 = vadd.f32 %v1742, %v223
    %v1795 = vxor.u32 %v1794, 2147483648
    %v1796 = vmul.f32 %v1795, 1.442695
    %v1797 = vpow.pop %v1796
    %v1798 = vadd.f32 %v1797, 1.0
    %v1799 = vrcp.pop %v1798
    %v1800 = vmul.f32 1.0, %v1799
    %v1801 = vadd.f32 %v1781, %v230
    %v1802 = vadd.f32 %v1783, %v237
    %v1803 = vmul.f32 %v1793, %v1802
    %v1804 = vadd.f32 %v1801, %v1803
    %v1805 = vtanh.pop %v1804
    %v1806 = vsub.f32 1.0, %v1800
    %v1807 = vmul.f32 %v1806, %v1805
    %v1808 = vmul.f32 %v1800, %v1584
    %v1809 = vadd.f32 %v1807, %v1808
    %v1810 = vpack.c.bf16 %v1809, %v1809
    %1811 = vst [vmem:[#allocation2 + $0x4] sm:$0xf] %v1810
    %s1812 = scalar_lea.vmem [#allocation4], 120
    %v1813 = vld [vmem:[%s1812] sm:$0xff]
    %v1814 = vld [vmem:[%s1812 + $0x8] sm:$0xff]
    %v1815 = vld [vmem:[%s1812 + $0x10] sm:$0xff]
    %v1816 = vld [vmem:[#allocation2] sm:$0xf]
    %1817 = vmatprep.subr.bf16.mxu0 %v346
    %1818 = vmatpush1.bf16.msra.mxu0 %v345
    %1819 = vmatprep.subr.bf16.mxu0 %v343
    %1820 = vmatpush1.bf16.msra.mxu0 %v342
    %1821 = vmatprep.subr.bf16.mxu0 %v340
    %1822 = vmatpush1.bf16.msra.mxu0 %v339
    %1823 = vmatprep.subr.bf16.mxu0 %v337
    %1824 = vmatpush1.bf16.msra.mxu0 %v336
    %1825 = vmatprep.subr.bf16.mxu0 %v334
    %1826 = vmatpush1.bf16.msra.mxu0 %v333
    %1827 = vmatprep.subr.bf16.mxu0 %v331
    %1828 = vmatpush1.bf16.msra.mxu0 %v330
    %1829 = vmatprep.subr.bf16.mxu0 %v328
    %1830 = vmatpush1.bf16.msra.mxu0 %v327
    %1831 = vmatprep.subr.bf16.mxu0 %v325
    %1832 = vmatpush1.bf16.msra.mxu0 %v324
    %1833 = vmatprep.subr.bf16.mxu0 0
    %1834 = vmatpush2.bf16.msra.mxu0 0
    %1835 = vmatprep.subr.bf16.mxu0 0
    %1836 = vmatpush2.bf16.msra.mxu0 0
    %1837 = vmatprep.subr.bf16.mxu0 0
    %1838 = vmatpush2.bf16.msra.mxu0 0
    %1839 = vmatprep.subr.bf16.mxu0 0
    %1840 = vmatpush2.bf16.msra.mxu0 0
    %1841 = vmatprep.subr.bf16.mxu0 0
    %1842 = vmatpush2.bf16.msra.mxu0 0
    %1843 = vmatprep.subr.bf16.mxu0 0
    %1844 = vmatpush2.bf16.msra.mxu0 0
    %1845 = vmatprep.subr.bf16.mxu0 0
    %1846 = vmatpush2.bf16.msra.mxu0 0
    %1847 = vmatprep.subr.bf16.mxu0 0
    %1848 = vmatpush2.bf16.msra.mxu0 0
    %1849 = vmatprep.mubr.bf16.mxu0 0
    %1850 = vmatmul.mubr.bf16.gmra.mxu0 %v1816
    %v1851 = vpop.f32.mrf.mxu0
    %v1852 = vadd.f32 0.0, %v1851
    %v1853 = vpop.f32.mrf.mxu0
    %v1854 = vadd.f32 0.0, %v1853
    %v1855 = vpop.f32.mrf.mxu0
    %v1856 = vpop.f32.mrf.mxu0
    %1857 = vdwg.mxu0
    %1858 = vmatprep.subr.bf16.mxu0 0
    %1859 = vmatpush1.bf16.msra.mxu0 %v347
    %1860 = vmatprep.subr.bf16.mxu0 0
    %1861 = vmatpush1.bf16.msra.mxu0 %v344
    %1862 = vmatprep.subr.bf16.mxu0 0
    %1863 = vmatpush1.bf16.msra.mxu0 %v341
    %1864 = vmatprep.subr.bf16.mxu0 0
    %1865 = vmatpush1.bf16.msra.mxu0 %v338
    %1866 = vmatprep.subr.bf16.mxu0 0
    %1867 = vmatpush1.bf16.msra.mxu0 %v335
    %1868 = vmatprep.subr.bf16.mxu0 0
    %1869 = vmatpush1.bf16.msra.mxu0 %v332
    %1870 = vmatprep.subr.bf16.mxu0 0
    %1871 = vmatpush1.bf16.msra.mxu0 %v329
    %1872 = vmatprep.subr.bf16.mxu0 0
    %1873 = vmatpush1.bf16.msra.mxu0 %v326
    %1874 = vmatprep.subr.bf16.mxu0 0
    %1875 = vmatpush2.bf16.msra.mxu0 0
    %1876 = vmatprep.subr.bf16.mxu0 0
    %1877 = vmatpush2.bf16.msra.mxu0 0
    %1878 = vmatprep.subr.bf16.mxu0 0
    %1879 = vmatpush2.bf16.msra.mxu0 0
    %1880 = vmatprep.subr.bf16.mxu0 0
    %1881 = vmatpush2.bf16.msra.mxu0 0
    %1882 = vmatprep.subr.bf16.mxu0 0
    %1883 = vmatpush2.bf16.msra.mxu0 0
    %1884 = vmatprep.subr.bf16.mxu0 0
    %1885 = vmatpush2.bf16.msra.mxu0 0
    %1886 = vmatprep.subr.bf16.mxu0 0
    %1887 = vmatpush2.bf16.msra.mxu0 0
    %1888 = vmatprep.subr.bf16.mxu0 0
    %1889 = vmatpush2.bf16.msra.mxu0 0
    %1890 = vmatprep.mubr.bf16.mxu0 0
    %1891 = vmatmul.mubr.bf16.gmra.mxu0 %v1816
    %v1892 = vpop.f32.mrf.mxu0
    %v1893 = vadd.f32 0.0, %v1892
    %v1894 = vpop.f32.mrf.mxu0
    %v1895 = vpop.f32.mrf.mxu0
    %v1896 = vpop.f32.mrf.mxu0
    %1897 = vdwg.mxu0
    %v1898 = vadd.f32 %v1813, %v1852
    %v1899 = vxor.u32 %v1898, 2147483648
    %v1900 = vmul.f32 %v1899, 1.442695
    %v1901 = vpow.pop %v1900
    %v1902 = vadd.f32 %v1901, 1.0
    %v1903 = vrcp.pop %v1902
    %v1904 = vmul.f32 1.0, %v1903
    %v1905 = vadd.f32 %v1814, %v1854
    %v1906 = vxor.u32 %v1905, 2147483648
    %v1907 = vmul.f32 %v1906, 1.442695
    %v1908 = vpow.pop %v1907
    %v1909 = vadd.f32 %v1908, 1.0
    %v1910 = vrcp.pop %v1909
    %v1911 = vmul.f32 1.0, %v1910
    %v1912 = vadd.f32 %v1893, %v209
    %v1913 = vmul.f32 %v1904, %v1912
    %v1914 = vadd.f32 %v1815, %v1913
    %v1915 = vtanh.pop %v1914
    %v1916 = vsub.f32 1.0, %v1911
    %v1917 = vmul.f32 %v1916, %v1915
    %v1918 = vmul.f32 %v1911, %v1694
    %v1919 = vadd.f32 %v1917, %v1918
    %v1920 = vpack.c.bf16 %v1919, %v1919
    %1921 = vst [vmem:[#allocation2] sm:$0xf] %v1920
    %v1922 = vld [vmem:[#allocation2] sm:$0xff]
    %v1924 = vunpack.c.l.b16 %v1922
    %v1925 = vunpack.c.h.b16 %v1922
    %v1926 = vpack.c.b16 %v1924, %v1924
    %v1927 = vpack.c.b16 %v1925, %v1925
    %1930 = vmatprep.subr.bf16.mxu0 %v706
    %1931 = vmatpush1.bf16.msra.mxu0 %v705
    %1932 = vmatprep.subr.bf16.mxu0 %v702
    %1933 = vmatpush1.bf16.msra.mxu0 %v701
    %1934 = vmatprep.subr.bf16.mxu0 %v698
    %1935 = vmatpush1.bf16.msra.mxu0 %v697
    %1936 = vmatprep.subr.bf16.mxu0 %v694
    %1937 = vmatpush1.bf16.msra.mxu0 %v693
    %1938 = vmatprep.subr.bf16.mxu0 %v690
    %1939 = vmatpush1.bf16.msra.mxu0 %v689
    %1940 = vmatprep.subr.bf16.mxu0 %v686
    %1941 = vmatpush1.bf16.msra.mxu0 %v685
    %1942 = vmatprep.subr.bf16.mxu0 %v682
    %1943 = vmatpush1.bf16.msra.mxu0 %v681
    %1944 = vmatprep.subr.bf16.mxu0 %v678
    %1945 = vmatpush1.bf16.msra.mxu0 %v677
    %1946 = vmatprep.subr.bf16.mxu0 %v738
    %1947 = vmatpush2.bf16.msra.mxu0 %v737
    %1948 = vmatprep.subr.bf16.mxu0 %v734
    %1949 = vmatpush2.bf16.msra.mxu0 %v733
    %1950 = vmatprep.subr.bf16.mxu0 %v730
    %1951 = vmatpush2.bf16.msra.mxu0 %v729
    %1952 = vmatprep.subr.bf16.mxu0 %v726
    %1953 = vmatpush2.bf16.msra.mxu0 %v725
    %1954 = vmatprep.subr.bf16.mxu0 %v722
    %1955 = vmatpush2.bf16.msra.mxu0 %v721
    %1956 = vmatprep.subr.bf16.mxu0 %v718
    %1957 = vmatpush2.bf16.msra.mxu0 %v717
    %1958 = vmatprep.subr.bf16.mxu0 %v714
    %1959 = vmatpush2.bf16.msra.mxu0 %v713
    %1960 = vmatprep.subr.bf16.mxu0 %v710
    %1961 = vmatpush2.bf16.msra.mxu0 %v709
    %1962 = vmatprep.mubr.bf16.mxu0 %v1927
    %1963 = vmatmul.mubr.bf16.gmra.mxu0 %v1926
    %v1964 = vpop.f32.mrf.mxu0
    %v1965 = vadd.f32 0.0, %v1964
    %v1966 = vpop.f32.mrf.mxu0
    %v1967 = vadd.f32 0.0, %v1966
    %v1968 = vpop.f32.mrf.mxu0
    %v1969 = vpop.f32.mrf.mxu0
    %1970 = vdwg.mxu0
    %1971 = vmatprep.subr.bf16.mxu0 %v708
    %1972 = vmatpush1.bf16.msra.mxu0 %v707
    %1973 = vmatprep.subr.bf16.mxu0 %v704
    %1974 = vmatpush1.bf16.msra.mxu0 %v703
    %1975 = vmatprep.subr.bf16.mxu0 %v700
    %1976 = vmatpush1.bf16.msra.mxu0 %v699
    %1977 = vmatprep.subr.bf16.mxu0 %v696
    %1978 = vmatpush1.bf16.msra.mxu0 %v695
    %1979 = vmatprep.subr.bf16.mxu0 %v692
    %1980 = vmatpush1.bf16.msra.mxu0 %v691
    %1981 = vmatprep.subr.bf16.mxu0 %v688
    %1982 = vmatpush1.bf16.msra.mxu0 %v687
    %1983 = vmatprep.subr.bf16.mxu0 %v684
    %1984 = vmatpush1.bf16.msra.mxu0 %v683
    %1985 = vmatprep.subr.bf16.mxu0 %v680
    %1986 = vmatpush1.bf16.msra.mxu0 %v679
    %1987 = vmatprep.subr.bf16.mxu0 %v740
    %1988 = vmatpush2.bf16.msra.mxu0 %v739
    %1989 = vmatprep.subr.bf16.mxu0 %v736
    %1990 = vmatpush2.bf16.msra.mxu0 %v735
    %1991 = vmatprep.subr.bf16.mxu0 %v732
    %1992 = vmatpush2.bf16.msra.mxu0 %v731
    %1993 = vmatprep.subr.bf16.mxu0 %v728
    %1994 = vmatpush2.bf16.msra.mxu0 %v727
    %1995 = vmatprep.subr.bf16.mxu0 %v724
    %1996 = vmatpush2.bf16.msra.mxu0 %v723
    %1997 = vmatprep.subr.bf16.mxu0 %v720
    %1998 = vmatpush2.bf16.msra.mxu0 %v719
    %1999 = vmatprep.subr.bf16.mxu0 %v716
    %2000 = vmatpush2.bf16.msra.mxu0 %v715
    %2001 = vmatprep.subr.bf16.mxu0 %v712
    %2002 = vmatpush2.bf16.msra.mxu0 %v711
    %2003 = vmatprep.mubr.bf16.mxu0 %v1927
    %2004 = vmatmul.mubr.bf16.gmra.mxu0 %v1926
    %v2005 = vpop.f32.mrf.mxu0
    %v2006 = vadd.f32 0.0, %v2005
    %v2007 = vpop.f32.mrf.mxu0
    %v2008 = vadd.f32 0.0, %v2007
    %v2009 = vpop.f32.mrf.mxu0
    %v2010 = vpop.f32.mrf.mxu0
    %2011 = vdwg.mxu0
    %v2012 = vadd.f32 %v1965, %v216
    %v2013 = vxor.u32 %v2012, 2147483648
    %v2014 = vmul.f32 %v2013, 1.442695
    %v2015 = vpow.pop %v2014
    %v2016 = vadd.f32 %v2015, 1.0
    %v2017 = vrcp.pop %v2016
    %v2018 = vmul.f32 1.0, %v2017
    %v2019 = vadd.f32 %v1967, %v223
    %v2020 = vxor.u32 %v2019, 2147483648
    %v2021 = vmul.f32 %v2020, 1.442695
    %v2022 = vpow.pop %v2021
    %v2023 = vadd.f32 %v2022, 1.0
    %v2024 = vrcp.pop %v2023
    %v2025 = vmul.f32 1.0, %v2024
    %v2026 = vadd.f32 %v2006, %v230
    %v2027 = vadd.f32 %v2008, %v237
    %v2028 = vmul.f32 %v2018, %v2027
    %v2029 = vadd.f32 %v2026, %v2028
    %v2030 = vtanh.pop %v2029
    %v2031 = vsub.f32 1.0, %v2025
    %v2032 = vmul.f32 %v2031, %v2030
    %v2033 = vmul.f32 %v2025, %v1809
    %v2034 = vadd.f32 %v2032, %v2033
    %v2035 = vpack.c.bf16 %v2034, %v2034
    %2036 = vst [vmem:[#allocation2 + $0x4] sm:$0xf] %v2035
    %s2037 = scalar_lea.vmem [#allocation4], 144
    %v2038 = vld [vmem:[%s2037] sm:$0xff]
    %v2039 = vld [vmem:[%s2037 + $0x8] sm:$0xff]
    %v2040 = vld [vmem:[%s2037 + $0x10] sm:$0xff]
    %v2041 = vld [vmem:[#allocation2] sm:$0xf]
    %2042 = vmatprep.subr.bf16.mxu0 %v346
    %2043 = vmatpush1.bf16.msra.mxu0 %v345
    %2044 = vmatprep.subr.bf16.mxu0 %v343
    %2045 = vmatpush1.bf16.msra.mxu0 %v342
    %2046 = vmatprep.subr.bf16.mxu0 %v340
    %2047 = vmatpush1.bf16.msra.mxu0 %v339
    %2048 = vmatprep.subr.bf16.mxu0 %v337
    %2049 = vmatpush1.bf16.msra.mxu0 %v336
    %2050 = vmatprep.subr.bf16.mxu0 %v334
    %2051 = vmatpush1.bf16.msra.mxu0 %v333
    %2052 = vmatprep.subr.bf16.mxu0 %v331
    %2053 = vmatpush1.bf16.msra.mxu0 %v330
    %2054 = vmatprep.subr.bf16.mxu0 %v328
    %2055 = vmatpush1.bf16.msra.mxu0 %v327
    %2056 = vmatprep.subr.bf16.mxu0 %v325
    %2057 = vmatpush1.bf16.msra.mxu0 %v324
    %2058 = vmatprep.subr.bf16.mxu0 0
    %2059 = vmatpush2.bf16.msra.mxu0 0
    %2060 = vmatprep.subr.bf16.mxu0 0
    %2061 = vmatpush2.bf16.msra.mxu0 0
    %2062 = vmatprep.subr.bf16.mxu0 0
    %2063 = vmatpush2.bf16.msra.mxu0 0
    %2064 = vmatprep.subr.bf16.mxu0 0
    %2065 = vmatpush2.bf16.msra.mxu0 0
    %2066 = vmatprep.subr.bf16.mxu0 0
    %2067 = vmatpush2.bf16.msra.mxu0 0
    %2068 = vmatprep.subr.bf16.mxu0 0
    %2069 = vmatpush2.bf16.msra.mxu0 0
    %2070 = vmatprep.subr.bf16.mxu0 0
    %2071 = vmatpush2.bf16.msra.mxu0 0
    %2072 = vmatprep.subr.bf16.mxu0 0
    %2073 = vmatpush2.bf16.msra.mxu0 0
    %2074 = vmatprep.mubr.bf16.mxu0 0
    %2075 = vmatmul.mubr.bf16.gmra.mxu0 %v2041
    %v2076 = vpop.f32.mrf.mxu0
    %v2077 = vadd.f32 0.0, %v2076
    %v2078 = vpop.f32.mrf.mxu0
    %v2079 = vadd.f32 0.0, %v2078
    %v2080 = vpop.f32.mrf.mxu0
    %v2081 = vpop.f32.mrf.mxu0
    %2082 = vdwg.mxu0
    %2083 = vmatprep.subr.bf16.mxu0 0
    %2084 = vmatpush1.bf16.msra.mxu0 %v347
    %2085 = vmatprep.subr.bf16.mxu0 0
    %2086 = vmatpush1.bf16.msra.mxu0 %v344
    %2087 = vmatprep.subr.bf16.mxu0 0
    %2088 = vmatpush1.bf16.msra.mxu0 %v341
    %2089 = vmatprep.subr.bf16.mxu0 0
    %2090 = vmatpush1.bf16.msra.mxu0 %v338
    %2091 = vmatprep.subr.bf16.mxu0 0
    %2092 = vmatpush1.bf16.msra.mxu0 %v335
    %2093 = vmatprep.subr.bf16.mxu0 0
    %2094 = vmatpush1.bf16.msra.mxu0 %v332
    %2095 = vmatprep.subr.bf16.mxu0 0
    %2096 = vmatpush1.bf16.msra.mxu0 %v329
    %2097 = vmatprep.subr.bf16.mxu0 0
    %2098 = vmatpush1.bf16.msra.mxu0 %v326
    %2099 = vmatprep.subr.bf16.mxu0 0
    %2100 = vmatpush2.bf16.msra.mxu0 0
    %2101 = vmatprep.subr.bf16.mxu0 0
    %2102 = vmatpush2.bf16.msra.mxu0 0
    %2103 = vmatprep.subr.bf16.mxu0 0
    %2104 = vmatpush2.bf16.msra.mxu0 0
    %2105 = vmatprep.subr.bf16.mxu0 0
    %2106 = vmatpush2.bf16.msra.mxu0 0
    %2107 = vmatprep.subr.bf16.mxu0 0
    %2108 = vmatpush2.bf16.msra.mxu0 0
    %2109 = vmatprep.subr.bf16.mxu0 0
    %2110 = vmatpush2.bf16.msra.mxu0 0
    %2111 = vmatprep.subr.bf16.mxu0 0
    %2112 = vmatpush2.bf16.msra.mxu0 0
    %2113 = vmatprep.subr.bf16.mxu0 0
    %2114 = vmatpush2.bf16.msra.mxu0 0
    %2115 = vmatprep.mubr.bf16.mxu0 0
    %2116 = vmatmul.mubr.bf16.gmra.mxu0 %v2041
    %v2117 = vpop.f32.mrf.mxu0
    %v2118 = vadd.f32 0.0, %v2117
    %v2119 = vpop.f32.mrf.mxu0
    %v2120 = vpop.f32.mrf.mxu0
    %v2121 = vpop.f32.mrf.mxu0
    %2122 = vdwg.mxu0
    %v2123 = vadd.f32 %v2038, %v2077
    %v2124 = vxor.u32 %v2123, 2147483648
    %v2125 = vmul.f32 %v2124, 1.442695
    %v2126 = vpow.pop %v2125
    %v2127 = vadd.f32 %v2126, 1.0
    %v2128 = vrcp.pop %v2127
    %v2129 = vmul.f32 1.0, %v2128
    %v2130 = vadd.f32 %v2039, %v2079
    %v2131 = vxor.u32 %v2130, 2147483648
    %v2132 = vmul.f32 %v2131, 1.442695
    %v2133 = vpow.pop %v2132
    %v2134 = vadd.f32 %v2133, 1.0
    %v2135 = vrcp.pop %v2134
    %v2136 = vmul.f32 1.0, %v2135
    %v2137 = vadd.f32 %v2118, %v209
    %v2138 = vmul.f32 %v2129, %v2137
    %v2139 = vadd.f32 %v2040, %v2138
    %v2140 = vtanh.pop %v2139
    %v2141 = vsub.f32 1.0, %v2136
    %v2142 = vmul.f32 %v2141, %v2140
    %v2143 = vmul.f32 %v2136, %v1919
    %v2144 = vadd.f32 %v2142, %v2143
    %v2145 = vpack.c.bf16 %v2144, %v2144
    %2146 = vst [vmem:[#allocation2] sm:$0xf] %v2145
    %v2147 = vld [vmem:[#allocation2] sm:$0xff]
    %v2149 = vunpack.c.l.b16 %v2147
    %v2150 = vunpack.c.h.b16 %v2147
    %v2151 = vpack.c.b16 %v2149, %v2149
    %v2152 = vpack.c.b16 %v2150, %v2150
    %2155 = vmatprep.subr.bf16.mxu0 %v706
    %2156 = vmatpush1.bf16.msra.mxu0 %v705
    %2157 = vmatprep.subr.bf16.mxu0 %v702
    %2158 = vmatpush1.bf16.msra.mxu0 %v701
    %2159 = vmatprep.subr.bf16.mxu0 %v698
    %2160 = vmatpush1.bf16.msra.mxu0 %v697
    %2161 = vmatprep.subr.bf16.mxu0 %v694
    %2162 = vmatpush1.bf16.msra.mxu0 %v693
    %2163 = vmatprep.subr.bf16.mxu0 %v690
    %2164 = vmatpush1.bf16.msra.mxu0 %v689
    %2165 = vmatprep.subr.bf16.mxu0 %v686
    %2166 = vmatpush1.bf16.msra.mxu0 %v685
    %2167 = vmatprep.subr.bf16.mxu0 %v682
    %2168 = vmatpush1.bf16.msra.mxu0 %v681
    %2169 = vmatprep.subr.bf16.mxu0 %v678
    %2170 = vmatpush1.bf16.msra.mxu0 %v677
    %2171 = vmatprep.subr.bf16.mxu0 %v738
    %2172 = vmatpush2.bf16.msra.mxu0 %v737
    %2173 = vmatprep.subr.bf16.mxu0 %v734
    %2174 = vmatpush2.bf16.msra.mxu0 %v733
    %2175 = vmatprep.subr.bf16.mxu0 %v730
    %2176 = vmatpush2.bf16.msra.mxu0 %v729
    %2177 = vmatprep.subr.bf16.mxu0 %v726
    %2178 = vmatpush2.bf16.msra.mxu0 %v725
    %2179 = vmatprep.subr.bf16.mxu0 %v722
    %2180 = vmatpush2.bf16.msra.mxu0 %v721
    %2181 = vmatprep.subr.bf16.mxu0 %v718
    %2182 = vmatpush2.bf16.msra.mxu0 %v717
    %2183 = vmatprep.subr.bf16.mxu0 %v714
    %2184 = vmatpush2.bf16.msra.mxu0 %v713
    %2185 = vmatprep.subr.bf16.mxu0 %v710
    %2186 = vmatpush2.bf16.msra.mxu0 %v709
    %2187 = vmatprep.mubr.bf16.mxu0 %v2152
    %2188 = vmatmul.mubr.bf16.gmra.mxu0 %v2151
    %v2189 = vpop.f32.mrf.mxu0
    %v2190 = vadd.f32 0.0, %v2189
    %v2191 = vpop.f32.mrf.mxu0
    %v2192 = vadd.f32 0.0, %v2191
    %v2193 = vpop.f32.mrf.mxu0
    %v2194 = vpop.f32.mrf.mxu0
    %2195 = vdwg.mxu0
    %2196 = vmatprep.subr.bf16.mxu0 %v708
    %2197 = vmatpush1.bf16.msra.mxu0 %v707
    %2198 = vmatprep.subr.bf16.mxu0 %v704
    %2199 = vmatpush1.bf16.msra.mxu0 %v703
    %2200 = vmatprep.subr.bf16.mxu0 %v700
    %2201 = vmatpush1.bf16.msra.mxu0 %v699
    %2202 = vmatprep.subr.bf16.mxu0 %v696
    %2203 = vmatpush1.bf16.msra.mxu0 %v695
    %2204 = vmatprep.subr.bf16.mxu0 %v692
    %2205 = vmatpush1.bf16.msra.mxu0 %v691
    %2206 = vmatprep.subr.bf16.mxu0 %v688
    %2207 = vmatpush1.bf16.msra.mxu0 %v687
    %2208 = vmatprep.subr.bf16.mxu0 %v684
    %2209 = vmatpush1.bf16.msra.mxu0 %v683
    %2210 = vmatprep.subr.bf16.mxu0 %v680
    %2211 = vmatpush1.bf16.msra.mxu0 %v679
    %2212 = vmatprep.subr.bf16.mxu0 %v740
    %2213 = vmatpush2.bf16.msra.mxu0 %v739
    %2214 = vmatprep.subr.bf16.mxu0 %v736
    %2215 = vmatpush2.bf16.msra.mxu0 %v735
    %2216 = vmatprep.subr.bf16.mxu0 %v732
    %2217 = vmatpush2.bf16.msra.mxu0 %v731
    %2218 = vmatprep.subr.bf16.mxu0 %v728
    %2219 = vmatpush2.bf16.msra.mxu0 %v727
    %2220 = vmatprep.subr.bf16.mxu0 %v724
    %2221 = vmatpush2.bf16.msra.mxu0 %v723
    %2222 = vmatprep.subr.bf16.mxu0 %v720
    %2223 = vmatpush2.bf16.msra.mxu0 %v719
    %2224 = vmatprep.subr.bf16.mxu0 %v716
    %2225 = vmatpush2.bf16.msra.mxu0 %v715
    %2226 = vmatprep.subr.bf16.mxu0 %v712
    %2227 = vmatpush2.bf16.msra.mxu0 %v711
    %2228 = vmatprep.mubr.bf16.mxu0 %v2152
    %2229 = vmatmul.mubr.bf16.gmra.mxu0 %v2151
    %v2230 = vpop.f32.mrf.mxu0
    %v2231 = vadd.f32 0.0, %v2230
    %v2232 = vpop.f32.mrf.mxu0
    %v2233 = vadd.f32 0.0, %v2232
    %v2234 = vpop.f32.mrf.mxu0
    %v2235 = vpop.f32.mrf.mxu0
    %2236 = vdwg.mxu0
    %v2237 = vadd.f32 %v2190, %v216
    %v2238 = vxor.u32 %v2237, 2147483648
    %v2239 = vmul.f32 %v2238, 1.442695
    %v2240 = vpow.pop %v2239
    %v2241 = vadd.f32 %v2240, 1.0
    %v2242 = vrcp.pop %v2241
    %v2243 = vmul.f32 1.0, %v2242
    %v2244 = vadd.f32 %v2192, %v223
    %v2245 = vxor.u32 %v2244, 2147483648
    %v2246 = vmul.f32 %v2245, 1.442695
    %v2247 = vpow.pop %v2246
    %v2248 = vadd.f32 %v2247, 1.0
    %v2249 = vrcp.pop %v2248
    %v2250 = vmul.f32 1.0, %v2249
    %v2251 = vadd.f32 %v2231, %v230
    %v2252 = vadd.f32 %v2233, %v237
    %v2253 = vmul.f32 %v2243, %v2252
    %v2254 = vadd.f32 %v2251, %v2253
    %v2255 = vtanh.pop %v2254
    %v2256 = vsub.f32 1.0, %v2250
    %v2257 = vmul.f32 %v2256, %v2255
    %v2258 = vmul.f32 %v2250, %v2034
    %v2259 = vadd.f32 %v2257, %v2258
    %v2260 = vpack.c.bf16 %v2259, %v2259
    %2261 = vst [vmem:[#allocation2 + $0x4] sm:$0xf] %v2260
    %s2262 = scalar_lea.vmem [#allocation4], 168
    %v2263 = vld [vmem:[%s2262] sm:$0xff]
    %v2264 = vld [vmem:[%s2262 + $0x8] sm:$0xff]
    %v2265 = vld [vmem:[%s2262 + $0x10] sm:$0xff]
    %v2266 = vld [vmem:[#allocation2] sm:$0xf]
    %2267 = vmatprep.subr.bf16.mxu0 %v346
    %2268 = vmatpush1.bf16.msra.mxu0 %v345
    %2269 = vmatprep.subr.bf16.mxu0 %v343
    %2270 = vmatpush1.bf16.msra.mxu0 %v342
    %2271 = vmatprep.subr.bf16.mxu0 %v340
    %2272 = vmatpush1.bf16.msra.mxu0 %v339
    %2273 = vmatprep.subr.bf16.mxu0 %v337
    %2274 = vmatpush1.bf16.msra.mxu0 %v336
    %2275 = vmatprep.subr.bf16.mxu0 %v334
    %2276 = vmatpush1.bf16.msra.mxu0 %v333
    %2277 = vmatprep.subr.bf16.mxu0 %v331
    %2278 = vmatpush1.bf16.msra.mxu0 %v330
    %2279 = vmatprep.subr.bf16.mxu0 %v328
    %2280 = vmatpush1.bf16.msra.mxu0 %v327
    %2281 = vmatprep.subr.bf16.mxu0 %v325
    %2282 = vmatpush1.bf16.msra.mxu0 %v324
    %2283 = vmatprep.subr.bf16.mxu0 0
    %2284 = vmatpush2.bf16.msra.mxu0 0
    %2285 = vmatprep.subr.bf16.mxu0 0
    %2286 = vmatpush2.bf16.msra.mxu0 0
    %2287 = vmatprep.subr.bf16.mxu0 0
    %2288 = vmatpush2.bf16.msra.mxu0 0
    %2289 = vmatprep.subr.bf16.mxu0 0
    %2290 = vmatpush2.bf16.msra.mxu0 0
    %2291 = vmatprep.subr.bf16.mxu0 0
    %2292 = vmatpush2.bf16.msra.mxu0 0
    %2293 = vmatprep.subr.bf16.mxu0 0
    %2294 = vmatpush2.bf16.msra.mxu0 0
    %2295 = vmatprep.subr.bf16.mxu0 0
    %2296 = vmatpush2.bf16.msra.mxu0 0
    %2297 = vmatprep.subr.bf16.mxu0 0
    %2298 = vmatpush2.bf16.msra.mxu0 0
    %2299 = vmatprep.mubr.bf16.mxu0 0
    %2300 = vmatmul.mubr.bf16.gmra.mxu0 %v2266
    %v2301 = vpop.f32.mrf.mxu0
    %v2302 = vadd.f32 0.0, %v2301
    %v2303 = vpop.f32.mrf.mxu0
    %v2304 = vadd.f32 0.0, %v2303
    %v2305 = vpop.f32.mrf.mxu0
    %v2306 = vpop.f32.mrf.mxu0
    %2307 = vdwg.mxu0
    %2308 = vmatprep.subr.bf16.mxu0 0
    %2309 = vmatpush1.bf16.msra.mxu0 %v347
    %2310 = vmatprep.subr.bf16.mxu0 0
    %2311 = vmatpush1.bf16.msra.mxu0 %v344
    %2312 = vmatprep.subr.bf16.mxu0 0
    %2313 = vmatpush1.bf16.msra.mxu0 %v341
    %2314 = vmatprep.subr.bf16.mxu0 0
    %2315 = vmatpush1.bf16.msra.mxu0 %v338
    %2316 = vmatprep.subr.bf16.mxu0 0
    %2317 = vmatpush1.bf16.msra.mxu0 %v335
    %2318 = vmatprep.subr.bf16.mxu0 0
    %2319 = vmatpush1.bf16.msra.mxu0 %v332
    %2320 = vmatprep.subr.bf16.mxu0 0
    %2321 = vmatpush1.bf16.msra.mxu0 %v329
    %2322 = vmatprep.subr.bf16.mxu0 0
    %2323 = vmatpush1.bf16.msra.mxu0 %v326
    %2324 = vmatprep.subr.bf16.mxu0 0
    %2325 = vmatpush2.bf16.msra.mxu0 0
    %2326 = vmatprep.subr.bf16.mxu0 0
    %2327 = vmatpush2.bf16.msra.mxu0 0
    %2328 = vmatprep.subr.bf16.mxu0 0
    %2329 = vmatpush2.bf16.msra.mxu0 0
    %2330 = vmatprep.subr.bf16.mxu0 0
    %2331 = vmatpush2.bf16.msra.mxu0 0
    %2332 = vmatprep.subr.bf16.mxu0 0
    %2333 = vmatpush2.bf16.msra.mxu0 0
    %2334 = vmatprep.subr.bf16.mxu0 0
    %2335 = vmatpush2.bf16.msra.mxu0 0
    %2336 = vmatprep.subr.bf16.mxu0 0
    %2337 = vmatpush2.bf16.msra.mxu0 0
    %2338 = vmatprep.subr.bf16.mxu0 0
    %2339 = vmatpush2.bf16.msra.mxu0 0
    %2340 = vmatprep.mubr.bf16.mxu0 0
    %2341 = vmatmul.mubr.bf16.gmra.mxu0 %v2266
    %v2342 = vpop.f32.mrf.mxu0
    %v2343 = vadd.f32 0.0, %v2342
    %v2344 = vpop.f32.mrf.mxu0
    %v2345 = vpop.f32.mrf.mxu0
    %v2346 = vpop.f32.mrf.mxu0
    %2347 = vdwg.mxu0
    %v2348 = vadd.f32 %v2263, %v2302
    %v2349 = vxor.u32 %v2348, 2147483648
    %v2350 = vmul.f32 %v2349, 1.442695
    %v2351 = vpow.pop %v2350
    %v2352 = vadd.f32 %v2351, 1.0
    %v2353 = vrcp.pop %v2352
    %v2354 = vmul.f32 1.0, %v2353
    %v2355 = vadd.f32 %v2264, %v2304
    %v2356 = vxor.u32 %v2355, 2147483648
    %v2357 = vmul.f32 %v2356, 1.442695
    %v2358 = vpow.pop %v2357
    %v2359 = vadd.f32 %v2358, 1.0
    %v2360 = vrcp.pop %v2359
    %v2361 = vmul.f32 1.0, %v2360
    %v2362 = vadd.f32 %v2343, %v209
    %v2363 = vmul.f32 %v2354, %v2362
    %v2364 = vadd.f32 %v2265, %v2363
    %v2365 = vtanh.pop %v2364
    %v2366 = vsub.f32 1.0, %v2361
    %v2367 = vmul.f32 %v2366, %v2365
    %v2368 = vmul.f32 %v2361, %v2144
    %v2369 = vadd.f32 %v2367, %v2368
    %v2370 = vpack.c.bf16 %v2369, %v2369
    %2371 = vst [vmem:[#allocation2] sm:$0xf] %v2370
    %v2372 = vld [vmem:[#allocation2] sm:$0xff]
    %v2374 = vunpack.c.l.b16 %v2372
    %v2375 = vunpack.c.h.b16 %v2372
    %v2376 = vpack.c.b16 %v2374, %v2374
    %v2377 = vpack.c.b16 %v2375, %v2375
    %2380 = vmatprep.subr.bf16.mxu0 %v706
    %2381 = vmatpush1.bf16.msra.mxu0 %v705
    %2382 = vmatprep.subr.bf16.mxu0 %v702
    %2383 = vmatpush1.bf16.msra.mxu0 %v701
    %2384 = vmatprep.subr.bf16.mxu0 %v698
    %2385 = vmatpush1.bf16.msra.mxu0 %v697
    %2386 = vmatprep.subr.bf16.mxu0 %v694
    %2387 = vmatpush1.bf16.msra.mxu0 %v693
    %2388 = vmatprep.subr.bf16.mxu0 %v690
    %2389 = vmatpush1.bf16.msra.mxu0 %v689
    %2390 = vmatprep.subr.bf16.mxu0 %v686
    %2391 = vmatpush1.bf16.msra.mxu0 %v685
    %2392 = vmatprep.subr.bf16.mxu0 %v682
    %2393 = vmatpush1.bf16.msra.mxu0 %v681
    %2394 = vmatprep.subr.bf16.mxu0 %v678
    %2395 = vmatpush1.bf16.msra.mxu0 %v677
    %2396 = vmatprep.subr.bf16.mxu0 %v738
    %2397 = vmatpush2.bf16.msra.mxu0 %v737
    %2398 = vmatprep.subr.bf16.mxu0 %v734
    %2399 = vmatpush2.bf16.msra.mxu0 %v733
    %2400 = vmatprep.subr.bf16.mxu0 %v730
    %2401 = vmatpush2.bf16.msra.mxu0 %v729
    %2402 = vmatprep.subr.bf16.mxu0 %v726
    %2403 = vmatpush2.bf16.msra.mxu0 %v725
    %2404 = vmatprep.subr.bf16.mxu0 %v722
    %2405 = vmatpush2.bf16.msra.mxu0 %v721
    %2406 = vmatprep.subr.bf16.mxu0 %v718
    %2407 = vmatpush2.bf16.msra.mxu0 %v717
    %2408 = vmatprep.subr.bf16.mxu0 %v714
    %2409 = vmatpush2.bf16.msra.mxu0 %v713
    %2410 = vmatprep.subr.bf16.mxu0 %v710
    %2411 = vmatpush2.bf16.msra.mxu0 %v709
    %2412 = vmatprep.mubr.bf16.mxu0 %v2377
    %2413 = vmatmul.mubr.bf16.gmra.mxu0 %v2376
    %v2414 = vpop.f32.mrf.mxu0
    %v2415 = vadd.f32 0.0, %v2414
    %v2416 = vpop.f32.mrf.mxu0
    %v2417 = vadd.f32 0.0, %v2416
    %v2418 = vpop.f32.mrf.mxu0
    %v2419 = vpop.f32.mrf.mxu0
    %2420 = vdwg.mxu0
    %2421 = vmatprep.subr.bf16.mxu0 %v708
    %2422 = vmatpush1.bf16.msra.mxu0 %v707
    %2423 = vmatprep.subr.bf16.mxu0 %v704
    %2424 = vmatpush1.bf16.msra.mxu0 %v703
    %2425 = vmatprep.subr.bf16.mxu0 %v700
    %2426 = vmatpush1.bf16.msra.mxu0 %v699
    %2427 = vmatprep.subr.bf16.mxu0 %v696
    %2428 = vmatpush1.bf16.msra.mxu0 %v695
    %2429 = vmatprep.subr.bf16.mxu0 %v692
    %2430 = vmatpush1.bf16.msra.mxu0 %v691
    %2431 = vmatprep.subr.bf16.mxu0 %v688
    %2432 = vmatpush1.bf16.msra.mxu0 %v687
    %2433 = vmatprep.subr.bf16.mxu0 %v684
    %2434 = vmatpush1.bf16.msra.mxu0 %v683
    %2435 = vmatprep.subr.bf16.mxu0 %v680
    %2436 = vmatpush1.bf16.msra.mxu0 %v679
    %2437 = vmatprep.subr.bf16.mxu0 %v740
    %2438 = vmatpush2.bf16.msra.mxu0 %v739
    %2439 = vmatprep.subr.bf16.mxu0 %v736
    %2440 = vmatpush2.bf16.msra.mxu0 %v735
    %2441 = vmatprep.subr.bf16.mxu0 %v732
    %2442 = vmatpush2.bf16.msra.mxu0 %v731
    %2443 = vmatprep.subr.bf16.mxu0 %v728
    %2444 = vmatpush2.bf16.msra.mxu0 %v727
    %2445 = vmatprep.subr.bf16.mxu0 %v724
    %2446 = vmatpush2.bf16.msra.mxu0 %v723
    %2447 = vmatprep.subr.bf16.mxu0 %v720
    %2448 = vmatpush2.bf16.msra.mxu0 %v719
    %2449 = vmatprep.subr.bf16.mxu0 %v716
    %2450 = vmatpush2.bf16.msra.mxu0 %v715
    %2451 = vmatprep.subr.bf16.mxu0 %v712
    %2452 = vmatpush2.bf16.msra.mxu0 %v711
    %2453 = vmatprep.mubr.bf16.mxu0 %v2377
    %2454 = vmatmul.mubr.bf16.gmra.mxu0 %v2376
    %v2455 = vpop.f32.mrf.mxu0
    %v2456 = vadd.f32 0.0, %v2455
    %v2457 = vpop.f32.mrf.mxu0
    %v2458 = vadd.f32 0.0, %v2457
    %v2459 = vpop.f32.mrf.mxu0
    %v2460 = vpop.f32.mrf.mxu0
    %2461 = vdwg.mxu0
    %v2462 = vadd.f32 %v2415, %v216
    %v2463 = vxor.u32 %v2462, 2147483648
    %v2464 = vmul.f32 %v2463, 1.442695
    %v2465 = vpow.pop %v2464
    %v2466 = vadd.f32 %v2465, 1.0
    %v2467 = vrcp.pop %v2466
    %v2468 = vmul.f32 1.0, %v2467
    %v2469 = vadd.f32 %v2417, %v223
    %v2470 = vxor.u32 %v2469, 2147483648
    %v2471 = vmul.f32 %v2470, 1.442695
    %v2472 = vpow.pop %v2471
    %v2473 = vadd.f32 %v2472, 1.0
    %v2474 = vrcp.pop %v2473
    %v2475 = vmul.f32 1.0, %v2474
    %v2476 = vadd.f32 %v2456, %v230
    %v2477 = vadd.f32 %v2458, %v237
    %v2478 = vmul.f32 %v2468, %v2477
    %v2479 = vadd.f32 %v2476, %v2478
    %v2480 = vtanh.pop %v2479
    %v2481 = vsub.f32 1.0, %v2475
    %v2482 = vmul.f32 %v2481, %v2480
    %v2483 = vmul.f32 %v2475, %v2259
    %v2484 = vadd.f32 %v2482, %v2483
    %v2485 = vpack.c.bf16 %v2484, %v2484
    %2486 = vst [vmem:[#allocation2 + $0x4] sm:$0xf] %v2485
    %v2487 = vld [vmem:[#allocation2 + $0x4] sm:$0xf]
    %v2488 = vld [vmem:[#allocation9] sm:$0xff]
    %v2489 = vld [vmem:[#allocation9 + $0x8] sm:$0xff]
    %v2490 = vld [vmem:[#allocation9 + $0x10] sm:$0xff]
    %v2491 = vld [vmem:[#allocation9 + $0x18] sm:$0xff]
    %v2492 = vld [vmem:[#allocation9 + $0x20] sm:$0xff]
    %v2493 = vld [vmem:[#allocation9 + $0x28] sm:$0xff]
    %v2494 = vld [vmem:[#allocation9 + $0x30] sm:$0xff]
    %v2495 = vld [vmem:[#allocation9 + $0x38] sm:$0xff]
    %v2496 = vld [vmem:[#allocation9 + $0x40] sm:$0xff]
    %v2497 = vld [vmem:[#allocation9 + $0x48] sm:$0xff]
    %v2498 = vld [vmem:[#allocation9 + $0x50] sm:$0xff]
    %v2499 = vld [vmem:[#allocation9 + $0x58] sm:$0xff]
    %v2500 = vld [vmem:[#allocation9 + $0x60] sm:$0xff]
    %v2501 = vld [vmem:[#allocation9 + $0x68] sm:$0xff]
    %v2502 = vld [vmem:[#allocation9 + $0x70] sm:$0xff]
    %v2503 = vld [vmem:[#allocation9 + $0x78] sm:$0xff]
    %v2504 = vld [vmem:[%s1] sm:$0xff]
    %v2505 = vld [vmem:[%s10] sm:$0x3]
    %2507 = vset.pattern.permute.xlu0 0
    %2508 = vperm.xlu0 %2507, %v2504
    %v2509 = vpop.permute.xlu0 %2508
    %v2512 = vlaneseq
    %v2513 = vshrl.u32 %v2512, 7
    %v2514 = vsub.s32 0, %v2513
    %v2515 = vrot.slane %v2505, %v2514
    %v2516 = vlaneseq
    %v2517 = vshrl.u32 %v2516, 7
    %v2518 = vsub.s32 1, %v2517
    %v2519 = vrot.slane %v2505, %v2518
    %v2522 = vmul.f32 %v2509, %v2515
    %v2523 = vmul.f32 %v2509, %v2519
    %v2540 = vunpack.c.l.b16 %v2488
    %v2541 = vunpack.c.h.b16 %v2488
    %v2542 = vunpack.c.l.b16 %v2489
    %v2543 = vunpack.c.h.b16 %v2489
    %v2544 = vunpack.c.l.b16 %v2490
    %v2545 = vunpack.c.h.b16 %v2490
    %v2546 = vunpack.c.l.b16 %v2491
    %v2547 = vunpack.c.h.b16 %v2491
    %v2548 = vunpack.c.l.b16 %v2492
    %v2549 = vunpack.c.h.b16 %v2492
    %v2550 = vunpack.c.l.b16 %v2493
    %v2551 = vunpack.c.h.b16 %v2493
    %v2552 = vunpack.c.l.b16 %v2494
    %v2553 = vunpack.c.h.b16 %v2494
    %v2554 = vunpack.c.l.b16 %v2495
    %v2555 = vunpack.c.h.b16 %v2495
    %v2556 = vunpack.c.l.b16 %v2496
    %v2557 = vunpack.c.h.b16 %v2496
    %v2558 = vunpack.c.l.b16 %v2497
    %v2559 = vunpack.c.h.b16 %v2497
    %v2560 = vunpack.c.l.b16 %v2498
    %v2561 = vunpack.c.h.b16 %v2498
    %v2562 = vunpack.c.l.b16 %v2499
    %v2563 = vunpack.c.h.b16 %v2499
    %v2564 = vunpack.c.l.b16 %v2500
    %v2565 = vunpack.c.h.b16 %v2500
    %v2566 = vunpack.c.l.b16 %v2501
    %v2567 = vunpack.c.h.b16 %v2501
    %v2568 = vunpack.c.l.b16 %v2502
    %v2569 = vunpack.c.h.b16 %v2502
    %v2570 = vunpack.c.l.b16 %v2503
    %v2571 = vunpack.c.h.b16 %v2503
    %v2572 = vpack.c.b16 %v2542, %v2540
    %v2573 = vpack.c.b16 %v2543, %v2541
    %v2574 = vpack.c.b16 %v2546, %v2544
    %v2575 = vpack.c.b16 %v2547, %v2545
    %v2576 = vpack.c.b16 %v2550, %v2548
    %v2577 = vpack.c.b16 %v2551, %v2549
    %v2578 = vpack.c.b16 %v2554, %v2552
    %v2579 = vpack.c.b16 %v2555, %v2553
    %v2580 = vpack.c.b16 %v2558, %v2556
    %v2581 = vpack.c.b16 %v2559, %v2557
    %v2582 = vpack.c.b16 %v2562, %v2560
    %v2583 = vpack.c.b16 %v2563, %v2561
    %v2584 = vpack.c.b16 %v2566, %v2564
    %v2585 = vpack.c.b16 %v2567, %v2565
    %v2586 = vpack.c.b16 %v2570, %v2568
    %v2587 = vpack.c.b16 %v2571, %v2569
    %2604 = vmatprep.subr.bf16.mxu0 %v2587
    %2605 = vmatpush1.bf16.msra.mxu0 %v2586
    %2606 = vmatprep.subr.bf16.mxu0 %v2585
    %2607 = vmatpush1.bf16.msra.mxu0 %v2584
    %2608 = vmatprep.subr.bf16.mxu0 %v2583
    %2609 = vmatpush1.bf16.msra.mxu0 %v2582
    %2610 = vmatprep.subr.bf16.mxu0 %v2581
    %2611 = vmatpush1.bf16.msra.mxu0 %v2580
    %2612 = vmatprep.subr.bf16.mxu0 %v2579
    %2613 = vmatpush1.bf16.msra.mxu0 %v2578
    %2614 = vmatprep.subr.bf16.mxu0 %v2577
    %2615 = vmatpush1.bf16.msra.mxu0 %v2576
    %2616 = vmatprep.subr.bf16.mxu0 %v2575
    %2617 = vmatpush1.bf16.msra.mxu0 %v2574
    %2618 = vmatprep.subr.bf16.mxu0 %v2573
    %2619 = vmatpush1.bf16.msra.mxu0 %v2572
    %2620 = vmatprep.subr.bf16.mxu0 0
    %2621 = vmatpush2.bf16.msra.mxu0 0
    %2622 = vmatprep.subr.bf16.mxu0 0
    %2623 = vmatpush2.bf16.msra.mxu0 0
    %2624 = vmatprep.subr.bf16.mxu0 0
    %2625 = vmatpush2.bf16.msra.mxu0 0
    %2626 = vmatprep.subr.bf16.mxu0 0
    %2627 = vmatpush2.bf16.msra.mxu0 0
    %2628 = vmatprep.subr.bf16.mxu0 0
    %2629 = vmatpush2.bf16.msra.mxu0 0
    %2630 = vmatprep.subr.bf16.mxu0 0
    %2631 = vmatpush2.bf16.msra.mxu0 0
    %2632 = vmatprep.subr.bf16.mxu0 0
    %2633 = vmatpush2.bf16.msra.mxu0 0
    %2634 = vmatprep.subr.bf16.mxu0 0
    %2635 = vmatpush2.bf16.msra.mxu0 0
    %2636 = vmatprep.mubr.bf16.mxu0 0
    %2637 = vmatmul.mubr.bf16.gmra.mxu0 %v2487
    %v2638 = vpop.f32.mrf.mxu0
    %v2639 = vadd.f32 %v2522, %v2638
    %v2640 = vpop.f32.mrf.mxu0
    %v2641 = vadd.f32 %v2523, %v2640
    %v2642 = vpop.f32.mrf.mxu0
    %v2643 = vpop.f32.mrf.mxu0
    %2644 = vdwg.mxu0
    %v2645 = vld [vmem:[%s2] sm:$0xff]
    %v2646 = vld [vmem:[%s11] sm:$0x3]
    %2648 = vset.pattern.permute.xlu0 0
    %2649 = vperm.xlu0 %2648, %v2645
    %v2650 = vpop.permute.xlu0 %2649
    %v2653 = vlaneseq
    %v2654 = vshrl.u32 %v2653, 7
    %v2655 = vsub.s32 0, %v2654
    %v2656 = vrot.slane %v2646, %v2655
    %v2657 = vlaneseq
    %v2658 = vshrl.u32 %v2657, 7
    %v2659 = vsub.s32 1, %v2658
    %v2660 = vrot.slane %v2646, %v2659
    %v2663 = vmul.f32 %v2650, %v2656
    %v2664 = vmul.f32 %v2650, %v2660
    %v2665 = vadd.f32 %v2639, %v2663
    %v2666 = vadd.f32 %v2641, %v2664
    %v2667 = vld [vmem:[%s12] sm:$0x3]
    %v2669 = vlaneseq
    %v2670 = vshrl.u32 %v2669, 7
    %v2671 = vsub.s32 0, %v2670
    %v2672 = vrot.slane %v2667, %v2671
    %v2673 = vlaneseq
    %v2674 = vshrl.u32 %v2673, 7
    %v2675 = vsub.s32 1, %v2674
    %v2676 = vrot.slane %v2667, %v2675
    %v2679 = vadd.f32 %v2665, %v2672
    %v2680 = vadd.f32 %v2666, %v2676
    %v2681 = vmax.f32 %v2679, 0.0
    %v2682 = vmax.f32 %v2680, 0.0
    %v2683 = vld [vmem:[%s13] sm:$0x3]
    %v2685 = vlaneseq
    %v2686 = vshrl.u32 %v2685, 7
    %v2687 = vsub.s32 0, %v2686
    %v2688 = vrot.slane %v2683, %v2687
    %v2689 = vlaneseq
    %v2690 = vshrl.u32 %v2689, 7
    %v2691 = vsub.s32 1, %v2690
    %v2692 = vrot.slane %v2683, %v2691
    %v2695 = vmul.f32 %v2681, %v2688
    %v2696 = vmul.f32 %v2682, %v2692
    %v2697 = vadd.f32 %v2695, %v2696
    %2698 = vadd.xlane.f32.xlu0 %v2697
    %v2699 = vpop.xlane.xlu0 %2698
    %v2700 = vld [vmem:[#allocation3] sm:$0x1]
    %v2702 = vlaneseq
    %v2703 = vshrl.u32 %v2702, 7
    %v2704 = vsub.s32 0, %v2703
    %v2705 = vrot.slane %v2700, %v2704
    %v2707 = vadd.f32 %v2699, %v2705
    %vm2708 = vcmask 7168
    %2709 = vst.msk [vmem:[%s15] sm:$0xff] %vm2708, %v2707
    // Predicated region
    $region78: #{tpu_custom_call.1} parent=1 // pred_check
      _
    $region79: #{tpu_custom_call.1} parent=1 // pred_check_branch
      %2711 = sbr.rel (0) target = $region81
    $region80: #{tpu_custom_call.1} parent=1 // pred_region
      _
    $region81: #{tpu_custom_call.1} parent=1 // pred_fallthru
      _
    // Predicated region
    $region82: #{tpu_custom_call.1} parent=1 // pred_check
      _
    $region83: #{tpu_custom_call.1} parent=1 // pred_check_branch
      %2713 = sbr.rel (0) target = $region85
    $region84: #{tpu_custom_call.1} parent=1 // pred_region
      _
    $region85: #{tpu_custom_call.1} parent=1 // pred_fallthru
      _
    %2714 = vsyncpa [#allocation5], 1
    %2715 = vsyncpa [#allocation7], 1
    %2716 = vsyncpa [#allocation10], 1

</llo_original>
